<compile_context>
chip_gen: v7x
topology: tpu7x:2x2x1
jax: 0.10.0
libtpu: 0.0.40
codegen_flags: <defaults>
</compile_context>

<pallas_src>
import functools

import jax
import jax.numpy as jnp
from jax.experimental import pallas as pl
from jax.experimental.pallas import tpu as pltpu

# ---------------- model config (small, consistent with the module) ----------------
N_VOCAB = 128
EMBED = 32          # embedding_dim (d_model)
HIDDEN = 64         # hidden_dim (dim_feedforward)
MAX_SEQ = 16        # max_seq_len
NUM_LAYERS = 2
NUM_HEADS = 4
DROPOUT = 0.0       # eval / p=0 -> deterministic identity
HEAD_DIM = EMBED // NUM_HEADS
LN_EPS = 1e-5

BATCH = 2
SEQ = 8

# ---------------- parameter slab layout ----------------
# All dense weights live in one f32 slab, all small vectors (biases, LayerNorm
# scales) in a second f32 slab; both 128 lanes wide so the fused kernel sees
# exactly 6 inputs (6 prologue DMAs).
SLAB_W = 128
# weight slab: per-layer row offsets (all multiples of 8 -> aligned sublanes)
W_QKV_R = 0                      # (EMBED,  3*EMBED)  in_proj  W^T
W_O_R = EMBED                    # (EMBED,  EMBED)    out_proj W^T
W_1_R = 2 * EMBED                # (EMBED,  HIDDEN)   linear1  W^T
W_2_R = 3 * EMBED                # (HIDDEN, EMBED)    linear2  W^T
WROWS_PER_LAYER = 3 * EMBED + HIDDEN            # 160
FC_W_R = NUM_LAYERS * WROWS_PER_LAYER           # (EMBED, N_VOCAB) fc W^T
WSLAB_ROWS = FC_W_R + EMBED                     # 352
# small-param slab: one vector per row
P_BQKV, P_BO, P_LN1W, P_LN1B, P_B1, P_B2, P_LN3W, P_LN3B = range(8)
PROWS_PER_LAYER = 8
FC_B_R = NUM_LAYERS * PROWS_PER_LAYER
PSLAB_ROWS = FC_B_R + 1                         # 17


# ---------------- in-kernel math helpers ----------------
def _gelu_tanh(x):
    # tanh-approx GELU: one EUP tanh + a few VALU ops (vs ~15 VALU ops + exp
    # for the erf polynomial).  ~1e-3 deviation from F.gelu's exact-erf default.
    c = 0.7978845608028654  # sqrt(2/pi)
    return 0.5 * x * (1.0 + jnp.tanh(c * (x + 0.044715 * (x * x * x))))


def _layernorm(x, w, b):
    mean = jnp.mean(x, axis=-1, keepdims=True)
    var = jnp.mean(jnp.square(x - mean), axis=-1, keepdims=True)
    return (x - mean) * jax.lax.rsqrt(var + LN_EPS) * w + b


# ---------------- fused Pallas kernel ----------------
def _decoder_layer(x, mask_bh, wslab_ref, pslab_ref, *, layer, batch, seq,
                   embed, heads):
    """One TransformerDecoderLayer (post-norm, self-attn + GELU FFN), all f32."""
    n = batch * seq
    head_dim = embed // heads
    scale = 1.0 / float(head_dim) ** 0.5
    bw = layer * WROWS_PER_LAYER
    bp = layer * PROWS_PER_LAYER

    # static slab slices (sub-tile loads at 8-aligned sublane offsets)
    wqkv = wslab_ref[bw + W_QKV_R:bw + W_QKV_R + embed, 0:3 * embed]
    wo = wslab_ref[bw + W_O_R:bw + W_O_R + embed, 0:embed]
    w1 = wslab_ref[bw + W_1_R:bw + W_1_R + embed, 0:HIDDEN]
    w2 = wslab_ref[bw + W_2_R:bw + W_2_R + HIDDEN, 0:embed]
    bqkv = pslab_ref[bp + P_BQKV:bp + P_BQKV + 1, 0:3 * embed]
    bo = pslab_ref[bp + P_BO:bp + P_BO + 1, 0:embed]
    ln1w = pslab_ref[bp + P_LN1W:bp + P_LN1W + 1, 0:embed]
    ln1b = pslab_ref[bp + P_LN1B:bp + P_LN1B + 1, 0:embed]
    b1 = pslab_ref[bp + P_B1:bp + P_B1 + 1, 0:HIDDEN]
    b2 = pslab_ref[bp + P_B2:bp + P_B2 + 1, 0:embed]
    ln3w = pslab_ref[bp + P_LN3W:bp + P_LN3W + 1, 0:embed]
    ln3b = pslab_ref[bp + P_LN3B:bp + P_LN3B + 1, 0:embed]

    # fused QKV projection: (N, E) @ (E, 3E) + bias  (f32 MXU, f32 acc)
    qkv = jnp.dot(x, wqkv, preferred_element_type=jnp.float32) + bqkv

    # self-attention, all heads at once: slice q/k/v once at offsets 0/E/2E,
    # collapse (batch, head) into ONE batch axis and use a single pair of
    # batched einsums (no per-head loop, no lane-axis concat).
    def split_heads(z):                       # (N, E) -> (B*H, S, Dh)
        return (z.reshape(batch, seq, heads, head_dim)
                 .transpose(0, 2, 1, 3)
                 .reshape(batch * heads, seq, head_dim))

    q = split_heads(qkv[:, 0:embed])
    k = split_heads(qkv[:, embed:2 * embed])
    v = split_heads(qkv[:, 2 * embed:3 * embed])

    s = jnp.einsum('bqd,bkd->bqk', q, k,
                   preferred_element_type=jnp.float32) * scale + mask_bh
    m = jnp.max(s, axis=-1, keepdims=True)
    e = jnp.exp(s - m)
    p = e * pl.reciprocal(jnp.sum(e, axis=-1, keepdims=True), approx=True)
    o = jnp.einsum('bqk,bkd->bqd', p, v, preferred_element_type=jnp.float32)
    attn = (o.reshape(batch, heads, seq, head_dim)
             .transpose(0, 2, 1, 3)
             .reshape(n, embed))

    # output projection + residual + LayerNorm1 (dropout p=0 -> identity)
    attn = jnp.dot(attn, wo, preferred_element_type=jnp.float32) + bo
    x1 = _layernorm(x + attn, ln1w, ln1b)

    # TODO(synk): cross-attention (multihead_attn + norm2) of
    # nn.TransformerDecoderLayer skipped; the reference passes the attention
    # mask as `memory`, which is not a valid memory tensor.

    # feed-forward: linear1 -> GELU -> linear2, residual + LayerNorm3
    h1 = _gelu_tanh(jnp.dot(x1, w1, preferred_element_type=jnp.float32) + b1)
    ffn = jnp.dot(h1, w2, preferred_element_type=jnp.float32) + b2
    return _layernorm(x1 + ffn, ln3w, ln3b)


def fused_forward_kernel(tok_ref, mask_ref, tok_emb_ref, pos_emb_ref,
                         wslab_ref, pslab_ref, out_ref, *,
                         batch, seq, embed, heads, n_layers):
    """Entire forward (embedding + all decoder layers + vocab projection)."""
    n = batch * seq

    # token + positional embedding, in-kernel.  Vocab is tiny (128), so the
    # gather is a one-hot (N, V) @ (V, E) MXU matmul (always lowers; no
    # dynamic-gather op needed).
    tok = tok_ref[...]                                           # (N, 1) int32
    vocab_iota = jax.lax.broadcasted_iota(jnp.int32, (n, N_VOCAB), 1)
    onehot = (vocab_iota == tok).astype(jnp.float32)             # (N, V)
    x = jnp.dot(onehot, tok_emb_ref[...], preferred_element_type=jnp.float32)
    pos = pos_emb_ref[0:seq, :]                                  # (S, E)
    x = x + jnp.broadcast_to(pos[None, :, :],
                             (batch, seq, embed)).reshape(n, embed)

    # hoist the additive-mask broadcast once (JAX does not CSE broadcasts);
    # shaped for the (batch*heads)-batched attention einsums.
    mask_bh = jnp.broadcast_to(mask_ref[...][None, :, :],
                               (batch * heads, seq, seq))

    for l in range(n_layers):
        x = _decoder_layer(x, mask_bh, wslab_ref, pslab_ref, layer=l,
                           batch=batch, seq=seq, embed=embed, heads=heads)

    # final vocab projection -> lane-dense (N, 128) logits: the only HBM write
    fc_w = wslab_ref[FC_W_R:FC_W_R + embed, :]                   # (E, V)
    fc_b = pslab_ref[FC_B_R:FC_B_R + 1, :]                       # (1, V)
    out_ref[...] = jnp.dot(x, fc_w, preferred_element_type=jnp.float32) + fc_b


# ---------------- wrapper ----------------
def decoder_lm_forward(tokens, mask, params):
    """
    tokens: (B, S) int32, mask: (S, S) float32 additive attention mask.
    returns logits (B, S, N_VOCAB).
    """
    b, s = tokens.shape
    n = b * s
    inputs = (tokens.reshape(n, 1).astype(jnp.int32),
              mask.astype(jnp.float32),
              params["tok_emb"], params["pos_emb"],
              params["wslab"], params["pslab"])

    kernel = functools.partial(fused_forward_kernel, batch=b, seq=s,
                               embed=EMBED, heads=NUM_HEADS,
                               n_layers=NUM_LAYERS)
    vmem = pl.BlockSpec(memory_space=pltpu.MemorySpace.VMEM)
    # TODO(synk): if batch*seq grows, add a row-tile grid (tiles multiples of
    # (8,128)) with dimension_semantics=("parallel",) so v7x's 2 TensorCores
    # split rows; size the tile against v7x's 64 MiB VMEM / 32 MiB scoped
    # default (raise vmem_limit_bytes via pltpu.CompilerParams if needed).
    logits = pl.pallas_call(
        kernel,
        out_shape=jax.ShapeDtypeStruct((n, N_VOCAB), jnp.float32),
        in_specs=[vmem] * len(inputs),
        out_specs=vmem,
    )(*inputs)
    return logits.reshape(b, s, N_VOCAB)


def init_params(key):
    """Deterministic synthetic parameters packed into two f32 slabs."""
    f32 = jnp.float32
    ks = jax.random.split(key, 3 + NUM_LAYERS)
    tok_emb = 0.02 * jax.random.normal(ks[0], (N_VOCAB, EMBED), f32)
    pos_emb = 0.02 * jax.random.normal(ks[1], (MAX_SEQ, EMBED), f32)

    wslab = jnp.zeros((WSLAB_ROWS, SLAB_W), f32)
    pslab = jnp.zeros((PSLAB_ROWS, SLAB_W), f32)

    for l in range(NUM_LAYERS):
        lk = jax.random.split(ks[3 + l], 8)
        bw, bp = l * WROWS_PER_LAYER, l * PROWS_PER_LAYER
        wslab = wslab.at[bw + W_QKV_R:bw + W_QKV_R + EMBED, 0:3 * EMBED].set(
            0.02 * jax.random.normal(lk[0], (EMBED, 3 * EMBED), f32))
        wslab = wslab.at[bw + W_O_R:bw + W_O_R + EMBED, 0:EMBED].set(
            0.02 * jax.random.normal(lk[1], (EMBED, EMBED), f32))
        wslab = wslab.at[bw + W_1_R:bw + W_1_R + EMBED, 0:HIDDEN].set(
            0.02 * jax.random.normal(lk[2], (EMBED, HIDDEN), f32))
        wslab = wslab.at[bw + W_2_R:bw + W_2_R + HIDDEN, 0:EMBED].set(
            0.02 * jax.random.normal(lk[3], (HIDDEN, EMBED), f32))
        pslab = pslab.at[bp + P_BQKV, 0:3 * EMBED].set(
            0.02 * jax.random.normal(lk[4], (3 * EMBED,), f32))
        pslab = pslab.at[bp + P_BO, 0:EMBED].set(
            0.02 * jax.random.normal(lk[5], (EMBED,), f32))
        pslab = pslab.at[bp + P_B1, 0:HIDDEN].set(
            0.02 * jax.random.normal(lk[6], (HIDDEN,), f32))
        pslab = pslab.at[bp + P_B2, 0:EMBED].set(
            0.02 * jax.random.normal(lk[7], (EMBED,), f32))
        pslab = pslab.at[bp + P_LN1W, 0:EMBED].set(1.0)   # LayerNorm defaults
        pslab = pslab.at[bp + P_LN3W, 0:EMBED].set(1.0)   # (biases stay 0)

    wslab = wslab.at[FC_W_R:FC_W_R + EMBED, 0:N_VOCAB].set(
        0.02 * jax.random.normal(ks[2], (EMBED, N_VOCAB), f32))
    # fc bias stays 0
    return {"tok_emb": tok_emb, "pos_emb": pos_emb,
            "wslab": wslab, "pslab": pslab}


if __name__ == "__main__":
    key = jax.random.PRNGKey(0)
    pkey, tkey = jax.random.split(key)
    params = init_params(pkey)

    tokens = jax.random.randint(tkey, (BATCH, SEQ), 0, N_VOCAB, dtype=jnp.int32)
    # causal additive mask (0 on/below diagonal, large negative above)
    causal_mask = jnp.where(
        jnp.arange(SEQ)[None, :] <= jnp.arange(SEQ)[:, None], 0.0, -1e9
    ).astype(jnp.float32)

    fwd = jax.jit(decoder_lm_forward)
    out = jax.block_until_ready(fwd(tokens, causal_mask, params))
    assert out.shape == (BATCH, SEQ, N_VOCAB)
    assert bool(jnp.all(jnp.isfinite(out)))
    print("KERNEL_OK")
</pallas_src>

<mosaic_0001>
module attributes {stable_mosaic.version = 11 : i64} {
  func.func @fused_forward_kernel(%arg0: memref<16x1xi32, #tpu.memory_space<vmem>>, %arg1: memref<8x8xf32, #tpu.memory_space<vmem>>, %arg2: memref<128x32xf32, #tpu.memory_space<vmem>>, %arg3: memref<16x32xf32, #tpu.memory_space<vmem>>, %arg4: memref<352x128xf32, #tpu.memory_space<vmem>>, %arg5: memref<17x128xf32, #tpu.memory_space<vmem>>, %arg6: memref<16x128xf32, #tpu.memory_space<vmem>>) attributes {dimension_semantics = [], scalar_prefetch = 0 : i64, scratch_operands = 0 : i64, tpu.core_type = #tpu.core_type<tc>} {
    %c0 = arith.constant 0 : index
    %c0_0 = arith.constant 0 : index
    %0 = vector.load %arg0[%c0, %c0_0] : memref<16x1xi32, #tpu.memory_space<vmem>>, vector<16x1xi32>
    %1 = tpu.iota {dimensions = array<i32: 1>} : vector<16x128xi32>
    %2 = vector.broadcast %0 : vector<16x1xi32> to vector<16x128xi32>
    %3 = arith.cmpi eq, %1, %2 : vector<16x128xi32>
    %4 = arith.extui %3 : vector<16x128xi1> to vector<16x128xi32>
    %5 = arith.sitofp %4 : vector<16x128xi32> to vector<16x128xf32>
    %c0_1 = arith.constant 0 : index
    %c0_2 = arith.constant 0 : index
    %6 = vector.load %arg2[%c0_1, %c0_2] : memref<128x32xf32, #tpu.memory_space<vmem>>, vector<128x32xf32>
    %cst = arith.constant dense<0.000000e+00> : vector<16x32xf32>
    %7 = tpu.matmul %5, %6, %cst {dimension_numbers = #tpu.dot_dimension_numbers<[1], [0], [0], [1], [0, 0, 1, 1], [], []>} : vector<16x128xf32>, vector<128x32xf32>, vector<16x32xf32> -> vector<16x32xf32>
    %c0_3 = arith.constant 0 : index
    %c0_4 = arith.constant 0 : index
    %8 = vector.load %arg3[%c0_3, %c0_4] : memref<16x32xf32, #tpu.memory_space<vmem>>, vector<8x32xf32>
    %9 = vector.shape_cast %8 : vector<8x32xf32> to vector<1x8x32xf32>
    %10 = vector.shape_cast %9 : vector<1x8x32xf32> to vector<1x8x32xf32>
    %11 = vector.broadcast %10 : vector<1x8x32xf32> to vector<2x8x32xf32>
    %12 = vector.shape_cast %11 : vector<2x8x32xf32> to vector<16x32xf32>
    %13 = arith.addf %7, %12 : vector<16x32xf32>
    %c0_5 = arith.constant 0 : index
    %c0_6 = arith.constant 0 : index
    %14 = vector.load %arg1[%c0_5, %c0_6] : memref<8x8xf32, #tpu.memory_space<vmem>>, vector<8x8xf32>
    %15 = vector.shape_cast %14 : vector<8x8xf32> to vector<1x8x8xf32>
    %16 = vector.shape_cast %15 : vector<1x8x8xf32> to vector<1x8x8xf32>
    %17 = vector.broadcast %16 : vector<1x8x8xf32> to vector<8x8x8xf32>
    %c0_7 = arith.constant 0 : index
    %c0_8 = arith.constant 0 : index
    %18 = vector.load %arg4[%c0_7, %c0_8] : memref<352x128xf32, #tpu.memory_space<vmem>>, vector<32x96xf32>
    %c32 = arith.constant 32 : index
    %c0_9 = arith.constant 0 : index
    %19 = vector.load %arg4[%c32, %c0_9] : memref<352x128xf32, #tpu.memory_space<vmem>>, vector<32x32xf32>
    %c64 = arith.constant 64 : index
    %c0_10 = arith.constant 0 : index
    %20 = vector.load %arg4[%c64, %c0_10] : memref<352x128xf32, #tpu.memory_space<vmem>>, vector<32x64xf32>
    %c96 = arith.constant 96 : index
    %c0_11 = arith.constant 0 : index
    %21 = vector.load %arg4[%c96, %c0_11] : memref<352x128xf32, #tpu.memory_space<vmem>>, vector<64x32xf32>
    %c0_12 = arith.constant 0 : index
    %c0_13 = arith.constant 0 : index
    %22 = vector.load %arg5[%c0_12, %c0_13] : memref<17x128xf32, #tpu.memory_space<vmem>>, vector<1x96xf32>
    %c1 = arith.constant 1 : index
    %c0_14 = arith.constant 0 : index
    %23 = vector.load %arg5[%c1, %c0_14] : memref<17x128xf32, #tpu.memory_space<vmem>>, vector<1x32xf32>
    %c2 = arith.constant 2 : index
    %c0_15 = arith.constant 0 : index
    %24 = vector.load %arg5[%c2, %c0_15] : memref<17x128xf32, #tpu.memory_space<vmem>>, vector<1x32xf32>
    %c3 = arith.constant 3 : index
    %c0_16 = arith.constant 0 : index
    %25 = vector.load %arg5[%c3, %c0_16] : memref<17x128xf32, #tpu.memory_space<vmem>>, vector<1x32xf32>
    %c4 = arith.constant 4 : index
    %c0_17 = arith.constant 0 : index
    %26 = vector.load %arg5[%c4, %c0_17] : memref<17x128xf32, #tpu.memory_space<vmem>>, vector<1x64xf32>
    %c5 = arith.constant 5 : index
    %c0_18 = arith.constant 0 : index
    %27 = vector.load %arg5[%c5, %c0_18] : memref<17x128xf32, #tpu.memory_space<vmem>>, vector<1x32xf32>
    %c6 = arith.constant 6 : index
    %c0_19 = arith.constant 0 : index
    %28 = vector.load %arg5[%c6, %c0_19] : memref<17x128xf32, #tpu.memory_space<vmem>>, vector<1x32xf32>
    %c7 = arith.constant 7 : index
    %c0_20 = arith.constant 0 : index
    %29 = vector.load %arg5[%c7, %c0_20] : memref<17x128xf32, #tpu.memory_space<vmem>>, vector<1x32xf32>
    %cst_21 = arith.constant dense<0.000000e+00> : vector<16x96xf32>
    %30 = tpu.matmul %13, %18, %cst_21 {dimension_numbers = #tpu.dot_dimension_numbers<[1], [0], [0], [1], [0, 0, 1, 1], [], []>} : vector<16x32xf32>, vector<32x96xf32>, vector<16x96xf32> -> vector<16x96xf32>
    %31 = vector.broadcast %22 : vector<1x96xf32> to vector<16x96xf32>
    %32 = arith.addf %30, %31 : vector<16x96xf32>
    %33 = vector.extract_strided_slice %32 {offsets = [0, 0], sizes = [16, 32], strides = [1, 1]} : vector<16x96xf32> to vector<16x32xf32>
    %34 = vector.shape_cast %33 : vector<16x32xf32> to vector<2x8x4x8xf32>
    %35 = tpu.transpose %34, [0, 2, 1, 3] : vector<2x8x4x8xf32> -> vector<2x4x8x8xf32>
    %36 = vector.shape_cast %35 : vector<2x4x8x8xf32> to vector<8x8x8xf32>
    %37 = vector.extract_strided_slice %32 {offsets = [0, 32], sizes = [16, 32], strides = [1, 1]} : vector<16x96xf32> to vector<16x32xf32>
    %38 = vector.shape_cast %37 : vector<16x32xf32> to vector<2x8x4x8xf32>
    %39 = tpu.transpose %38, [0, 2, 1, 3] : vector<2x8x4x8xf32> -> vector<2x4x8x8xf32>
    %40 = vector.shape_cast %39 : vector<2x4x8x8xf32> to vector<8x8x8xf32>
    %41 = vector.extract_strided_slice %32 {offsets = [0, 64], sizes = [16, 32], strides = [1, 1]} : vector<16x96xf32> to vector<16x32xf32>
    %42 = vector.shape_cast %41 : vector<16x32xf32> to vector<2x8x4x8xf32>
    %43 = tpu.transpose %42, [0, 2, 1, 3] : vector<2x8x4x8xf32> -> vector<2x4x8x8xf32>
    %44 = vector.shape_cast %43 : vector<2x4x8x8xf32> to vector<8x8x8xf32>
    "tpu.trace_start"() <{level = 10 : i32, message = "bqd,bkd->bqk"}> : () -> ()
    %cst_22 = arith.constant dense<0.000000e+00> : vector<8x8x8xf32>
    %45 = tpu.matmul %36, %40, %cst_22 {dimension_numbers = #tpu.dot_dimension_numbers<[2], [2], [1], [1], [0, 0, 0, 1, 1, 1], [0], [0]>} : vector<8x8x8xf32>, vector<8x8x8xf32>, vector<8x8x8xf32> -> vector<8x8x8xf32>
    "tpu.trace_stop"() : () -> ()
    %cst_23 = arith.constant 0.353553385 : f32
    %46 = vector.broadcast %cst_23 : f32 to vector<8x8x8xf32>
    %47 = arith.mulf %45, %46 : vector<8x8x8xf32>
    %48 = arith.addf %47, %17 : vector<8x8x8xf32>
    %cst_24 = arith.constant dense<0xFF800000> : vector<8x8xf32>
    %49 = vector.multi_reduction <maximumf>, %48, %cst_24 [2] : vector<8x8x8xf32> to vector<8x8xf32>
    %50 = vector.shape_cast %49 : vector<8x8xf32> to vector<8x8x1xf32>
    %51 = vector.broadcast %50 : vector<8x8x1xf32> to vector<8x8x8xf32>
    %52 = arith.subf %48, %51 : vector<8x8x8xf32>
    %53 = math.exp %52 : vector<8x8x8xf32>
    %cst_25 = arith.constant dense<0.000000e+00> : vector<8x8xf32>
    %54 = vector.multi_reduction <add>, %53, %cst_25 [2] : vector<8x8x8xf32> to vector<8x8xf32>
    %55 = vector.shape_cast %54 : vector<8x8xf32> to vector<8x8x1xf32>
    %56 = tpu.reciprocal %55 {approx = true} : vector<8x8x1xf32> -> vector<8x8x1xf32>
    %57 = vector.broadcast %56 : vector<8x8x1xf32> to vector<8x8x8xf32>
    %58 = arith.mulf %53, %57 : vector<8x8x8xf32>
    "tpu.trace_start"() <{level = 10 : i32, message = "bqk,bkd->bqd"}> : () -> ()
    %cst_26 = arith.constant dense<0.000000e+00> : vector<8x8x8xf32>
    %59 = tpu.matmul %58, %44, %cst_26 {dimension_numbers = #tpu.dot_dimension_numbers<[2], [1], [1], [2], [0, 0, 0, 1, 1, 2], [0], [0]>} : vector<8x8x8xf32>, vector<8x8x8xf32>, vector<8x8x8xf32> -> vector<8x8x8xf32>
    "tpu.trace_stop"() : () -> ()
    %60 = vector.shape_cast %59 : vector<8x8x8xf32> to vector<2x4x8x8xf32>
    %61 = tpu.transpose %60, [0, 2, 1, 3] : vector<2x4x8x8xf32> -> vector<2x8x4x8xf32>
    %62 = vector.shape_cast %61 : vector<2x8x4x8xf32> to vector<16x32xf32>
    %cst_27 = arith.constant dense<0.000000e+00> : vector<16x32xf32>
    %63 = tpu.matmul %62, %19, %cst_27 {dimension_numbers = #tpu.dot_dimension_numbers<[1], [0], [0], [1], [0, 0, 1, 1], [], []>} : vector<16x32xf32>, vector<32x32xf32>, vector<16x32xf32> -> vector<16x32xf32>
    %64 = vector.broadcast %23 : vector<1x32xf32> to vector<16x32xf32>
    %65 = arith.addf %63, %64 : vector<16x32xf32>
    %66 = arith.addf %13, %65 : vector<16x32xf32>
    %cst_28 = arith.constant dense<0.000000e+00> : vector<16xf32>
    %67 = vector.multi_reduction <add>, %66, %cst_28 [1] : vector<16x32xf32> to vector<16xf32>
    %68 = vector.shape_cast %67 : vector<16xf32> to vector<16x1xf32>
    %cst_29 = arith.constant 3.200000e+01 : f32
    %69 = vector.broadcast %cst_29 : f32 to vector<16x1xf32>
    %70 = arith.divf %68, %69 : vector<16x1xf32>
    %71 = vector.broadcast %70 : vector<16x1xf32> to vector<16x32xf32>
    %72 = arith.subf %66, %71 : vector<16x32xf32>
    %73 = arith.mulf %72, %72 : vector<16x32xf32>
    %cst_30 = arith.constant dense<0.000000e+00> : vector<16xf32>
    %74 = vector.multi_reduction <add>, %73, %cst_30 [1] : vector<16x32xf32> to vector<16xf32>
    %75 = vector.shape_cast %74 : vector<16xf32> to vector<16x1xf32>
    %cst_31 = arith.constant 3.200000e+01 : f32
    %76 = vector.broadcast %cst_31 : f32 to vector<16x1xf32>
    %77 = arith.divf %75, %76 : vector<16x1xf32>
    %78 = vector.broadcast %70 : vector<16x1xf32> to vector<16x32xf32>
    %79 = arith.subf %66, %78 : vector<16x32xf32>
    %cst_32 = arith.constant 9.99999974E-6 : f32
    %80 = vector.broadcast %cst_32 : f32 to vector<16x1xf32>
    %81 = arith.addf %77, %80 : vector<16x1xf32>
    %82 = math.rsqrt %81 : vector<16x1xf32>
    %83 = vector.broadcast %82 : vector<16x1xf32> to vector<16x32xf32>
    %84 = arith.mulf %79, %83 : vector<16x32xf32>
    %85 = vector.broadcast %24 : vector<1x32xf32> to vector<16x32xf32>
    %86 = arith.mulf %84, %85 : vector<16x32xf32>
    %87 = vector.broadcast %25 : vector<1x32xf32> to vector<16x32xf32>
    %88 = arith.addf %86, %87 : vector<16x32xf32>
    %cst_33 = arith.constant dense<0.000000e+00> : vector<16x64xf32>
    %89 = tpu.matmul %88, %20, %cst_33 {dimension_numbers = #tpu.dot_dimension_numbers<[1], [0], [0], [1], [0, 0, 1, 1], [], []>} : vector<16x32xf32>, vector<32x64xf32>, vector<16x64xf32> -> vector<16x64xf32>
    %90 = vector.broadcast %26 : vector<1x64xf32> to vector<16x64xf32>
    %91 = arith.addf %89, %90 : vector<16x64xf32>
    %cst_34 = arith.constant 5.000000e-01 : f32
    %92 = vector.broadcast %cst_34 : f32 to vector<16x64xf32>
    %93 = arith.mulf %92, %91 : vector<16x64xf32>
    %94 = arith.mulf %91, %91 : vector<16x64xf32>
    %95 = arith.mulf %94, %91 : vector<16x64xf32>
    %cst_35 = arith.constant 4.471500e-02 : f32
    %96 = vector.broadcast %cst_35 : f32 to vector<16x64xf32>
    %97 = arith.mulf %96, %95 : vector<16x64xf32>
    %98 = arith.addf %91, %97 : vector<16x64xf32>
    %cst_36 = arith.constant 0.797884583 : f32
    %99 = vector.broadcast %cst_36 : f32 to vector<16x64xf32>
    %100 = arith.mulf %99, %98 : vector<16x64xf32>
    %101 = math.tanh %100 : vector<16x64xf32>
    %cst_37 = arith.constant 1.000000e+00 : f32
    %102 = vector.broadcast %cst_37 : f32 to vector<16x64xf32>
    %103 = arith.addf %102, %101 : vector<16x64xf32>
    %104 = arith.mulf %93, %103 : vector<16x64xf32>
    %cst_38 = arith.constant dense<0.000000e+00> : vector<16x32xf32>
    %105 = tpu.matmul %104, %21, %cst_38 {dimension_numbers = #tpu.dot_dimension_numbers<[1], [0], [0], [1], [0, 0, 1, 1], [], []>} : vector<16x64xf32>, vector<64x32xf32>, vector<16x32xf32> -> vector<16x32xf32>
    %106 = vector.broadcast %27 : vector<1x32xf32> to vector<16x32xf32>
    %107 = arith.addf %105, %106 : vector<16x32xf32>
    %108 = arith.addf %88, %107 : vector<16x32xf32>
    %cst_39 = arith.constant dense<0.000000e+00> : vector<16xf32>
    %109 = vector.multi_reduction <add>, %108, %cst_39 [1] : vector<16x32xf32> to vector<16xf32>
    %110 = vector.shape_cast %109 : vector<16xf32> to vector<16x1xf32>
    %cst_40 = arith.constant 3.200000e+01 : f32
    %111 = vector.broadcast %cst_40 : f32 to vector<16x1xf32>
    %112 = arith.divf %110, %111 : vector<16x1xf32>
    %113 = vector.broadcast %112 : vector<16x1xf32> to vector<16x32xf32>
    %114 = arith.subf %108, %113 : vector<16x32xf32>
    %115 = arith.mulf %114, %114 : vector<16x32xf32>
    %cst_41 = arith.constant dense<0.000000e+00> : vector<16xf32>
    %116 = vector.multi_reduction <add>, %115, %cst_41 [1] : vector<16x32xf32> to vector<16xf32>
    %117 = vector.shape_cast %116 : vector<16xf32> to vector<16x1xf32>
    %cst_42 = arith.constant 3.200000e+01 : f32
    %118 = vector.broadcast %cst_42 : f32 to vector<16x1xf32>
    %119 = arith.divf %117, %118 : vector<16x1xf32>
    %120 = vector.broadcast %112 : vector<16x1xf32> to vector<16x32xf32>
    %121 = arith.subf %108, %120 : vector<16x32xf32>
    %cst_43 = arith.constant 9.99999974E-6 : f32
    %122 = vector.broadcast %cst_43 : f32 to vector<16x1xf32>
    %123 = arith.addf %119, %122 : vector<16x1xf32>
    %124 = math.rsqrt %123 : vector<16x1xf32>
    %125 = vector.broadcast %124 : vector<16x1xf32> to vector<16x32xf32>
    %126 = arith.mulf %121, %125 : vector<16x32xf32>
    %127 = vector.broadcast %28 : vector<1x32xf32> to vector<16x32xf32>
    %128 = arith.mulf %126, %127 : vector<16x32xf32>
    %129 = vector.broadcast %29 : vector<1x32xf32> to vector<16x32xf32>
    %130 = arith.addf %128, %129 : vector<16x32xf32>
    %c160 = arith.constant 160 : index
    %c0_44 = arith.constant 0 : index
    %131 = vector.load %arg4[%c160, %c0_44] : memref<352x128xf32, #tpu.memory_space<vmem>>, vector<32x96xf32>
    %c192 = arith.constant 192 : index
    %c0_45 = arith.constant 0 : index
    %132 = vector.load %arg4[%c192, %c0_45] : memref<352x128xf32, #tpu.memory_space<vmem>>, vector<32x32xf32>
    %c224 = arith.constant 224 : index
    %c0_46 = arith.constant 0 : index
    %133 = vector.load %arg4[%c224, %c0_46] : memref<352x128xf32, #tpu.memory_space<vmem>>, vector<32x64xf32>
    %c256 = arith.constant 256 : index
    %c0_47 = arith.constant 0 : index
    %134 = vector.load %arg4[%c256, %c0_47] : memref<352x128xf32, #tpu.memory_space<vmem>>, vector<64x32xf32>
    %c8 = arith.constant 8 : index
    %c0_48 = arith.constant 0 : index
    %135 = vector.load %arg5[%c8, %c0_48] : memref<17x128xf32, #tpu.memory_space<vmem>>, vector<1x96xf32>
    %c9 = arith.constant 9 : index
    %c0_49 = arith.constant 0 : index
    %136 = vector.load %arg5[%c9, %c0_49] : memref<17x128xf32, #tpu.memory_space<vmem>>, vector<1x32xf32>
    %c10 = arith.constant 10 : index
    %c0_50 = arith.constant 0 : index
    %137 = vector.load %arg5[%c10, %c0_50] : memref<17x128xf32, #tpu.memory_space<vmem>>, vector<1x32xf32>
    %c11 = arith.constant 11 : index
    %c0_51 = arith.constant 0 : index
    %138 = vector.load %arg5[%c11, %c0_51] : memref<17x128xf32, #tpu.memory_space<vmem>>, vector<1x32xf32>
    %c12 = arith.constant 12 : index
    %c0_52 = arith.constant 0 : index
    %139 = vector.load %arg5[%c12, %c0_52] : memref<17x128xf32, #tpu.memory_space<vmem>>, vector<1x64xf32>
    %c13 = arith.constant 13 : index
    %c0_53 = arith.constant 0 : index
    %140 = vector.load %arg5[%c13, %c0_53] : memref<17x128xf32, #tpu.memory_space<vmem>>, vector<1x32xf32>
    %c14 = arith.constant 14 : index
    %c0_54 = arith.constant 0 : index
    %141 = vector.load %arg5[%c14, %c0_54] : memref<17x128xf32, #tpu.memory_space<vmem>>, vector<1x32xf32>
    %c15 = arith.constant 15 : index
    %c0_55 = arith.constant 0 : index
    %142 = vector.load %arg5[%c15, %c0_55] : memref<17x128xf32, #tpu.memory_space<vmem>>, vector<1x32xf32>
    %cst_56 = arith.constant dense<0.000000e+00> : vector<16x96xf32>
    %143 = tpu.matmul %130, %131, %cst_56 {dimension_numbers = #tpu.dot_dimension_numbers<[1], [0], [0], [1], [0, 0, 1, 1], [], []>} : vector<16x32xf32>, vector<32x96xf32>, vector<16x96xf32> -> vector<16x96xf32>
    %144 = vector.broadcast %135 : vector<1x96xf32> to vector<16x96xf32>
    %145 = arith.addf %143, %144 : vector<16x96xf32>
    %146 = vector.extract_strided_slice %145 {offsets = [0, 0], sizes = [16, 32], strides = [1, 1]} : vector<16x96xf32> to vector<16x32xf32>
    %147 = vector.shape_cast %146 : vector<16x32xf32> to vector<2x8x4x8xf32>
    %148 = tpu.transpose %147, [0, 2, 1, 3] : vector<2x8x4x8xf32> -> vector<2x4x8x8xf32>
    %149 = vector.shape_cast %148 : vector<2x4x8x8xf32> to vector<8x8x8xf32>
    %150 = vector.extract_strided_slice %145 {offsets = [0, 32], sizes = [16, 32], strides = [1, 1]} : vector<16x96xf32> to vector<16x32xf32>
    %151 = vector.shape_cast %150 : vector<16x32xf32> to vector<2x8x4x8xf32>
    %152 = tpu.transpose %151, [0, 2, 1, 3] : vector<2x8x4x8xf32> -> vector<2x4x8x8xf32>
    %153 = vector.shape_cast %152 : vector<2x4x8x8xf32> to vector<8x8x8xf32>
    %154 = vector.extract_strided_slice %145 {offsets = [0, 64], sizes = [16, 32], strides = [1, 1]} : vector<16x96xf32> to vector<16x32xf32>
    %155 = vector.shape_cast %154 : vector<16x32xf32> to vector<2x8x4x8xf32>
    %156 = tpu.transpose %155, [0, 2, 1, 3] : vector<2x8x4x8xf32> -> vector<2x4x8x8xf32>
    %157 = vector.shape_cast %156 : vector<2x4x8x8xf32> to vector<8x8x8xf32>
    "tpu.trace_start"() <{level = 10 : i32, message = "bqd,bkd->bqk"}> : () -> ()
    %cst_57 = arith.constant dense<0.000000e+00> : vector<8x8x8xf32>
    %158 = tpu.matmul %149, %153, %cst_57 {dimension_numbers = #tpu.dot_dimension_numbers<[2], [2], [1], [1], [0, 0, 0, 1, 1, 1], [0], [0]>} : vector<8x8x8xf32>, vector<8x8x8xf32>, vector<8x8x8xf32> -> vector<8x8x8xf32>
    "tpu.trace_stop"() : () -> ()
    %cst_58 = arith.constant 0.353553385 : f32
    %159 = vector.broadcast %cst_58 : f32 to vector<8x8x8xf32>
    %160 = arith.mulf %158, %159 : vector<8x8x8xf32>
    %161 = arith.addf %160, %17 : vector<8x8x8xf32>
    %cst_59 = arith.constant dense<0xFF800000> : vector<8x8xf32>
    %162 = vector.multi_reduction <maximumf>, %161, %cst_59 [2] : vector<8x8x8xf32> to vector<8x8xf32>
    %163 = vector.shape_cast %162 : vector<8x8xf32> to vector<8x8x1xf32>
    %164 = vector.broadcast %163 : vector<8x8x1xf32> to vector<8x8x8xf32>
    %165 = arith.subf %161, %164 : vector<8x8x8xf32>
    %166 = math.exp %165 : vector<8x8x8xf32>
    %cst_60 = arith.constant dense<0.000000e+00> : vector<8x8xf32>
    %167 = vector.multi_reduction <add>, %166, %cst_60 [2] : vector<8x8x8xf32> to vector<8x8xf32>
    %168 = vector.shape_cast %167 : vector<8x8xf32> to vector<8x8x1xf32>
    %169 = tpu.reciprocal %168 {approx = true} : vector<8x8x1xf32> -> vector<8x8x1xf32>
    %170 = vector.broadcast %169 : vector<8x8x1xf32> to vector<8x8x8xf32>
    %171 = arith.mulf %166, %170 : vector<8x8x8xf32>
    "tpu.trace_start"() <{level = 10 : i32, message = "bqk,bkd->bqd"}> : () -> ()
    %cst_61 = arith.constant dense<0.000000e+00> : vector<8x8x8xf32>
    %172 = tpu.matmul %171, %157, %cst_61 {dimension_numbers = #tpu.dot_dimension_numbers<[2], [1], [1], [2], [0, 0, 0, 1, 1, 2], [0], [0]>} : vector<8x8x8xf32>, vector<8x8x8xf32>, vector<8x8x8xf32> -> vector<8x8x8xf32>
    "tpu.trace_stop"() : () -> ()
    %173 = vector.shape_cast %172 : vector<8x8x8xf32> to vector<2x4x8x8xf32>
    %174 = tpu.transpose %173, [0, 2, 1, 3] : vector<2x4x8x8xf32> -> vector<2x8x4x8xf32>
    %175 = vector.shape_cast %174 : vector<2x8x4x8xf32> to vector<16x32xf32>
    %cst_62 = arith.constant dense<0.000000e+00> : vector<16x32xf32>
    %176 = tpu.matmul %175, %132, %cst_62 {dimension_numbers = #tpu.dot_dimension_numbers<[1], [0], [0], [1], [0, 0, 1, 1], [], []>} : vector<16x32xf32>, vector<32x32xf32>, vector<16x32xf32> -> vector<16x32xf32>
    %177 = vector.broadcast %136 : vector<1x32xf32> to vector<16x32xf32>
    %178 = arith.addf %176, %177 : vector<16x32xf32>
    %179 = arith.addf %130, %178 : vector<16x32xf32>
    %cst_63 = arith.constant dense<0.000000e+00> : vector<16xf32>
    %180 = vector.multi_reduction <add>, %179, %cst_63 [1] : vector<16x32xf32> to vector<16xf32>
    %181 = vector.shape_cast %180 : vector<16xf32> to vector<16x1xf32>
    %cst_64 = arith.constant 3.200000e+01 : f32
    %182 = vector.broadcast %cst_64 : f32 to vector<16x1xf32>
    %183 = arith.divf %181, %182 : vector<16x1xf32>
    %184 = vector.broadcast %183 : vector<16x1xf32> to vector<16x32xf32>
    %185 = arith.subf %179, %184 : vector<16x32xf32>
    %186 = arith.mulf %185, %185 : vector<16x32xf32>
    %cst_65 = arith.constant dense<0.000000e+00> : vector<16xf32>
    %187 = vector.multi_reduction <add>, %186, %cst_65 [1] : vector<16x32xf32> to vector<16xf32>
    %188 = vector.shape_cast %187 : vector<16xf32> to vector<16x1xf32>
    %cst_66 = arith.constant 3.200000e+01 : f32
    %189 = vector.broadcast %cst_66 : f32 to vector<16x1xf32>
    %190 = arith.divf %188, %189 : vector<16x1xf32>
    %191 = vector.broadcast %183 : vector<16x1xf32> to vector<16x32xf32>
    %192 = arith.subf %179, %191 : vector<16x32xf32>
    %cst_67 = arith.constant 9.99999974E-6 : f32
    %193 = vector.broadcast %cst_67 : f32 to vector<16x1xf32>
    %194 = arith.addf %190, %193 : vector<16x1xf32>
    %195 = math.rsqrt %194 : vector<16x1xf32>
    %196 = vector.broadcast %195 : vector<16x1xf32> to vector<16x32xf32>
    %197 = arith.mulf %192, %196 : vector<16x32xf32>
    %198 = vector.broadcast %137 : vector<1x32xf32> to vector<16x32xf32>
    %199 = arith.mulf %197, %198 : vector<16x32xf32>
    %200 = vector.broadcast %138 : vector<1x32xf32> to vector<16x32xf32>
    %201 = arith.addf %199, %200 : vector<16x32xf32>
    %cst_68 = arith.constant dense<0.000000e+00> : vector<16x64xf32>
    %202 = tpu.matmul %201, %133, %cst_68 {dimension_numbers = #tpu.dot_dimension_numbers<[1], [0], [0], [1], [0, 0, 1, 1], [], []>} : vector<16x32xf32>, vector<32x64xf32>, vector<16x64xf32> -> vector<16x64xf32>
    %203 = vector.broadcast %139 : vector<1x64xf32> to vector<16x64xf32>
    %204 = arith.addf %202, %203 : vector<16x64xf32>
    %cst_69 = arith.constant 5.000000e-01 : f32
    %205 = vector.broadcast %cst_69 : f32 to vector<16x64xf32>
    %206 = arith.mulf %205, %204 : vector<16x64xf32>
    %207 = arith.mulf %204, %204 : vector<16x64xf32>
    %208 = arith.mulf %207, %204 : vector<16x64xf32>
    %cst_70 = arith.constant 4.471500e-02 : f32
    %209 = vector.broadcast %cst_70 : f32 to vector<16x64xf32>
    %210 = arith.mulf %209, %208 : vector<16x64xf32>
    %211 = arith.addf %204, %210 : vector<16x64xf32>
    %cst_71 = arith.constant 0.797884583 : f32
    %212 = vector.broadcast %cst_71 : f32 to vector<16x64xf32>
    %213 = arith.mulf %212, %211 : vector<16x64xf32>
    %214 = math.tanh %213 : vector<16x64xf32>
    %cst_72 = arith.constant 1.000000e+00 : f32
    %215 = vector.broadcast %cst_72 : f32 to vector<16x64xf32>
    %216 = arith.addf %215, %214 : vector<16x64xf32>
    %217 = arith.mulf %206, %216 : vector<16x64xf32>
    %cst_73 = arith.constant dense<0.000000e+00> : vector<16x32xf32>
    %218 = tpu.matmul %217, %134, %cst_73 {dimension_numbers = #tpu.dot_dimension_numbers<[1], [0], [0], [1], [0, 0, 1, 1], [], []>} : vector<16x64xf32>, vector<64x32xf32>, vector<16x32xf32> -> vector<16x32xf32>
    %219 = vector.broadcast %140 : vector<1x32xf32> to vector<16x32xf32>
    %220 = arith.addf %218, %219 : vector<16x32xf32>
    %221 = arith.addf %201, %220 : vector<16x32xf32>
    %cst_74 = arith.constant dense<0.000000e+00> : vector<16xf32>
    %222 = vector.multi_reduction <add>, %221, %cst_74 [1] : vector<16x32xf32> to vector<16xf32>
    %223 = vector.shape_cast %222 : vector<16xf32> to vector<16x1xf32>
    %cst_75 = arith.constant 3.200000e+01 : f32
    %224 = vector.broadcast %cst_75 : f32 to vector<16x1xf32>
    %225 = arith.divf %223, %224 : vector<16x1xf32>
    %226 = vector.broadcast %225 : vector<16x1xf32> to vector<16x32xf32>
    %227 = arith.subf %221, %226 : vector<16x32xf32>
    %228 = arith.mulf %227, %227 : vector<16x32xf32>
    %cst_76 = arith.constant dense<0.000000e+00> : vector<16xf32>
    %229 = vector.multi_reduction <add>, %228, %cst_76 [1] : vector<16x32xf32> to vector<16xf32>
    %230 = vector.shape_cast %229 : vector<16xf32> to vector<16x1xf32>
    %cst_77 = arith.constant 3.200000e+01 : f32
    %231 = vector.broadcast %cst_77 : f32 to vector<16x1xf32>
    %232 = arith.divf %230, %231 : vector<16x1xf32>
    %233 = vector.broadcast %225 : vector<16x1xf32> to vector<16x32xf32>
    %234 = arith.subf %221, %233 : vector<16x32xf32>
    %cst_78 = arith.constant 9.99999974E-6 : f32
    %235 = vector.broadcast %cst_78 : f32 to vector<16x1xf32>
    %236 = arith.addf %232, %235 : vector<16x1xf32>
    %237 = math.rsqrt %236 : vector<16x1xf32>
    %238 = vector.broadcast %237 : vector<16x1xf32> to vector<16x32xf32>
    %239 = arith.mulf %234, %238 : vector<16x32xf32>
    %240 = vector.broadcast %141 : vector<1x32xf32> to vector<16x32xf32>
    %241 = arith.mulf %239, %240 : vector<16x32xf32>
    %242 = vector.broadcast %142 : vector<1x32xf32> to vector<16x32xf32>
    %243 = arith.addf %241, %242 : vector<16x32xf32>
    %c320 = arith.constant 320 : index
    %c0_79 = arith.constant 0 : index
    %244 = vector.load %arg4[%c320, %c0_79] : memref<352x128xf32, #tpu.memory_space<vmem>>, vector<32x128xf32>
    %c16 = arith.constant 16 : index
    %c0_80 = arith.constant 0 : index
    %245 = vector.load %arg5[%c16, %c0_80] : memref<17x128xf32, #tpu.memory_space<vmem>>, vector<1x128xf32>
    %cst_81 = arith.constant dense<0.000000e+00> : vector<16x128xf32>
    %246 = tpu.matmul %243, %244, %cst_81 {dimension_numbers = #tpu.dot_dimension_numbers<[1], [0], [0], [1], [0, 0, 1, 1], [], []>} : vector<16x32xf32>, vector<32x128xf32>, vector<16x128xf32> -> vector<16x128xf32>
    %247 = vector.broadcast %245 : vector<1x128xf32> to vector<16x128xf32>
    %248 = arith.addf %246, %247 : vector<16x128xf32>
    %c0_82 = arith.constant 0 : index
    %c0_83 = arith.constant 0 : index
    %249 = vector.load %arg6[%c0_82, %c0_83] : memref<16x128xf32, #tpu.memory_space<vmem>>, vector<16x128xf32>
    tpu.vector_store %arg6[%c0_82, %c0_83], %248 {strides = array<i32>} : memref<16x128xf32, #tpu.memory_space<vmem>>, vector<16x128xf32>,
    return
  }
}

</mosaic_0001>

<llo_original>
// kernel: decoder_lm_forward.1
$region0: #{decoder_lm_forward.1}
  #allocation0 [shape = 'u32[]', space=smem, size = 0x4, offset = 0x4, fixed_abs, tag = 'smem constant byte address 0x4 - core index']
  #allocation1 [shape = 'u32[144,128]{1,0:T(1,128)}', space=vmem, size = 0x12000, scoped, tag = 'internal scratch']
  %s0 = inlined_call_operand.vmem [shape: s32[16,1], index: 0, kind: input, shape index: {}]
  %s1 = inlined_call_operand.vmem [shape: f32[8,8], index: 1, kind: input, shape index: {}]
  %s2 = inlined_call_operand.vmem [shape: f32[128,32], index: 2, kind: input, shape index: {}]
  %s3 = inlined_call_operand.vmem [shape: f32[16,32], index: 3, kind: input, shape index: {}]
  %s4 = inlined_call_operand.hbm [shape: f32[352,128], index: 4, kind: input, shape index: {}]
  %s5 = inlined_call_operand.vmem [shape: f32[17,128], index: 5, kind: input, shape index: {}]
  %s6 = inlined_call_operand.hbm [shape: f32[16,128], index: 6, kind: output, shape index: {}]
  %s7 = sld [smem:[#allocation0]]
  $region38: #{decoder_lm_forward.1} parent=0
    _
  %s9 = ssub.s32 1, %s7
  %s10 = scalar_select 0, %s9, %s7
  $region1: #{decoder_lm_forward.1} parent=0
    #allocation2 [shape = 'u8[180224]{0}', space=vmem, size = 0x2c000, scoped, tag = 'input window, operand 4, single buffered']
    #allocation3 [shape = 's32[1]{0}', space=sflag, size = 0x4, scoped, tag = 'scoped memory for decoder_lm_forward.1']
    #allocation4 [shape = 's32[1]{0}', space=sflag, size = 0x4, scoped, tag = 'scoped memory for decoder_lm_forward.1']
    #allocation5 [shape = 'u8[8192]{0}', space=vmem, size = 0x2000, scoped, tag = 'output window, operand 0, single buffered']
    %11 = vsyncpa [#allocation3], 0
    %12 = vsyncpa [#allocation4], 0
    // Predicated region
    $region2: #{decoder_lm_forward.1} parent=1 // pred_check
      _
    $region3: #{decoder_lm_forward.1} parent=1 // pred_check_branch
      %14 = sbr.rel (0) target = $region5
    $region4: #{decoder_lm_forward.1} parent=1 // pred_region
      _
    $region5: #{decoder_lm_forward.1} parent=1 // pred_fallthru
      _
    // Predicated region
    $region6: #{decoder_lm_forward.1} parent=1 // pred_check
      _
    $region7: #{decoder_lm_forward.1} parent=1 // pred_check_branch
      %16 = sbr.rel (0) target = $region9
    $region8: #{decoder_lm_forward.1} parent=1 // pred_region
      _
    $region9: #{decoder_lm_forward.1} parent=1 // pred_fallthru
      _
    // Predicated region
    $region10: #{decoder_lm_forward.1} parent=1 // pred_check
      _
    $region11: #{decoder_lm_forward.1} parent=1 // pred_check_branch
      %18 = sbr.rel (0) target = $region13
    $region12: #{decoder_lm_forward.1} parent=1 // pred_region
      _
    $region13: #{decoder_lm_forward.1} parent=1 // pred_fallthru
      _
    // Predicated region
    $region14: #{decoder_lm_forward.1} parent=1 // pred_check
      _
    $region15: #{decoder_lm_forward.1} parent=1 // pred_check_branch
      %20 = sbr.rel (0) target = $region17
    $region16: #{decoder_lm_forward.1} parent=1 // pred_region
      _
    $region17: #{decoder_lm_forward.1} parent=1 // pred_fallthru
      _
    // Predicated region
    $region18: #{decoder_lm_forward.1} parent=1 // pred_check
      _
    $region19: #{decoder_lm_forward.1} parent=1 // pred_check_branch
      %22 = sbr.rel (0) target = $region21
    $region20: #{decoder_lm_forward.1} parent=1 // pred_region
      %s24 = ssub.s32 5632, 5632
      %25 = vsyncadd [#allocation3], %s24
      %s26 = sshll.u32 [#allocation2], 4
      %s27 = int_to_ptr.vmem [resolvable:$true] %s26
      %32 = dma.hbm_to_vmem [thread:$0]  %s4, 5632, %s27, [#allocation3], 128, 128, 8
    $region21: #{decoder_lm_forward.1} parent=1 // pred_fallthru
      _
    // Predicated region
    $region22: #{decoder_lm_forward.1} parent=1 // pred_check
      _
    $region23: #{decoder_lm_forward.1} parent=1 // pred_check_branch
      %34 = sbr.rel (0) target = $region25
    $region24: #{decoder_lm_forward.1} parent=1 // pred_region
      _
    $region25: #{decoder_lm_forward.1} parent=1 // pred_fallthru
      _
    // Predicated region
    $region26: #{decoder_lm_forward.1} parent=1 // pred_check
      _
    $region27: #{decoder_lm_forward.1} parent=1 // pred_check_branch
      %36 = sbr.rel (0) target = $region29
    $region28: #{decoder_lm_forward.1} parent=1 // pred_region
      %37 = dma.done [#allocation3], 5632
    $region29: #{decoder_lm_forward.1} parent=1 // pred_fallthru
      _
    %v38 = vld [vmem:[%s0] sm:$0xff]
    %v39 = vld [vmem:[%s0 + $0x8] sm:$0xff]
    %v40 = vlaneseq
    %v41 = vand.u32 %v40, 127
    %42 = vset.pattern.permute.xlu0 0
    %43 = vperm.xlu0 %42, %v38
    %v44 = vpop.permute.xlu0 %43
    %45 = vset.pattern.permute.xlu0 0
    %46 = vperm.xlu0 %45, %v39
    %v47 = vpop.permute.xlu0 %46
    %vm48 = vcmp.eq.s32.totalorder %v41, %v44
    %vm49 = vcmp.eq.s32.totalorder %v41, %v47
    %v50 = vsel %vm48, 1, 0
    %v51 = vsel %vm49, 1, 0
    %v52 = vcvt.s32.f32 %v50
    %v53 = vcvt.s32.f32 %v51
    %v54 = vld [vmem:[%s2] sm:$0xff]
    %v55 = vld [vmem:[%s2 + $0x8] sm:$0xff]
    %v56 = vld [vmem:[%s2 + $0x10] sm:$0xff]
    %v57 = vld [vmem:[%s2 + $0x18] sm:$0xff]
    %v58 = vld [vmem:[%s2 + $0x20] sm:$0xff]
    %v59 = vld [vmem:[%s2 + $0x28] sm:$0xff]
    %v60 = vld [vmem:[%s2 + $0x30] sm:$0xff]
    %v61 = vld [vmem:[%s2 + $0x38] sm:$0xff]
    %v62 = vld [vmem:[%s2 + $0x40] sm:$0xff]
    %v63 = vld [vmem:[%s2 + $0x48] sm:$0xff]
    %v64 = vld [vmem:[%s2 + $0x50] sm:$0xff]
    %v65 = vld [vmem:[%s2 + $0x58] sm:$0xff]
    %v66 = vld [vmem:[%s2 + $0x60] sm:$0xff]
    %v67 = vld [vmem:[%s2 + $0x68] sm:$0xff]
    %v68 = vld [vmem:[%s2 + $0x70] sm:$0xff]
    %v69 = vld [vmem:[%s2 + $0x78] sm:$0xff]
    %v70 = vld [vmem:[%s3] sm:$0xff]
    %71 = vmatprep.subr.mxu0 0.0
    %72 = vmatpush1.msra.mxu0 %v54
    %73 = vmatprep.subr.mxu0 0.0
    %74 = vmatpush1.msra.mxu0 %v55
    %75 = vmatprep.subr.mxu0 0.0
    %76 = vmatpush1.msra.mxu0 %v56
    %77 = vmatprep.subr.mxu0 0.0
    %78 = vmatpush1.msra.mxu0 %v57
    %79 = vmatprep.subr.mxu0 0.0
    %80 = vmatpush1.msra.mxu0 %v58
    %81 = vmatprep.subr.mxu0 0.0
    %82 = vmatpush1.msra.mxu0 %v59
    %83 = vmatprep.subr.mxu0 0.0
    %84 = vmatpush1.msra.mxu0 %v60
    %85 = vmatprep.subr.mxu0 0.0
    %86 = vmatpush1.msra.mxu0 %v61
    %87 = vmatprep.subr.mxu0 0.0
    %88 = vmatpush1.msra.mxu0 %v62
    %89 = vmatprep.subr.mxu0 0.0
    %90 = vmatpush1.msra.mxu0 %v63
    %91 = vmatprep.subr.mxu0 0.0
    %92 = vmatpush1.msra.mxu0 %v64
    %93 = vmatprep.subr.mxu0 0.0
    %94 = vmatpush1.msra.mxu0 %v65
    %95 = vmatprep.subr.mxu0 0.0
    %96 = vmatpush1.msra.mxu0 %v66
    %97 = vmatprep.subr.mxu0 0.0
    %98 = vmatpush1.msra.mxu0 %v67
    %99 = vmatprep.subr.mxu0 0.0
    %100 = vmatpush1.msra.mxu0 %v68
    %101 = vmatprep.subr.mxu0 0.0
    %102 = vmatpush1.msra.mxu0 %v69
    %103 = vmatprep.subr.mxu0 0.0
    %104 = vmatpush1.msra.mxu0 0.0
    %105 = vmatprep.subr.mxu0 0.0
    %106 = vmatpush1.msra.mxu0 0.0
    %107 = vmatprep.subr.mxu0 0.0
    %108 = vmatpush1.msra.mxu0 0.0
    %109 = vmatprep.subr.mxu0 0.0
    %110 = vmatpush1.msra.mxu0 0.0
    %111 = vmatprep.subr.mxu0 0.0
    %112 = vmatpush1.msra.mxu0 0.0
    %113 = vmatprep.subr.mxu0 0.0
    %114 = vmatpush1.msra.mxu0 0.0
    %115 = vmatprep.subr.mxu0 0.0
    %116 = vmatpush1.msra.mxu0 0.0
    %117 = vmatprep.subr.mxu0 0.0
    %118 = vmatpush1.msra.mxu0 0.0
    %119 = vmatprep.subr.mxu0 0.0
    %120 = vmatpush1.msra.mxu0 0.0
    %121 = vmatprep.subr.mxu0 0.0
    %122 = vmatpush1.msra.mxu0 0.0
    %123 = vmatprep.subr.mxu0 0.0
    %124 = vmatpush1.msra.mxu0 0.0
    %125 = vmatprep.subr.mxu0 0.0
    %126 = vmatpush1.msra.mxu0 0.0
    %127 = vmatprep.subr.mxu0 0.0
    %128 = vmatpush1.msra.mxu0 0.0
    %129 = vmatprep.subr.mxu0 0.0
    %130 = vmatpush1.msra.mxu0 0.0
    %131 = vmatprep.subr.mxu0 0.0
    %132 = vmatpush1.msra.mxu0 0.0
    %133 = vmatprep.subr.mxu0 0.0
    %134 = vmatpush1.msra.mxu0 0.0
    %135 = vmatprep.mubr.f32.mxu0 0.0
    %136 = vmatmul.mubr.f32.gmra.mrb[0].mxu0 %v52
    %v137 = vpop.f32.mrb[0].mxu0
    %v138 = vadd.f32 %v70, %v137
    %v139 = vpop.f32.mrb[0].mxu0
    %140 = vmatprep.mubr.f32.mxu0 0.0
    %141 = vmatmul.mubr.f32.gmra.mrb[0].mxu0 %v53
    %v142 = vpop.f32.mrb[0].mxu0
    %v143 = vadd.f32 %v70, %v142
    %v144 = vpop.f32.mrb[0].mxu0
    %145 = vdwg.mxu0
    %v146 = vld [vmem:[%s1] sm:$0xff]
    %v147 = vld [vmem:[#allocation2] sm:$0xff]
    %v148 = vld [vmem:[#allocation2 + $0x8] sm:$0xff]
    %v149 = vld [vmem:[#allocation2 + $0x10] sm:$0xff]
    %v150 = vld [vmem:[#allocation2 + $0x18] sm:$0xff]
    %v151 = vld [vmem:[#allocation2 + $0x20] sm:$0xff]
    %v152 = vld [vmem:[#allocation2 + $0x28] sm:$0xff]
    %v153 = vld [vmem:[#allocation2 + $0x30] sm:$0xff]
    %v154 = vld [vmem:[#allocation2 + $0x38] sm:$0xff]
    %v155 = vld [vmem:[#allocation2 + $0x40] sm:$0xff]
    %v156 = vld [vmem:[#allocation2 + $0x48] sm:$0xff]
    %v157 = vld [vmem:[#allocation2 + $0x50] sm:$0xff]
    %v158 = vld [vmem:[#allocation2 + $0x58] sm:$0xff]
    %v159 = vld [vmem:[#allocation2 + $0x60] sm:$0xff]
    %v160 = vld [vmem:[#allocation2 + $0x68] sm:$0xff]
    %v161 = vld [vmem:[#allocation2 + $0x70] sm:$0xff]
    %v162 = vld [vmem:[#allocation2 + $0x78] sm:$0xff]
    %v163 = vld [vmem:[#allocation2 + $0x80] sm:$0xff]
    %v164 = vld [vmem:[#allocation2 + $0x88] sm:$0xff]
    %v165 = vld [vmem:[#allocation2 + $0x90] sm:$0xff]
    %v166 = vld [vmem:[#allocation2 + $0x98] sm:$0xff]
    %v167 = vld [vmem:[%s5] sm:$0x1]
    %v168 = vld [vmem:[%s5 + $0x1] sm:$0x1]
    %v169 = vld [vmem:[%s5 + $0x2] sm:$0x1]
    %v170 = vld [vmem:[%s5 + $0x3] sm:$0x1]
    %v171 = vld [vmem:[%s5 + $0x4] sm:$0x1]
    %v172 = vld [vmem:[%s5 + $0x5] sm:$0x1]
    %v173 = vld [vmem:[%s5 + $0x6] sm:$0x1]
    %v174 = vld [vmem:[%s5 + $0x7] sm:$0x1]
    %v175 = vlaneseq
    %v176 = vshrl.u32 %v175, 7
    %v177 = vsub.s32 0, %v176
    %v178 = vrot.slane %v167, %v177
    %vm179 = vcmask 261120
    %v181 = vsel %vm179, %v138, 0
    %v184 = vsel %vm179, %v143, 0
    %186 = vmatprep.subr.mxu0 0.0
    %187 = vmatpush1.msra.mxu0 %v147
    %188 = vmatprep.subr.mxu0 0.0
    %189 = vmatpush1.msra.mxu0 %v148
    %190 = vmatprep.subr.mxu0 0.0
    %191 = vmatpush1.msra.mxu0 %v149
    %192 = vmatprep.subr.mxu0 0.0
    %193 = vmatpush1.msra.mxu0 %v150
    %194 = vmatprep.subr.mxu0 0.0
    %195 = vmatpush1.msra.mxu0 0.0
    %196 = vmatprep.subr.mxu0 0.0
    %197 = vmatpush1.msra.mxu0 0.0
    %198 = vmatprep.subr.mxu0 0.0
    %199 = vmatpush1.msra.mxu0 0.0
    %200 = vmatprep.subr.mxu0 0.0
    %201 = vmatpush1.msra.mxu0 0.0
    %202 = vmatprep.subr.mxu0 0.0
    %203 = vmatpush1.msra.mxu0 0.0
    %204 = vmatprep.subr.mxu0 0.0
    %205 = vmatpush1.msra.mxu0 0.0
    %206 = vmatprep.subr.mxu0 0.0
    %207 = vmatpush1.msra.mxu0 0.0
    %208 = vmatprep.subr.mxu0 0.0
    %209 = vmatpush1.msra.mxu0 0.0
    %210 = vmatprep.subr.mxu0 0.0
    %211 = vmatpush1.msra.mxu0 0.0
    %212 = vmatprep.subr.mxu0 0.0
    %213 = vmatpush1.msra.mxu0 0.0
    %214 = vmatprep.subr.mxu0 0.0
    %215 = vmatpush1.msra.mxu0 0.0
    %216 = vmatprep.subr.mxu0 0.0
    %217 = vmatpush1.msra.mxu0 0.0
    %218 = vmatprep.subr.mxu0 0.0
    %219 = vmatpush1.msra.mxu0 0.0
    %220 = vmatprep.subr.mxu0 0.0
    %221 = vmatpush1.msra.mxu0 0.0
    %222 = vmatprep.subr.mxu0 0.0
    %223 = vmatpush1.msra.mxu0 0.0
    %224 = vmatprep.subr.mxu0 0.0
    %225 = vmatpush1.msra.mxu0 0.0
    %226 = vmatprep.subr.mxu0 0.0
    %227 = vmatpush1.msra.mxu0 0.0
    %228 = vmatprep.subr.mxu0 0.0
    %229 = vmatpush1.msra.mxu0 0.0
    %230 = vmatprep.subr.mxu0 0.0
    %231 = vmatpush1.msra.mxu0 0.0
    %232 = vmatprep.subr.mxu0 0.0
    %233 = vmatpush1.msra.mxu0 0.0
    %234 = vmatprep.subr.mxu0 0.0
    %235 = vmatpush1.msra.mxu0 0.0
    %236 = vmatprep.subr.mxu0 0.0
    %237 = vmatpush1.msra.mxu0 0.0
    %238 = vmatprep.subr.mxu0 0.0
    %239 = vmatpush1.msra.mxu0 0.0
    %240 = vmatprep.subr.mxu0 0.0
    %241 = vmatpush1.msra.mxu0 0.0
    %242 = vmatprep.subr.mxu0 0.0
    %243 = vmatpush1.msra.mxu0 0.0
    %244 = vmatprep.subr.mxu0 0.0
    %245 = vmatpush1.msra.mxu0 0.0
    %246 = vmatprep.subr.mxu0 0.0
    %247 = vmatpush1.msra.mxu0 0.0
    %248 = vmatprep.subr.mxu0 0.0
    %249 = vmatpush1.msra.mxu0 0.0
    %250 = vmatprep.mubr.f32.mxu0 0.0
    %251 = vmatmul.mubr.f32.gmra.mrb[0].mxu0 %v181
    %v252 = vpop.f32.mrb[0].mxu0
    %v253 = vadd.f32 %v178, %v252
    %v254 = vpop.f32.mrb[0].mxu0
    %255 = vmatprep.mubr.f32.mxu0 0.0
    %256 = vmatmul.mubr.f32.gmra.mrb[0].mxu0 %v184
    %v257 = vpop.f32.mrb[0].mxu0
    %v258 = vadd.f32 %v178, %v257
    %v259 = vpop.f32.mrb[0].mxu0
    %260 = vdwg.mxu0
    %263 = vrot.lane.b32.xlu0 %v253, 120
    %v264 = vpop.permute.xlu0 %263
    %265 = vrot.lane.b32.xlu0 %v258, 120
    %v266 = vpop.permute.xlu0 %265
    %269 = vrot.lane.b32.xlu0 %v253, 112
    %v270 = vpop.permute.xlu0 %269
    %271 = vrot.lane.b32.xlu0 %v258, 112
    %v272 = vpop.permute.xlu0 %271
    %275 = vrot.lane.b32.xlu0 %v253, 104
    %v276 = vpop.permute.xlu0 %275
    %277 = vrot.lane.b32.xlu0 %v258, 104
    %v278 = vpop.permute.xlu0 %277
    %v281 = vcombine.low %v253, %v270
    %v282 = vcombine.high %v253, %v270
    %v284 = vunpack.c.l.s4 1983009808
    %v285 = vunpack.c.0.s8 %v284
    %v286 = vlaneseq
    %v287 = vshrl.u32 %v286, 7
    %v288 = vsub.s32 %v285, %v287
    %v289 = vrot.slane %v281, %v288
    %v291 = vunpack.c.l.s4 1983009808
    %v292 = vunpack.c.0.s8 %v291
    %v293 = vlaneseq
    %v294 = vshrl.u32 %v293, 7
    %v295 = vsub.s32 %v292, %v294
    %v296 = vrot.slane %v282, %v295
    %v297 = vcombine.low %v264, %v276
    %v298 = vcombine.high %v264, %v276
    %v300 = vunpack.c.l.s4 1983009808
    %v301 = vunpack.c.0.s8 %v300
    %v302 = vlaneseq
    %v303 = vshrl.u32 %v302, 7
    %v304 = vsub.s32 %v301, %v303
    %v305 = vrot.slane %v297, %v304
    %v307 = vunpack.c.l.s4 1983009808
    %v308 = vunpack.c.0.s8 %v307
    %v309 = vlaneseq
    %v310 = vshrl.u32 %v309, 7
    %v311 = vsub.s32 %v308, %v310
    %v312 = vrot.slane %v298, %v311
    %v313 = vcombine.low %v289, %v305
    %v314 = vcombine.high %v289, %v305
    %v316 = vunpack.c.l.s4 1934713408
    %v317 = vunpack.c.0.s8 %v316
    %v318 = vlaneseq
    %v319 = vshrl.u32 %v318, 7
    %v320 = vsub.s32 %v317, %v319
    %v321 = vrot.slane %v313, %v320
    %v323 = vunpack.c.l.s4 1934713408
    %v324 = vunpack.c.0.s8 %v323
    %v325 = vlaneseq
    %v326 = vshrl.u32 %v325, 7
    %v327 = vsub.s32 %v324, %v326
    %v328 = vrot.slane %v314, %v327
    %v329 = vcombine.low %v296, %v312
    %v330 = vcombine.high %v296, %v312
    %v332 = vunpack.c.l.s4 1934713408
    %v333 = vunpack.c.0.s8 %v332
    %v334 = vlaneseq
    %v335 = vshrl.u32 %v334, 7
    %v336 = vsub.s32 %v333, %v335
    %v337 = vrot.slane %v329, %v336
    %v339 = vunpack.c.l.s4 1934713408
    %v340 = vunpack.c.0.s8 %v339
    %v341 = vlaneseq
    %v342 = vshrl.u32 %v341, 7
    %v343 = vsub.s32 %v340, %v342
    %v344 = vrot.slane %v330, %v343
    %v345 = vcombine.high %v321, 0.0
    %v346 = vcombine.high %v328, 0.0
    %v347 = vcombine.high %v337, 0.0
    %v348 = vcombine.high %v344, 0.0
    %v349 = vcombine.low %v258, %v272
    %v350 = vcombine.high %v258, %v272
    %v352 = vunpack.c.l.s4 1983009808
    %v353 = vunpack.c.0.s8 %v352
    %v354 = vlaneseq
    %v355 = vshrl.u32 %v354, 7
    %v356 = vsub.s32 %v353, %v355
    %v357 = vrot.slane %v349, %v356
    %v359 = vunpack.c.l.s4 1983009808
    %v360 = vunpack.c.0.s8 %v359
    %v361 = vlaneseq
    %v362 = vshrl.u32 %v361, 7
    %v363 = vsub.s32 %v360, %v362
    %v364 = vrot.slane %v350, %v363
    %v365 = vcombine.low %v266, %v278
    %v366 = vcombine.high %v266, %v278
    %v368 = vunpack.c.l.s4 1983009808
    %v369 = vunpack.c.0.s8 %v368
    %v370 = vlaneseq
    %v371 = vshrl.u32 %v370, 7
    %v372 = vsub.s32 %v369, %v371
    %v373 = vrot.slane %v365, %v372
    %v375 = vunpack.c.l.s4 1983009808
    %v376 = vunpack.c.0.s8 %v375
    %v377 = vlaneseq
    %v378 = vshrl.u32 %v377, 7
    %v379 = vsub.s32 %v376, %v378
    %v380 = vrot.slane %v366, %v379
    %v381 = vcombine.low %v357, %v373
    %v382 = vcombine.high %v357, %v373
    %v384 = vunpack.c.l.s4 1934713408
    %v385 = vunpack.c.0.s8 %v384
    %v386 = vlaneseq
    %v387 = vshrl.u32 %v386, 7
    %v388 = vsub.s32 %v385, %v387
    %v389 = vrot.slane %v381, %v388
    %v391 = vunpack.c.l.s4 1934713408
    %v392 = vunpack.c.0.s8 %v391
    %v393 = vlaneseq
    %v394 = vshrl.u32 %v393, 7
    %v395 = vsub.s32 %v392, %v394
    %v396 = vrot.slane %v382, %v395
    %v397 = vcombine.low %v364, %v380
    %v398 = vcombine.high %v364, %v380
    %v400 = vunpack.c.l.s4 1934713408
    %v401 = vunpack.c.0.s8 %v400
    %v402 = vlaneseq
    %v403 = vshrl.u32 %v402, 7
    %v404 = vsub.s32 %v401, %v403
    %v405 = vrot.slane %v397, %v404
    %v407 = vunpack.c.l.s4 1934713408
    %v408 = vunpack.c.0.s8 %v407
    %v409 = vlaneseq
    %v410 = vshrl.u32 %v409, 7
    %v411 = vsub.s32 %v408, %v410
    %v412 = vrot.slane %v398, %v411
    %v413 = vcombine.high %v389, 0.0
    %v414 = vcombine.high %v396, 0.0
    %v415 = vcombine.high %v405, 0.0
    %v416 = vcombine.high %v412, 0.0
    %v417 = vcombine.low %v321, %v328
    %v419 = vunpack.c.l.s4 1983009808
    %v420 = vunpack.c.0.s8 %v419
    %v421 = vlaneseq
    %v422 = vshrl.u32 %v421, 7
    %v423 = vsub.s32 %v420, %v422
    %v424 = vrot.slane %v417, %v423
    %v425 = vcombine.low %v345, %v346
    %v427 = vunpack.c.l.s4 1983009808
    %v428 = vunpack.c.0.s8 %v427
    %v429 = vlaneseq
    %v430 = vshrl.u32 %v429, 7
    %v431 = vsub.s32 %v428, %v430
    %v432 = vrot.slane %v425, %v431
    %v433 = vcombine.low %v337, %v344
    %v435 = vunpack.c.l.s4 1983009808
    %v436 = vunpack.c.0.s8 %v435
    %v437 = vlaneseq
    %v438 = vshrl.u32 %v437, 7
    %v439 = vsub.s32 %v436, %v438
    %v440 = vrot.slane %v433, %v439
    %v441 = vcombine.low %v347, %v348
    %v443 = vunpack.c.l.s4 1983009808
    %v444 = vunpack.c.0.s8 %v443
    %v445 = vlaneseq
    %v446 = vshrl.u32 %v445, 7
    %v447 = vsub.s32 %v444, %v446
    %v448 = vrot.slane %v441, %v447
    %v449 = vcombine.low %v424, %v432
    %v450 = vcombine.high %v424, %v432
    %v452 = vunpack.c.l.s4 1934713408
    %v453 = vunpack.c.0.s8 %v452
    %v454 = vlaneseq
    %v455 = vshrl.u32 %v454, 7
    %v456 = vsub.s32 %v453, %v455
    %v457 = vrot.slane %v449, %v456
    %v459 = vunpack.c.l.s4 1934713408
    %v460 = vunpack.c.0.s8 %v459
    %v461 = vlaneseq
    %v462 = vshrl.u32 %v461, 7
    %v463 = vsub.s32 %v460, %v462
    %v464 = vrot.slane %v450, %v463
    %v465 = vcombine.low %v440, %v448
    %v466 = vcombine.high %v440, %v448
    %v468 = vunpack.c.l.s4 1934713408
    %v469 = vunpack.c.0.s8 %v468
    %v470 = vlaneseq
    %v471 = vshrl.u32 %v470, 7
    %v472 = vsub.s32 %v469, %v471
    %v473 = vrot.slane %v465, %v472
    %v475 = vunpack.c.l.s4 1934713408
    %v476 = vunpack.c.0.s8 %v475
    %v477 = vlaneseq
    %v478 = vshrl.u32 %v477, 7
    %v479 = vsub.s32 %v476, %v478
    %v480 = vrot.slane %v466, %v479
    %v481 = vcombine.low %v457, %v473
    %v482 = vcombine.high %v457, %v473
    %v483 = vcombine.low %v464, %v480
    %v484 = vcombine.high %v464, %v480
    %v485 = vcombine.low %v389, %v396
    %v487 = vunpack.c.l.s4 1983009808
    %v488 = vunpack.c.0.s8 %v487
    %v489 = vlaneseq
    %v490 = vshrl.u32 %v489, 7
    %v491 = vsub.s32 %v488, %v490
    %v492 = vrot.slane %v485, %v491
    %v493 = vcombine.low %v413, %v414
    %v495 = vunpack.c.l.s4 1983009808
    %v496 = vunpack.c.0.s8 %v495
    %v497 = vlaneseq
    %v498 = vshrl.u32 %v497, 7
    %v499 = vsub.s32 %v496, %v498
    %v500 = vrot.slane %v493, %v499
    %v501 = vcombine.low %v405, %v412
    %v503 = vunpack.c.l.s4 1983009808
    %v504 = vunpack.c.0.s8 %v503
    %v505 = vlaneseq
    %v506 = vshrl.u32 %v505, 7
    %v507 = vsub.s32 %v504, %v506
    %v508 = vrot.slane %v501, %v507
    %v509 = vcombine.low %v415, %v416
    %v511 = vunpack.c.l.s4 1983009808
    %v512 = vunpack.c.0.s8 %v511
    %v513 = vlaneseq
    %v514 = vshrl.u32 %v513, 7
    %v515 = vsub.s32 %v512, %v514
    %v516 = vrot.slane %v509, %v515
    %v517 = vcombine.low %v492, %v500
    %v518 = vcombine.high %v492, %v500
    %v520 = vunpack.c.l.s4 1934713408
    %v521 = vunpack.c.0.s8 %v520
    %v522 = vlaneseq
    %v523 = vshrl.u32 %v522, 7
    %v524 = vsub.s32 %v521, %v523
    %v525 = vrot.slane %v517, %v524
    %v527 = vunpack.c.l.s4 1934713408
    %v528 = vunpack.c.0.s8 %v527
    %v529 = vlaneseq
    %v530 = vshrl.u32 %v529, 7
    %v531 = vsub.s32 %v528, %v530
    %v532 = vrot.slane %v518, %v531
    %v533 = vcombine.low %v508, %v516
    %v534 = vcombine.high %v508, %v516
    %v536 = vunpack.c.l.s4 1934713408
    %v537 = vunpack.c.0.s8 %v536
    %v538 = vlaneseq
    %v539 = vshrl.u32 %v538, 7
    %v540 = vsub.s32 %v537, %v539
    %v541 = vrot.slane %v533, %v540
    %v543 = vunpack.c.l.s4 1934713408
    %v544 = vunpack.c.0.s8 %v543
    %v545 = vlaneseq
    %v546 = vshrl.u32 %v545, 7
    %v547 = vsub.s32 %v544, %v546
    %v548 = vrot.slane %v534, %v547
    %v549 = vcombine.low %v525, %v541
    %v550 = vcombine.high %v525, %v541
    %v551 = vcombine.low %v532, %v548
    %v552 = vcombine.high %v532, %v548
    %553 = vrot.lane.b32.xlu0 %v253, 96
    %v554 = vpop.permute.xlu0 %553
    %555 = vrot.lane.b32.xlu0 %v258, 96
    %v556 = vpop.permute.xlu0 %555
    %557 = vrot.lane.b32.xlu0 %v264, 96
    %v558 = vpop.permute.xlu0 %557
    %559 = vrot.lane.b32.xlu0 %v266, 96
    %v560 = vpop.permute.xlu0 %559
    %561 = vrot.lane.b32.xlu0 %v270, 96
    %v562 = vpop.permute.xlu0 %561
    %563 = vrot.lane.b32.xlu0 %v272, 96
    %v564 = vpop.permute.xlu0 %563
    %565 = vrot.lane.b32.xlu0 %v276, 96
    %v566 = vpop.permute.xlu0 %565
    %567 = vrot.lane.b32.xlu0 %v278, 96
    %v568 = vpop.permute.xlu0 %567
    %v577 = vcombine.low %v554, %v562
    %v578 = vcombine.high %v554, %v562
    %v580 = vunpack.c.l.s4 1983009808
    %v581 = vunpack.c.0.s8 %v580
    %v582 = vlaneseq
    %v583 = vshrl.u32 %v582, 7
    %v584 = vsub.s32 %v581, %v583
    %v585 = vrot.slane %v577, %v584
    %v587 = vunpack.c.l.s4 1983009808
    %v588 = vunpack.c.0.s8 %v587
    %v589 = vlaneseq
    %v590 = vshrl.u32 %v589, 7
    %v591 = vsub.s32 %v588, %v590
    %v592 = vrot.slane %v578, %v591
    %v593 = vcombine.low %v558, %v566
    %v594 = vcombine.high %v558, %v566
    %v596 = vunpack.c.l.s4 1983009808
    %v597 = vunpack.c.0.s8 %v596
    %v598 = vlaneseq
    %v599 = vshrl.u32 %v598, 7
    %v600 = vsub.s32 %v597, %v599
    %v601 = vrot.slane %v593, %v600
    %v603 = vunpack.c.l.s4 1983009808
    %v604 = vunpack.c.0.s8 %v603
    %v605 = vlaneseq
    %v606 = vshrl.u32 %v605, 7
    %v607 = vsub.s32 %v604, %v606
    %v608 = vrot.slane %v594, %v607
    %v609 = vcombine.low %v585, %v601
    %v610 = vcombine.high %v585, %v601
    %v612 = vunpack.c.l.s4 1934713408
    %v613 = vunpack.c.0.s8 %v612
    %v614 = vlaneseq
    %v615 = vshrl.u32 %v614, 7
    %v616 = vsub.s32 %v613, %v615
    %v617 = vrot.slane %v609, %v616
    %v619 = vunpack.c.l.s4 1934713408
    %v620 = vunpack.c.0.s8 %v619
    %v621 = vlaneseq
    %v622 = vshrl.u32 %v621, 7
    %v623 = vsub.s32 %v620, %v622
    %v624 = vrot.slane %v610, %v623
    %v625 = vcombine.low %v592, %v608
    %v626 = vcombine.high %v592, %v608
    %v628 = vunpack.c.l.s4 1934713408
    %v629 = vunpack.c.0.s8 %v628
    %v630 = vlaneseq
    %v631 = vshrl.u32 %v630, 7
    %v632 = vsub.s32 %v629, %v631
    %v633 = vrot.slane %v625, %v632
    %v635 = vunpack.c.l.s4 1934713408
    %v636 = vunpack.c.0.s8 %v635
    %v637 = vlaneseq
    %v638 = vshrl.u32 %v637, 7
    %v639 = vsub.s32 %v636, %v638
    %v640 = vrot.slane %v626, %v639
    %v641 = vcombine.high %v617, 0.0
    %v642 = vcombine.high %v624, 0.0
    %v643 = vcombine.high %v633, 0.0
    %v644 = vcombine.high %v640, 0.0
    %v645 = vcombine.low %v556, %v564
    %v646 = vcombine.high %v556, %v564
    %v648 = vunpack.c.l.s4 1983009808
    %v649 = vunpack.c.0.s8 %v648
    %v650 = vlaneseq
    %v651 = vshrl.u32 %v650, 7
    %v652 = vsub.s32 %v649, %v651
    %v653 = vrot.slane %v645, %v652
    %v655 = vunpack.c.l.s4 1983009808
    %v656 = vunpack.c.0.s8 %v655
    %v657 = vlaneseq
    %v658 = vshrl.u32 %v657, 7
    %v659 = vsub.s32 %v656, %v658
    %v660 = vrot.slane %v646, %v659
    %v661 = vcombine.low %v560, %v568
    %v662 = vcombine.high %v560, %v568
    %v664 = vunpack.c.l.s4 1983009808
    %v665 = vunpack.c.0.s8 %v664
    %v666 = vlaneseq
    %v667 = vshrl.u32 %v666, 7
    %v668 = vsub.s32 %v665, %v667
    %v669 = vrot.slane %v661, %v668
    %v671 = vunpack.c.l.s4 1983009808
    %v672 = vunpack.c.0.s8 %v671
    %v673 = vlaneseq
    %v674 = vshrl.u32 %v673, 7
    %v675 = vsub.s32 %v672, %v674
    %v676 = vrot.slane %v662, %v675
    %v677 = vcombine.low %v653, %v669
    %v678 = vcombine.high %v653, %v669
    %v680 = vunpack.c.l.s4 1934713408
    %v681 = vunpack.c.0.s8 %v680
    %v682 = vlaneseq
    %v683 = vshrl.u32 %v682, 7
    %v684 = vsub.s32 %v681, %v683
    %v685 = vrot.slane %v677, %v684
    %v687 = vunpack.c.l.s4 1934713408
    %v688 = vunpack.c.0.s8 %v687
    %v689 = vlaneseq
    %v690 = vshrl.u32 %v689, 7
    %v691 = vsub.s32 %v688, %v690
    %v692 = vrot.slane %v678, %v691
    %v693 = vcombine.low %v660, %v676
    %v694 = vcombine.high %v660, %v676
    %v696 = vunpack.c.l.s4 1934713408
    %v697 = vunpack.c.0.s8 %v696
    %v698 = vlaneseq
    %v699 = vshrl.u32 %v698, 7
    %v700 = vsub.s32 %v697, %v699
    %v701 = vrot.slane %v693, %v700
    %v703 = vunpack.c.l.s4 1934713408
    %v704 = vunpack.c.0.s8 %v703
    %v705 = vlaneseq
    %v706 = vshrl.u32 %v705, 7
    %v707 = vsub.s32 %v704, %v706
    %v708 = vrot.slane %v694, %v707
    %v709 = vcombine.high %v685, 0.0
    %v710 = vcombine.high %v692, 0.0
    %v711 = vcombine.high %v701, 0.0
    %v712 = vcombine.high %v708, 0.0
    %v713 = vcombine.low %v617, %v624
    %v715 = vunpack.c.l.s4 1983009808
    %v716 = vunpack.c.0.s8 %v715
    %v717 = vlaneseq
    %v718 = vshrl.u32 %v717, 7
    %v719 = vsub.s32 %v716, %v718
    %v720 = vrot.slane %v713, %v719
    %v721 = vcombine.low %v641, %v642
    %v723 = vunpack.c.l.s4 1983009808
    %v724 = vunpack.c.0.s8 %v723
    %v725 = vlaneseq
    %v726 = vshrl.u32 %v725, 7
    %v727 = vsub.s32 %v724, %v726
    %v728 = vrot.slane %v721, %v727
    %v729 = vcombine.low %v633, %v640
    %v731 = vunpack.c.l.s4 1983009808
    %v732 = vunpack.c.0.s8 %v731
    %v733 = vlaneseq
    %v734 = vshrl.u32 %v733, 7
    %v735 = vsub.s32 %v732, %v734
    %v736 = vrot.slane %v729, %v735
    %v737 = vcombine.low %v643, %v644
    %v739 = vunpack.c.l.s4 1983009808
    %v740 = vunpack.c.0.s8 %v739
    %v741 = vlaneseq
    %v742 = vshrl.u32 %v741, 7
    %v743 = vsub.s32 %v740, %v742
    %v744 = vrot.slane %v737, %v743
    %v745 = vcombine.low %v720, %v728
    %v746 = vcombine.high %v720, %v728
    %v748 = vunpack.c.l.s4 1934713408
    %v749 = vunpack.c.0.s8 %v748
    %v750 = vlaneseq
    %v751 = vshrl.u32 %v750, 7
    %v752 = vsub.s32 %v749, %v751
    %v753 = vrot.slane %v745, %v752
    %v755 = vunpack.c.l.s4 1934713408
    %v756 = vunpack.c.0.s8 %v755
    %v757 = vlaneseq
    %v758 = vshrl.u32 %v757, 7
    %v759 = vsub.s32 %v756, %v758
    %v760 = vrot.slane %v746, %v759
    %v761 = vcombine.low %v736, %v744
    %v762 = vcombine.high %v736, %v744
    %v764 = vunpack.c.l.s4 1934713408
    %v765 = vunpack.c.0.s8 %v764
    %v766 = vlaneseq
    %v767 = vshrl.u32 %v766, 7
    %v768 = vsub.s32 %v765, %v767
    %v769 = vrot.slane %v761, %v768
    %v771 = vunpack.c.l.s4 1934713408
    %v772 = vunpack.c.0.s8 %v771
    %v773 = vlaneseq
    %v774 = vshrl.u32 %v773, 7
    %v775 = vsub.s32 %v772, %v774
    %v776 = vrot.slane %v762, %v775
    %v777 = vcombine.low %v753, %v769
    %v778 = vcombine.high %v753, %v769
    %v779 = vcombine.low %v760, %v776
    %v780 = vcombine.high %v760, %v776
    %v781 = vcombine.low %v685, %v692
    %v783 = vunpack.c.l.s4 1983009808
    %v784 = vunpack.c.0.s8 %v783
    %v785 = vlaneseq
    %v786 = vshrl.u32 %v785, 7
    %v787 = vsub.s32 %v784, %v786
    %v788 = vrot.slane %v781, %v787
    %v789 = vcombine.low %v709, %v710
    %v791 = vunpack.c.l.s4 1983009808
    %v792 = vunpack.c.0.s8 %v791
    %v793 = vlaneseq
    %v794 = vshrl.u32 %v793, 7
    %v795 = vsub.s32 %v792, %v794
    %v796 = vrot.slane %v789, %v795
    %v797 = vcombine.low %v701, %v708
    %v799 = vunpack.c.l.s4 1983009808
    %v800 = vunpack.c.0.s8 %v799
    %v801 = vlaneseq
    %v802 = vshrl.u32 %v801, 7
    %v803 = vsub.s32 %v800, %v802
    %v804 = vrot.slane %v797, %v803
    %v805 = vcombine.low %v711, %v712
    %v807 = vunpack.c.l.s4 1983009808
    %v808 = vunpack.c.0.s8 %v807
    %v809 = vlaneseq
    %v810 = vshrl.u32 %v809, 7
    %v811 = vsub.s32 %v808, %v810
    %v812 = vrot.slane %v805, %v811
    %v813 = vcombine.low %v788, %v796
    %v814 = vcombine.high %v788, %v796
    %v816 = vunpack.c.l.s4 1934713408
    %v817 = vunpack.c.0.s8 %v816
    %v818 = vlaneseq
    %v819 = vshrl.u32 %v818, 7
    %v820 = vsub.s32 %v817, %v819
    %v821 = vrot.slane %v813, %v820
    %v823 = vunpack.c.l.s4 1934713408
    %v824 = vunpack.c.0.s8 %v823
    %v825 = vlaneseq
    %v826 = vshrl.u32 %v825, 7
    %v827 = vsub.s32 %v824, %v826
    %v828 = vrot.slane %v814, %v827
    %v829 = vcombine.low %v804, %v812
    %v830 = vcombine.high %v804, %v812
    %v832 = vunpack.c.l.s4 1934713408
    %v833 = vunpack.c.0.s8 %v832
    %v834 = vlaneseq
    %v835 = vshrl.u32 %v834, 7
    %v836 = vsub.s32 %v833, %v835
    %v837 = vrot.slane %v829, %v836
    %v839 = vunpack.c.l.s4 1934713408
    %v840 = vunpack.c.0.s8 %v839
    %v841 = vlaneseq
    %v842 = vshrl.u32 %v841, 7
    %v843 = vsub.s32 %v840, %v842
    %v844 = vrot.slane %v830, %v843
    %v845 = vcombine.low %v821, %v837
    %v846 = vcombine.high %v821, %v837
    %v847 = vcombine.low %v828, %v844
    %v848 = vcombine.high %v828, %v844
    %849 = vrot.lane.b32.xlu0 %v253, 64
    %v850 = vpop.permute.xlu0 %849
    %851 = vrot.lane.b32.xlu0 %v258, 64
    %v852 = vpop.permute.xlu0 %851
    %853 = vrot.lane.b32.xlu0 %v264, 64
    %v854 = vpop.permute.xlu0 %853
    %855 = vrot.lane.b32.xlu0 %v266, 64
    %v856 = vpop.permute.xlu0 %855
    %857 = vrot.lane.b32.xlu0 %v270, 64
    %v858 = vpop.permute.xlu0 %857
    %859 = vrot.lane.b32.xlu0 %v272, 64
    %v860 = vpop.permute.xlu0 %859
    %861 = vrot.lane.b32.xlu0 %v276, 64
    %v862 = vpop.permute.xlu0 %861
    %863 = vrot.lane.b32.xlu0 %v278, 64
    %v864 = vpop.permute.xlu0 %863
    %v873 = vcombine.low %v850, %v858
    %v874 = vcombine.high %v850, %v858
    %v876 = vunpack.c.l.s4 1983009808
    %v877 = vunpack.c.0.s8 %v876
    %v878 = vlaneseq
    %v879 = vshrl.u32 %v878, 7
    %v880 = vsub.s32 %v877, %v879
    %v881 = vrot.slane %v873, %v880
    %v883 = vunpack.c.l.s4 1983009808
    %v884 = vunpack.c.0.s8 %v883
    %v885 = vlaneseq
    %v886 = vshrl.u32 %v885, 7
    %v887 = vsub.s32 %v884, %v886
    %v888 = vrot.slane %v874, %v887
    %v889 = vcombine.low %v854, %v862
    %v890 = vcombine.high %v854, %v862
    %v892 = vunpack.c.l.s4 1983009808
    %v893 = vunpack.c.0.s8 %v892
    %v894 = vlaneseq
    %v895 = vshrl.u32 %v894, 7
    %v896 = vsub.s32 %v893, %v895
    %v897 = vrot.slane %v889, %v896
    %v899 = vunpack.c.l.s4 1983009808
    %v900 = vunpack.c.0.s8 %v899
    %v901 = vlaneseq
    %v902 = vshrl.u32 %v901, 7
    %v903 = vsub.s32 %v900, %v902
    %v904 = vrot.slane %v890, %v903
    %v905 = vcombine.low %v881, %v897
    %v906 = vcombine.high %v881, %v897
    %v908 = vunpack.c.l.s4 1934713408
    %v909 = vunpack.c.0.s8 %v908
    %v910 = vlaneseq
    %v911 = vshrl.u32 %v910, 7
    %v912 = vsub.s32 %v909, %v911
    %v913 = vrot.slane %v905, %v912
    %v915 = vunpack.c.l.s4 1934713408
    %v916 = vunpack.c.0.s8 %v915
    %v917 = vlaneseq
    %v918 = vshrl.u32 %v917, 7
    %v919 = vsub.s32 %v916, %v918
    %v920 = vrot.slane %v906, %v919
    %v921 = vcombine.low %v888, %v904
    %v922 = vcombine.high %v888, %v904
    %v924 = vunpack.c.l.s4 1934713408
    %v925 = vunpack.c.0.s8 %v924
    %v926 = vlaneseq
    %v927 = vshrl.u32 %v926, 7
    %v928 = vsub.s32 %v925, %v927
    %v929 = vrot.slane %v921, %v928
    %v931 = vunpack.c.l.s4 1934713408
    %v932 = vunpack.c.0.s8 %v931
    %v933 = vlaneseq
    %v934 = vshrl.u32 %v933, 7
    %v935 = vsub.s32 %v932, %v934
    %v936 = vrot.slane %v922, %v935
    %v937 = vcombine.high %v913, 0.0
    %v938 = vcombine.high %v920, 0.0
    %v939 = vcombine.high %v929, 0.0
    %v940 = vcombine.high %v936, 0.0
    %v941 = vcombine.low %v852, %v860
    %v942 = vcombine.high %v852, %v860
    %v944 = vunpack.c.l.s4 1983009808
    %v945 = vunpack.c.0.s8 %v944
    %v946 = vlaneseq
    %v947 = vshrl.u32 %v946, 7
    %v948 = vsub.s32 %v945, %v947
    %v949 = vrot.slane %v941, %v948
    %v951 = vunpack.c.l.s4 1983009808
    %v952 = vunpack.c.0.s8 %v951
    %v953 = vlaneseq
    %v954 = vshrl.u32 %v953, 7
    %v955 = vsub.s32 %v952, %v954
    %v956 = vrot.slane %v942, %v955
    %v957 = vcombine.low %v856, %v864
    %v958 = vcombine.high %v856, %v864
    %v960 = vunpack.c.l.s4 1983009808
    %v961 = vunpack.c.0.s8 %v960
    %v962 = vlaneseq
    %v963 = vshrl.u32 %v962, 7
    %v964 = vsub.s32 %v961, %v963
    %v965 = vrot.slane %v957, %v964
    %v967 = vunpack.c.l.s4 1983009808
    %v968 = vunpack.c.0.s8 %v967
    %v969 = vlaneseq
    %v970 = vshrl.u32 %v969, 7
    %v971 = vsub.s32 %v968, %v970
    %v972 = vrot.slane %v958, %v971
    %v973 = vcombine.low %v949, %v965
    %v974 = vcombine.high %v949, %v965
    %v976 = vunpack.c.l.s4 1934713408
    %v977 = vunpack.c.0.s8 %v976
    %v978 = vlaneseq
    %v979 = vshrl.u32 %v978, 7
    %v980 = vsub.s32 %v977, %v979
    %v981 = vrot.slane %v973, %v980
    %v983 = vunpack.c.l.s4 1934713408
    %v984 = vunpack.c.0.s8 %v983
    %v985 = vlaneseq
    %v986 = vshrl.u32 %v985, 7
    %v987 = vsub.s32 %v984, %v986
    %v988 = vrot.slane %v974, %v987
    %v989 = vcombine.low %v956, %v972
    %v990 = vcombine.high %v956, %v972
    %v992 = vunpack.c.l.s4 1934713408
    %v993 = vunpack.c.0.s8 %v992
    %v994 = vlaneseq
    %v995 = vshrl.u32 %v994, 7
    %v996 = vsub.s32 %v993, %v995
    %v997 = vrot.slane %v989, %v996
    %v999 = vunpack.c.l.s4 1934713408
    %v1000 = vunpack.c.0.s8 %v999
    %v1001 = vlaneseq
    %v1002 = vshrl.u32 %v1001, 7
    %v1003 = vsub.s32 %v1000, %v1002
    %v1004 = vrot.slane %v990, %v1003
    %v1005 = vcombine.high %v981, 0.0
    %v1006 = vcombine.high %v988, 0.0
    %v1007 = vcombine.high %v997, 0.0
    %v1008 = vcombine.high %v1004, 0.0
    %v1009 = vcombine.low %v913, %v920
    %v1011 = vunpack.c.l.s4 1983009808
    %v1012 = vunpack.c.0.s8 %v1011
    %v1013 = vlaneseq
    %v1014 = vshrl.u32 %v1013, 7
    %v1015 = vsub.s32 %v1012, %v1014
    %v1016 = vrot.slane %v1009, %v1015
    %v1017 = vcombine.low %v937, %v938
    %v1019 = vunpack.c.l.s4 1983009808
    %v1020 = vunpack.c.0.s8 %v1019
    %v1021 = vlaneseq
    %v1022 = vshrl.u32 %v1021, 7
    %v1023 = vsub.s32 %v1020, %v1022
    %v1024 = vrot.slane %v1017, %v1023
    %v1025 = vcombine.low %v929, %v936
    %v1027 = vunpack.c.l.s4 1983009808
    %v1028 = vunpack.c.0.s8 %v1027
    %v1029 = vlaneseq
    %v1030 = vshrl.u32 %v1029, 7
    %v1031 = vsub.s32 %v1028, %v1030
    %v1032 = vrot.slane %v1025, %v1031
    %v1033 = vcombine.low %v939, %v940
    %v1035 = vunpack.c.l.s4 1983009808
    %v1036 = vunpack.c.0.s8 %v1035
    %v1037 = vlaneseq
    %v1038 = vshrl.u32 %v1037, 7
    %v1039 = vsub.s32 %v1036, %v1038
    %v1040 = vrot.slane %v1033, %v1039
    %v1041 = vcombine.low %v1016, %v1024
    %v1042 = vcombine.high %v1016, %v1024
    %v1044 = vunpack.c.l.s4 1934713408
    %v1045 = vunpack.c.0.s8 %v1044
    %v1046 = vlaneseq
    %v1047 = vshrl.u32 %v1046, 7
    %v1048 = vsub.s32 %v1045, %v1047
    %v1049 = vrot.slane %v1041, %v1048
    %v1051 = vunpack.c.l.s4 1934713408
    %v1052 = vunpack.c.0.s8 %v1051
    %v1053 = vlaneseq
    %v1054 = vshrl.u32 %v1053, 7
    %v1055 = vsub.s32 %v1052, %v1054
    %v1056 = vrot.slane %v1042, %v1055
    %v1057 = vcombine.low %v1032, %v1040
    %v1058 = vcombine.high %v1032, %v1040
    %v1060 = vunpack.c.l.s4 1934713408
    %v1061 = vunpack.c.0.s8 %v1060
    %v1062 = vlaneseq
    %v1063 = vshrl.u32 %v1062, 7
    %v1064 = vsub.s32 %v1061, %v1063
    %v1065 = vrot.slane %v1057, %v1064
    %v1067 = vunpack.c.l.s4 1934713408
    %v1068 = vunpack.c.0.s8 %v1067
    %v1069 = vlaneseq
    %v1070 = vshrl.u32 %v1069, 7
    %v1071 = vsub.s32 %v1068, %v1070
    %v1072 = vrot.slane %v1058, %v1071
    %v1073 = vcombine.low %v1049, %v1065
    %v1074 = vcombine.high %v1049, %v1065
    %v1075 = vcombine.low %v1056, %v1072
    %v1076 = vcombine.high %v1056, %v1072
    %v1077 = vcombine.low %v981, %v988
    %v1079 = vunpack.c.l.s4 1983009808
    %v1080 = vunpack.c.0.s8 %v1079
    %v1081 = vlaneseq
    %v1082 = vshrl.u32 %v1081, 7
    %v1083 = vsub.s32 %v1080, %v1082
    %v1084 = vrot.slane %v1077, %v1083
    %v1085 = vcombine.low %v1005, %v1006
    %v1087 = vunpack.c.l.s4 1983009808
    %v1088 = vunpack.c.0.s8 %v1087
    %v1089 = vlaneseq
    %v1090 = vshrl.u32 %v1089, 7
    %v1091 = vsub.s32 %v1088, %v1090
    %v1092 = vrot.slane %v1085, %v1091
    %v1093 = vcombine.low %v997, %v1004
    %v1095 = vunpack.c.l.s4 1983009808
    %v1096 = vunpack.c.0.s8 %v1095
    %v1097 = vlaneseq
    %v1098 = vshrl.u32 %v1097, 7
    %v1099 = vsub.s32 %v1096, %v1098
    %v1100 = vrot.slane %v1093, %v1099
    %v1101 = vcombine.low %v1007, %v1008
    %v1103 = vunpack.c.l.s4 1983009808
    %v1104 = vunpack.c.0.s8 %v1103
    %v1105 = vlaneseq
    %v1106 = vshrl.u32 %v1105, 7
    %v1107 = vsub.s32 %v1104, %v1106
    %v1108 = vrot.slane %v1101, %v1107
    %v1109 = vcombine.low %v1084, %v1092
    %v1110 = vcombine.high %v1084, %v1092
    %v1112 = vunpack.c.l.s4 1934713408
    %v1113 = vunpack.c.0.s8 %v1112
    %v1114 = vlaneseq
    %v1115 = vshrl.u32 %v1114, 7
    %v1116 = vsub.s32 %v1113, %v1115
    %v1117 = vrot.slane %v1109, %v1116
    %v1119 = vunpack.c.l.s4 1934713408
    %v1120 = vunpack.c.0.s8 %v1119
    %v1121 = vlaneseq
    %v1122 = vshrl.u32 %v1121, 7
    %v1123 = vsub.s32 %v1120, %v1122
    %v1124 = vrot.slane %v1110, %v1123
    %v1125 = vcombine.low %v1100, %v1108
    %v1126 = vcombine.high %v1100, %v1108
    %v1128 = vunpack.c.l.s4 1934713408
    %v1129 = vunpack.c.0.s8 %v1128
    %v1130 = vlaneseq
    %v1131 = vshrl.u32 %v1130, 7
    %v1132 = vsub.s32 %v1129, %v1131
    %v1133 = vrot.slane %v1125, %v1132
    %v1135 = vunpack.c.l.s4 1934713408
    %v1136 = vunpack.c.0.s8 %v1135
    %v1137 = vlaneseq
    %v1138 = vshrl.u32 %v1137, 7
    %v1139 = vsub.s32 %v1136, %v1138
    %v1140 = vrot.slane %v1126, %v1139
    %v1141 = vcombine.low %v1117, %v1133
    %v1142 = vcombine.high %v1117, %v1133
    %v1143 = vcombine.low %v1124, %v1140
    %v1144 = vcombine.high %v1124, %v1140
    %vm1145 = vcmask 64512
    %v1147 = vsel %vm1145, %v481, 0
    %v1150 = vsel %vm1145, %v777, 0
    %1152 = vmatprep.subr.mxu0 0.0
    %1153 = vmatpush1.xpose.msra.mxu0 %v1150
    %1154 = vmatprep.subr.mxu0 0.0
    %1155 = vmatpush1.xpose.msra.mxu0 0.0
    %1156 = vmatprep.subr.mxu0 0.0
    %1157 = vmatpush1.xpose.msra.mxu0 0.0
    %1158 = vmatprep.subr.mxu0 0.0
    %1159 = vmatpush1.xpose.msra.mxu0 0.0
    %1160 = vmatprep.subr.mxu0 0.0
    %1161 = vmatpush1.xpose.msra.mxu0 0.0
    %1162 = vmatprep.subr.mxu0 0.0
    %1163 = vmatpush1.xpose.msra.mxu0 0.0
    %1164 = vmatprep.subr.mxu0 0.0
    %1165 = vmatpush1.xpose.msra.mxu0 0.0
    %1166 = vmatprep.subr.mxu0 0.0
    %1167 = vmatpush1.xpose.msra.mxu0 0.0
    %1168 = vmatprep.subr.mxu0 0.0
    %1169 = vmatpush1.xpose.msra.mxu0 0.0
    %1170 = vmatprep.subr.mxu0 0.0
    %1171 = vmatpush1.xpose.msra.mxu0 0.0
    %1172 = vmatprep.subr.mxu0 0.0
    %1173 = vmatpush1.xpose.msra.mxu0 0.0
    %1174 = vmatprep.subr.mxu0 0.0
    %1175 = vmatpush1.xpose.msra.mxu0 0.0
    %1176 = vmatprep.subr.mxu0 0.0
    %1177 = vmatpush1.xpose.msra.mxu0 0.0
    %1178 = vmatprep.subr.mxu0 0.0
    %1179 = vmatpush1.xpose.msra.mxu0 0.0
    %1180 = vmatprep.subr.mxu0 0.0
    %1181 = vmatpush1.xpose.msra.mxu0 0.0
    %1182 = vmatprep.subr.mxu0 0.0
    %1183 = vmatpush1.xpose.msra.mxu0 0.0
    %1184 = vmatprep.subr.mxu0 0.0
    %1185 = vmatpush1.xpose.msra.mxu0 0.0
    %1186 = vmatprep.subr.mxu0 0.0
    %1187 = vmatpush1.xpose.msra.mxu0 0.0
    %1188 = vmatprep.subr.mxu0 0.0
    %1189 = vmatpush1.xpose.msra.mxu0 0.0
    %1190 = vmatprep.subr.mxu0 0.0
    %1191 = vmatpush1.xpose.msra.mxu0 0.0
    %1192 = vmatprep.subr.mxu0 0.0
    %1193 = vmatpush1.xpose.msra.mxu0 0.0
    %1194 = vmatprep.subr.mxu0 0.0
    %1195 = vmatpush1.xpose.msra.mxu0 0.0
    %1196 = vmatprep.subr.mxu0 0.0
    %1197 = vmatpush1.xpose.msra.mxu0 0.0
    %1198 = vmatprep.subr.mxu0 0.0
    %1199 = vmatpush1.xpose.msra.mxu0 0.0
    %1200 = vmatprep.subr.mxu0 0.0
    %1201 = vmatpush1.xpose.msra.mxu0 0.0
    %1202 = vmatprep.subr.mxu0 0.0
    %1203 = vmatpush1.xpose.msra.mxu0 0.0
    %1204 = vmatprep.subr.mxu0 0.0
    %1205 = vmatpush1.xpose.msra.mxu0 0.0
    %1206 = vmatprep.subr.mxu0 0.0
    %1207 = vmatpush1.xpose.msra.mxu0 0.0
    %1208 = vmatprep.subr.mxu0 0.0
    %1209 = vmatpush1.xpose.msra.mxu0 0.0
    %1210 = vmatprep.subr.mxu0 0.0
    %1211 = vmatpush1.xpose.msra.mxu0 0.0
    %1212 = vmatprep.subr.mxu0 0.0
    %1213 = vmatpush1.xpose.msra.mxu0 0.0
    %1214 = vmatprep.subr.mxu0 0.0
    %1215 = vmatpush1.xpose.msra.mxu0 0.0
    %1216 = vmatprep.mubr.f32.mxu0 0.0
    %1217 = vmatmul.mubr.f32.gmra.mrb[0].mxu0 %v1147
    %v1218 = vpop.f32.mrb[0].mxu0
    %v1219 = vadd.f32 0.0, %v1218
    %v1220 = vpop.f32.mrb[0].mxu0
    %1221 = vdwg.mxu0
    %v1223 = vsel %vm1145, %v482, 0
    %v1226 = vsel %vm1145, %v778, 0
    %1228 = vmatprep.subr.mxu0 0.0
    %1229 = vmatpush1.xpose.msra.mxu0 %v1226
    %1230 = vmatprep.subr.mxu0 0.0
    %1231 = vmatpush1.xpose.msra.mxu0 0.0
    %1232 = vmatprep.subr.mxu0 0.0
    %1233 = vmatpush1.xpose.msra.mxu0 0.0
    %1234 = vmatprep.subr.mxu0 0.0
    %1235 = vmatpush1.xpose.msra.mxu0 0.0
    %1236 = vmatprep.subr.mxu0 0.0
    %1237 = vmatpush1.xpose.msra.mxu0 0.0
    %1238 = vmatprep.subr.mxu0 0.0
    %1239 = vmatpush1.xpose.msra.mxu0 0.0
    %1240 = vmatprep.subr.mxu0 0.0
    %1241 = vmatpush1.xpose.msra.mxu0 0.0
    %1242 = vmatprep.subr.mxu0 0.0
    %1243 = vmatpush1.xpose.msra.mxu0 0.0
    %1244 = vmatprep.subr.mxu0 0.0
    %1245 = vmatpush1.xpose.msra.mxu0 0.0
    %1246 = vmatprep.subr.mxu0 0.0
    %1247 = vmatpush1.xpose.msra.mxu0 0.0
    %1248 = vmatprep.subr.mxu0 0.0
    %1249 = vmatpush1.xpose.msra.mxu0 0.0
    %1250 = vmatprep.subr.mxu0 0.0
    %1251 = vmatpush1.xpose.msra.mxu0 0.0
    %1252 = vmatprep.subr.mxu0 0.0
    %1253 = vmatpush1.xpose.msra.mxu0 0.0
    %1254 = vmatprep.subr.mxu0 0.0
    %1255 = vmatpush1.xpose.msra.mxu0 0.0
    %1256 = vmatprep.subr.mxu0 0.0
    %1257 = vmatpush1.xpose.msra.mxu0 0.0
    %1258 = vmatprep.subr.mxu0 0.0
    %1259 = vmatpush1.xpose.msra.mxu0 0.0
    %1260 = vmatprep.subr.mxu0 0.0
    %1261 = vmatpush1.xpose.msra.mxu0 0.0
    %1262 = vmatprep.subr.mxu0 0.0
    %1263 = vmatpush1.xpose.msra.mxu0 0.0
    %1264 = vmatprep.subr.mxu0 0.0
    %1265 = vmatpush1.xpose.msra.mxu0 0.0
    %1266 = vmatprep.subr.mxu0 0.0
    %1267 = vmatpush1.xpose.msra.mxu0 0.0
    %1268 = vmatprep.subr.mxu0 0.0
    %1269 = vmatpush1.xpose.msra.mxu0 0.0
    %1270 = vmatprep.subr.mxu0 0.0
    %1271 = vmatpush1.xpose.msra.mxu0 0.0
    %1272 = vmatprep.subr.mxu0 0.0
    %1273 = vmatpush1.xpose.msra.mxu0 0.0
    %1274 = vmatprep.subr.mxu0 0.0
    %1275 = vmatpush1.xpose.msra.mxu0 0.0
    %1276 = vmatprep.subr.mxu0 0.0
    %1277 = vmatpush1.xpose.msra.mxu0 0.0
    %1278 = vmatprep.subr.mxu0 0.0
    %1279 = vmatpush1.xpose.msra.mxu0 0.0
    %1280 = vmatprep.subr.mxu0 0.0
    %1281 = vmatpush1.xpose.msra.mxu0 0.0
    %1282 = vmatprep.subr.mxu0 0.0
    %1283 = vmatpush1.xpose.msra.mxu0 0.0
    %1284 = vmatprep.subr.mxu0 0.0
    %1285 = vmatpush1.xpose.msra.mxu0 0.0
    %1286 = vmatprep.subr.mxu0 0.0
    %1287 = vmatpush1.xpose.msra.mxu0 0.0
    %1288 = vmatprep.subr.mxu0 0.0
    %1289 = vmatpush1.xpose.msra.mxu0 0.0
    %1290 = vmatprep.subr.mxu0 0.0
    %1291 = vmatpush1.xpose.msra.mxu0 0.0
    %1292 = vmatprep.mubr.f32.mxu0 0.0
    %1293 = vmatmul.mubr.f32.gmra.mrb[0].mxu0 %v1223
    %v1294 = vpop.f32.mrb[0].mxu0
    %v1295 = vadd.f32 0.0, %v1294
    %v1296 = vpop.f32.mrb[0].mxu0
    %1297 = vdwg.mxu0
    %v1299 = vsel %vm1145, %v483, 0
    %v1302 = vsel %vm1145, %v779, 0
    %1304 = vmatprep.subr.mxu0 0.0
    %1305 = vmatpush1.xpose.msra.mxu0 %v1302
    %1306 = vmatprep.subr.mxu0 0.0
    %1307 = vmatpush1.xpose.msra.mxu0 0.0
    %1308 = vmatprep.subr.mxu0 0.0
    %1309 = vmatpush1.xpose.msra.mxu0 0.0
    %1310 = vmatprep.subr.mxu0 0.0
    %1311 = vmatpush1.xpose.msra.mxu0 0.0
    %1312 = vmatprep.subr.mxu0 0.0
    %1313 = vmatpush1.xpose.msra.mxu0 0.0
    %1314 = vmatprep.subr.mxu0 0.0
    %1315 = vmatpush1.xpose.msra.mxu0 0.0
    %1316 = vmatprep.subr.mxu0 0.0
    %1317 = vmatpush1.xpose.msra.mxu0 0.0
    %1318 = vmatprep.subr.mxu0 0.0
    %1319 = vmatpush1.xpose.msra.mxu0 0.0
    %1320 = vmatprep.subr.mxu0 0.0
    %1321 = vmatpush1.xpose.msra.mxu0 0.0
    %1322 = vmatprep.subr.mxu0 0.0
    %1323 = vmatpush1.xpose.msra.mxu0 0.0
    %1324 = vmatprep.subr.mxu0 0.0
    %1325 = vmatpush1.xpose.msra.mxu0 0.0
    %1326 = vmatprep.subr.mxu0 0.0
    %1327 = vmatpush1.xpose.msra.mxu0 0.0
    %1328 = vmatprep.subr.mxu0 0.0
    %1329 = vmatpush1.xpose.msra.mxu0 0.0
    %1330 = vmatprep.subr.mxu0 0.0
    %1331 = vmatpush1.xpose.msra.mxu0 0.0
    %1332 = vmatprep.subr.mxu0 0.0
    %1333 = vmatpush1.xpose.msra.mxu0 0.0
    %1334 = vmatprep.subr.mxu0 0.0
    %1335 = vmatpush1.xpose.msra.mxu0 0.0
    %1336 = vmatprep.subr.mxu0 0.0
    %1337 = vmatpush1.xpose.msra.mxu0 0.0
    %1338 = vmatprep.subr.mxu0 0.0
    %1339 = vmatpush1.xpose.msra.mxu0 0.0
    %1340 = vmatprep.subr.mxu0 0.0
    %1341 = vmatpush1.xpose.msra.mxu0 0.0
    %1342 = vmatprep.subr.mxu0 0.0
    %1343 = vmatpush1.xpose.msra.mxu0 0.0
    %1344 = vmatprep.subr.mxu0 0.0
    %1345 = vmatpush1.xpose.msra.mxu0 0.0
    %1346 = vmatprep.subr.mxu0 0.0
    %1347 = vmatpush1.xpose.msra.mxu0 0.0
    %1348 = vmatprep.subr.mxu0 0.0
    %1349 = vmatpush1.xpose.msra.mxu0 0.0
    %1350 = vmatprep.subr.mxu0 0.0
    %1351 = vmatpush1.xpose.msra.mxu0 0.0
    %1352 = vmatprep.subr.mxu0 0.0
    %1353 = vmatpush1.xpose.msra.mxu0 0.0
    %1354 = vmatprep.subr.mxu0 0.0
    %1355 = vmatpush1.xpose.msra.mxu0 0.0
    %1356 = vmatprep.subr.mxu0 0.0
    %1357 = vmatpush1.xpose.msra.mxu0 0.0
    %1358 = vmatprep.subr.mxu0 0.0
    %1359 = vmatpush1.xpose.msra.mxu0 0.0
    %1360 = vmatprep.subr.mxu0 0.0
    %1361 = vmatpush1.xpose.msra.mxu0 0.0
    %1362 = vmatprep.subr.mxu0 0.0
    %1363 = vmatpush1.xpose.msra.mxu0 0.0
    %1364 = vmatprep.subr.mxu0 0.0
    %1365 = vmatpush1.xpose.msra.mxu0 0.0
    %1366 = vmatprep.subr.mxu0 0.0
    %1367 = vmatpush1.xpose.msra.mxu0 0.0
    %1368 = vmatprep.mubr.f32.mxu0 0.0
    %1369 = vmatmul.mubr.f32.gmra.mrb[0].mxu0 %v1299
    %v1370 = vpop.f32.mrb[0].mxu0
    %v1371 = vadd.f32 0.0, %v1370
    %v1372 = vpop.f32.mrb[0].mxu0
    %1373 = vdwg.mxu0
    %v1375 = vsel %vm1145, %v484, 0
    %v1378 = vsel %vm1145, %v780, 0
    %1380 = vmatprep.subr.mxu0 0.0
    %1381 = vmatpush1.xpose.msra.mxu0 %v1378
    %1382 = vmatprep.subr.mxu0 0.0
    %1383 = vmatpush1.xpose.msra.mxu0 0.0
    %1384 = vmatprep.subr.mxu0 0.0
    %1385 = vmatpush1.xpose.msra.mxu0 0.0
    %1386 = vmatprep.subr.mxu0 0.0
    %1387 = vmatpush1.xpose.msra.mxu0 0.0
    %1388 = vmatprep.subr.mxu0 0.0
    %1389 = vmatpush1.xpose.msra.mxu0 0.0
    %1390 = vmatprep.subr.mxu0 0.0
    %1391 = vmatpush1.xpose.msra.mxu0 0.0
    %1392 = vmatprep.subr.mxu0 0.0
    %1393 = vmatpush1.xpose.msra.mxu0 0.0
    %1394 = vmatprep.subr.mxu0 0.0
    %1395 = vmatpush1.xpose.msra.mxu0 0.0
    %1396 = vmatprep.subr.mxu0 0.0
    %1397 = vmatpush1.xpose.msra.mxu0 0.0
    %1398 = vmatprep.subr.mxu0 0.0
    %1399 = vmatpush1.xpose.msra.mxu0 0.0
    %1400 = vmatprep.subr.mxu0 0.0
    %1401 = vmatpush1.xpose.msra.mxu0 0.0
    %1402 = vmatprep.subr.mxu0 0.0
    %1403 = vmatpush1.xpose.msra.mxu0 0.0
    %1404 = vmatprep.subr.mxu0 0.0
    %1405 = vmatpush1.xpose.msra.mxu0 0.0
    %1406 = vmatprep.subr.mxu0 0.0
    %1407 = vmatpush1.xpose.msra.mxu0 0.0
    %1408 = vmatprep.subr.mxu0 0.0
    %1409 = vmatpush1.xpose.msra.mxu0 0.0
    %1410 = vmatprep.subr.mxu0 0.0
    %1411 = vmatpush1.xpose.msra.mxu0 0.0
    %1412 = vmatprep.subr.mxu0 0.0
    %1413 = vmatpush1.xpose.msra.mxu0 0.0
    %1414 = vmatprep.subr.mxu0 0.0
    %1415 = vmatpush1.xpose.msra.mxu0 0.0
    %1416 = vmatprep.subr.mxu0 0.0
    %1417 = vmatpush1.xpose.msra.mxu0 0.0
    %1418 = vmatprep.subr.mxu0 0.0
    %1419 = vmatpush1.xpose.msra.mxu0 0.0
    %1420 = vmatprep.subr.mxu0 0.0
    %1421 = vmatpush1.xpose.msra.mxu0 0.0
    %1422 = vmatprep.subr.mxu0 0.0
    %1423 = vmatpush1.xpose.msra.mxu0 0.0
    %1424 = vmatprep.subr.mxu0 0.0
    %1425 = vmatpush1.xpose.msra.mxu0 0.0
    %1426 = vmatprep.subr.mxu0 0.0
    %1427 = vmatpush1.xpose.msra.mxu0 0.0
    %1428 = vmatprep.subr.mxu0 0.0
    %1429 = vmatpush1.xpose.msra.mxu0 0.0
    %1430 = vmatprep.subr.mxu0 0.0
    %1431 = vmatpush1.xpose.msra.mxu0 0.0
    %1432 = vmatprep.subr.mxu0 0.0
    %1433 = vmatpush1.xpose.msra.mxu0 0.0
    %1434 = vmatprep.subr.mxu0 0.0
    %1435 = vmatpush1.xpose.msra.mxu0 0.0
    %1436 = vmatprep.subr.mxu0 0.0
    %1437 = vmatpush1.xpose.msra.mxu0 0.0
    %1438 = vmatprep.subr.mxu0 0.0
    %1439 = vmatpush1.xpose.msra.mxu0 0.0
    %1440 = vmatprep.subr.mxu0 0.0
    %1441 = vmatpush1.xpose.msra.mxu0 0.0
    %1442 = vmatprep.subr.mxu0 0.0
    %1443 = vmatpush1.xpose.msra.mxu0 0.0
    %1444 = vmatprep.mubr.f32.mxu0 0.0
    %1445 = vmatmul.mubr.f32.gmra.mrb[0].mxu0 %v1375
    %v1446 = vpop.f32.mrb[0].mxu0
    %v1447 = vadd.f32 0.0, %v1446
    %v1448 = vpop.f32.mrb[0].mxu0
    %1449 = vdwg.mxu0
    %v1451 = vsel %vm1145, %v549, 0
    %v1454 = vsel %vm1145, %v845, 0
    %1456 = vmatprep.subr.mxu0 0.0
    %1457 = vmatpush1.xpose.msra.mxu0 %v1454
    %1458 = vmatprep.subr.mxu0 0.0
    %1459 = vmatpush1.xpose.msra.mxu0 0.0
    %1460 = vmatprep.subr.mxu0 0.0
    %1461 = vmatpush1.xpose.msra.mxu0 0.0
    %1462 = vmatprep.subr.mxu0 0.0
    %1463 = vmatpush1.xpose.msra.mxu0 0.0
    %1464 = vmatprep.subr.mxu0 0.0
    %1465 = vmatpush1.xpose.msra.mxu0 0.0
    %1466 = vmatprep.subr.mxu0 0.0
    %1467 = vmatpush1.xpose.msra.mxu0 0.0
    %1468 = vmatprep.subr.mxu0 0.0
    %1469 = vmatpush1.xpose.msra.mxu0 0.0
    %1470 = vmatprep.subr.mxu0 0.0
    %1471 = vmatpush1.xpose.msra.mxu0 0.0
    %1472 = vmatprep.subr.mxu0 0.0
    %1473 = vmatpush1.xpose.msra.mxu0 0.0
    %1474 = vmatprep.subr.mxu0 0.0
    %1475 = vmatpush1.xpose.msra.mxu0 0.0
    %1476 = vmatprep.subr.mxu0 0.0
    %1477 = vmatpush1.xpose.msra.mxu0 0.0
    %1478 = vmatprep.subr.mxu0 0.0
    %1479 = vmatpush1.xpose.msra.mxu0 0.0
    %1480 = vmatprep.subr.mxu0 0.0
    %1481 = vmatpush1.xpose.msra.mxu0 0.0
    %1482 = vmatprep.subr.mxu0 0.0
    %1483 = vmatpush1.xpose.msra.mxu0 0.0
    %1484 = vmatprep.subr.mxu0 0.0
    %1485 = vmatpush1.xpose.msra.mxu0 0.0
    %1486 = vmatprep.subr.mxu0 0.0
    %1487 = vmatpush1.xpose.msra.mxu0 0.0
    %1488 = vmatprep.subr.mxu0 0.0
    %1489 = vmatpush1.xpose.msra.mxu0 0.0
    %1490 = vmatprep.subr.mxu0 0.0
    %1491 = vmatpush1.xpose.msra.mxu0 0.0
    %1492 = vmatprep.subr.mxu0 0.0
    %1493 = vmatpush1.xpose.msra.mxu0 0.0
    %1494 = vmatprep.subr.mxu0 0.0
    %1495 = vmatpush1.xpose.msra.mxu0 0.0
    %1496 = vmatprep.subr.mxu0 0.0
    %1497 = vmatpush1.xpose.msra.mxu0 0.0
    %1498 = vmatprep.subr.mxu0 0.0
    %1499 = vmatpush1.xpose.msra.mxu0 0.0
    %1500 = vmatprep.subr.mxu0 0.0
    %1501 = vmatpush1.xpose.msra.mxu0 0.0
    %1502 = vmatprep.subr.mxu0 0.0
    %1503 = vmatpush1.xpose.msra.mxu0 0.0
    %1504 = vmatprep.subr.mxu0 0.0
    %1505 = vmatpush1.xpose.msra.mxu0 0.0
    %1506 = vmatprep.subr.mxu0 0.0
    %1507 = vmatpush1.xpose.msra.mxu0 0.0
    %1508 = vmatprep.subr.mxu0 0.0
    %1509 = vmatpush1.xpose.msra.mxu0 0.0
    %1510 = vmatprep.subr.mxu0 0.0
    %1511 = vmatpush1.xpose.msra.mxu0 0.0
    %1512 = vmatprep.subr.mxu0 0.0
    %1513 = vmatpush1.xpose.msra.mxu0 0.0
    %1514 = vmatprep.subr.mxu0 0.0
    %1515 = vmatpush1.xpose.msra.mxu0 0.0
    %1516 = vmatprep.subr.mxu0 0.0
    %1517 = vmatpush1.xpose.msra.mxu0 0.0
    %1518 = vmatprep.subr.mxu0 0.0
    %1519 = vmatpush1.xpose.msra.mxu0 0.0
    %1520 = vmatprep.mubr.f32.mxu0 0.0
    %1521 = vmatmul.mubr.f32.gmra.mrb[0].mxu0 %v1451
    %v1522 = vpop.f32.mrb[0].mxu0
    %v1523 = vadd.f32 0.0, %v1522
    %v1524 = vpop.f32.mrb[0].mxu0
    %1525 = vdwg.mxu0
    %v1527 = vsel %vm1145, %v550, 0
    %v1530 = vsel %vm1145, %v846, 0
    %1532 = vmatprep.subr.mxu0 0.0
    %1533 = vmatpush1.xpose.msra.mxu0 %v1530
    %1534 = vmatprep.subr.mxu0 0.0
    %1535 = vmatpush1.xpose.msra.mxu0 0.0
    %1536 = vmatprep.subr.mxu0 0.0
    %1537 = vmatpush1.xpose.msra.mxu0 0.0
    %1538 = vmatprep.subr.mxu0 0.0
    %1539 = vmatpush1.xpose.msra.mxu0 0.0
    %1540 = vmatprep.subr.mxu0 0.0
    %1541 = vmatpush1.xpose.msra.mxu0 0.0
    %1542 = vmatprep.subr.mxu0 0.0
    %1543 = vmatpush1.xpose.msra.mxu0 0.0
    %1544 = vmatprep.subr.mxu0 0.0
    %1545 = vmatpush1.xpose.msra.mxu0 0.0
    %1546 = vmatprep.subr.mxu0 0.0
    %1547 = vmatpush1.xpose.msra.mxu0 0.0
    %1548 = vmatprep.subr.mxu0 0.0
    %1549 = vmatpush1.xpose.msra.mxu0 0.0
    %1550 = vmatprep.subr.mxu0 0.0
    %1551 = vmatpush1.xpose.msra.mxu0 0.0
    %1552 = vmatprep.subr.mxu0 0.0
    %1553 = vmatpush1.xpose.msra.mxu0 0.0
    %1554 = vmatprep.subr.mxu0 0.0
    %1555 = vmatpush1.xpose.msra.mxu0 0.0
    %1556 = vmatprep.subr.mxu0 0.0
    %1557 = vmatpush1.xpose.msra.mxu0 0.0
    %1558 = vmatprep.subr.mxu0 0.0
    %1559 = vmatpush1.xpose.msra.mxu0 0.0
    %1560 = vmatprep.subr.mxu0 0.0
    %1561 = vmatpush1.xpose.msra.mxu0 0.0
    %1562 = vmatprep.subr.mxu0 0.0
    %1563 = vmatpush1.xpose.msra.mxu0 0.0
    %1564 = vmatprep.subr.mxu0 0.0
    %1565 = vmatpush1.xpose.msra.mxu0 0.0
    %1566 = vmatprep.subr.mxu0 0.0
    %1567 = vmatpush1.xpose.msra.mxu0 0.0
    %1568 = vmatprep.subr.mxu0 0.0
    %1569 = vmatpush1.xpose.msra.mxu0 0.0
    %1570 = vmatprep.subr.mxu0 0.0
    %1571 = vmatpush1.xpose.msra.mxu0 0.0
    %1572 = vmatprep.subr.mxu0 0.0
    %1573 = vmatpush1.xpose.msra.mxu0 0.0
    %1574 = vmatprep.subr.mxu0 0.0
    %1575 = vmatpush1.xpose.msra.mxu0 0.0
    %1576 = vmatprep.subr.mxu0 0.0
    %1577 = vmatpush1.xpose.msra.mxu0 0.0
    %1578 = vmatprep.subr.mxu0 0.0
    %1579 = vmatpush1.xpose.msra.mxu0 0.0
    %1580 = vmatprep.subr.mxu0 0.0
    %1581 = vmatpush1.xpose.msra.mxu0 0.0
    %1582 = vmatprep.subr.mxu0 0.0
    %1583 = vmatpush1.xpose.msra.mxu0 0.0
    %1584 = vmatprep.subr.mxu0 0.0
    %1585 = vmatpush1.xpose.msra.mxu0 0.0
    %1586 = vmatprep.subr.mxu0 0.0
    %1587 = vmatpush1.xpose.msra.mxu0 0.0
    %1588 = vmatprep.subr.mxu0 0.0
    %1589 = vmatpush1.xpose.msra.mxu0 0.0
    %1590 = vmatprep.subr.mxu0 0.0
    %1591 = vmatpush1.xpose.msra.mxu0 0.0
    %1592 = vmatprep.subr.mxu0 0.0
    %1593 = vmatpush1.xpose.msra.mxu0 0.0
    %1594 = vmatprep.subr.mxu0 0.0
    %1595 = vmatpush1.xpose.msra.mxu0 0.0
    %1596 = vmatprep.mubr.f32.mxu0 0.0
    %1597 = vmatmul.mubr.f32.gmra.mrb[0].mxu0 %v1527
    %v1598 = vpop.f32.mrb[0].mxu0
    %v1599 = vadd.f32 0.0, %v1598
    %v1600 = vpop.f32.mrb[0].mxu0
    %1601 = vdwg.mxu0
    %v1603 = vsel %vm1145, %v551, 0
    %v1606 = vsel %vm1145, %v847, 0
    %1608 = vmatprep.subr.mxu0 0.0
    %1609 = vmatpush1.xpose.msra.mxu0 %v1606
    %1610 = vmatprep.subr.mxu0 0.0
    %1611 = vmatpush1.xpose.msra.mxu0 0.0
    %1612 = vmatprep.subr.mxu0 0.0
    %1613 = vmatpush1.xpose.msra.mxu0 0.0
    %1614 = vmatprep.subr.mxu0 0.0
    %1615 = vmatpush1.xpose.msra.mxu0 0.0
    %1616 = vmatprep.subr.mxu0 0.0
    %1617 = vmatpush1.xpose.msra.mxu0 0.0
    %1618 = vmatprep.subr.mxu0 0.0
    %1619 = vmatpush1.xpose.msra.mxu0 0.0
    %1620 = vmatprep.subr.mxu0 0.0
    %1621 = vmatpush1.xpose.msra.mxu0 0.0
    %1622 = vmatprep.subr.mxu0 0.0
    %1623 = vmatpush1.xpose.msra.mxu0 0.0
    %1624 = vmatprep.subr.mxu0 0.0
    %1625 = vmatpush1.xpose.msra.mxu0 0.0
    %1626 = vmatprep.subr.mxu0 0.0
    %1627 = vmatpush1.xpose.msra.mxu0 0.0
    %1628 = vmatprep.subr.mxu0 0.0
    %1629 = vmatpush1.xpose.msra.mxu0 0.0
    %1630 = vmatprep.subr.mxu0 0.0
    %1631 = vmatpush1.xpose.msra.mxu0 0.0
    %1632 = vmatprep.subr.mxu0 0.0
    %1633 = vmatpush1.xpose.msra.mxu0 0.0
    %1634 = vmatprep.subr.mxu0 0.0
    %1635 = vmatpush1.xpose.msra.mxu0 0.0
    %1636 = vmatprep.subr.mxu0 0.0
    %1637 = vmatpush1.xpose.msra.mxu0 0.0
    %1638 = vmatprep.subr.mxu0 0.0
    %1639 = vmatpush1.xpose.msra.mxu0 0.0
    %1640 = vmatprep.subr.mxu0 0.0
    %1641 = vmatpush1.xpose.msra.mxu0 0.0
    %1642 = vmatprep.subr.mxu0 0.0
    %1643 = vmatpush1.xpose.msra.mxu0 0.0
    %1644 = vmatprep.subr.mxu0 0.0
    %1645 = vmatpush1.xpose.msra.mxu0 0.0
    %1646 = vmatprep.subr.mxu0 0.0
    %1647 = vmatpush1.xpose.msra.mxu0 0.0
    %1648 = vmatprep.subr.mxu0 0.0
    %1649 = vmatpush1.xpose.msra.mxu0 0.0
    %1650 = vmatprep.subr.mxu0 0.0
    %1651 = vmatpush1.xpose.msra.mxu0 0.0
    %1652 = vmatprep.subr.mxu0 0.0
    %1653 = vmatpush1.xpose.msra.mxu0 0.0
    %1654 = vmatprep.subr.mxu0 0.0
    %1655 = vmatpush1.xpose.msra.mxu0 0.0
    %1656 = vmatprep.subr.mxu0 0.0
    %1657 = vmatpush1.xpose.msra.mxu0 0.0
    %1658 = vmatprep.subr.mxu0 0.0
    %1659 = vmatpush1.xpose.msra.mxu0 0.0
    %1660 = vmatprep.subr.mxu0 0.0
    %1661 = vmatpush1.xpose.msra.mxu0 0.0
    %1662 = vmatprep.subr.mxu0 0.0
    %1663 = vmatpush1.xpose.msra.mxu0 0.0
    %1664 = vmatprep.subr.mxu0 0.0
    %1665 = vmatpush1.xpose.msra.mxu0 0.0
    %1666 = vmatprep.subr.mxu0 0.0
    %1667 = vmatpush1.xpose.msra.mxu0 0.0
    %1668 = vmatprep.subr.mxu0 0.0
    %1669 = vmatpush1.xpose.msra.mxu0 0.0
    %1670 = vmatprep.subr.mxu0 0.0
    %1671 = vmatpush1.xpose.msra.mxu0 0.0
    %1672 = vmatprep.mubr.f32.mxu0 0.0
    %1673 = vmatmul.mubr.f32.gmra.mrb[0].mxu0 %v1603
    %v1674 = vpop.f32.mrb[0].mxu0
    %v1675 = vadd.f32 0.0, %v1674
    %v1676 = vpop.f32.mrb[0].mxu0
    %1677 = vdwg.mxu0
    %v1679 = vsel %vm1145, %v552, 0
    %v1682 = vsel %vm1145, %v848, 0
    %1684 = vmatprep.subr.mxu0 0.0
    %1685 = vmatpush1.xpose.msra.mxu0 %v1682
    %1686 = vmatprep.subr.mxu0 0.0
    %1687 = vmatpush1.xpose.msra.mxu0 0.0
    %1688 = vmatprep.subr.mxu0 0.0
    %1689 = vmatpush1.xpose.msra.mxu0 0.0
    %1690 = vmatprep.subr.mxu0 0.0
    %1691 = vmatpush1.xpose.msra.mxu0 0.0
    %1692 = vmatprep.subr.mxu0 0.0
    %1693 = vmatpush1.xpose.msra.mxu0 0.0
    %1694 = vmatprep.subr.mxu0 0.0
    %1695 = vmatpush1.xpose.msra.mxu0 0.0
    %1696 = vmatprep.subr.mxu0 0.0
    %1697 = vmatpush1.xpose.msra.mxu0 0.0
    %1698 = vmatprep.subr.mxu0 0.0
    %1699 = vmatpush1.xpose.msra.mxu0 0.0
    %1700 = vmatprep.subr.mxu0 0.0
    %1701 = vmatpush1.xpose.msra.mxu0 0.0
    %1702 = vmatprep.subr.mxu0 0.0
    %1703 = vmatpush1.xpose.msra.mxu0 0.0
    %1704 = vmatprep.subr.mxu0 0.0
    %1705 = vmatpush1.xpose.msra.mxu0 0.0
    %1706 = vmatprep.subr.mxu0 0.0
    %1707 = vmatpush1.xpose.msra.mxu0 0.0
    %1708 = vmatprep.subr.mxu0 0.0
    %1709 = vmatpush1.xpose.msra.mxu0 0.0
    %1710 = vmatprep.subr.mxu0 0.0
    %1711 = vmatpush1.xpose.msra.mxu0 0.0
    %1712 = vmatprep.subr.mxu0 0.0
    %1713 = vmatpush1.xpose.msra.mxu0 0.0
    %1714 = vmatprep.subr.mxu0 0.0
    %1715 = vmatpush1.xpose.msra.mxu0 0.0
    %1716 = vmatprep.subr.mxu0 0.0
    %1717 = vmatpush1.xpose.msra.mxu0 0.0
    %1718 = vmatprep.subr.mxu0 0.0
    %1719 = vmatpush1.xpose.msra.mxu0 0.0
    %1720 = vmatprep.subr.mxu0 0.0
    %1721 = vmatpush1.xpose.msra.mxu0 0.0
    %1722 = vmatprep.subr.mxu0 0.0
    %1723 = vmatpush1.xpose.msra.mxu0 0.0
    %1724 = vmatprep.subr.mxu0 0.0
    %1725 = vmatpush1.xpose.msra.mxu0 0.0
    %1726 = vmatprep.subr.mxu0 0.0
    %1727 = vmatpush1.xpose.msra.mxu0 0.0
    %1728 = vmatprep.subr.mxu0 0.0
    %1729 = vmatpush1.xpose.msra.mxu0 0.0
    %1730 = vmatprep.subr.mxu0 0.0
    %1731 = vmatpush1.xpose.msra.mxu0 0.0
    %1732 = vmatprep.subr.mxu0 0.0
    %1733 = vmatpush1.xpose.msra.mxu0 0.0
    %1734 = vmatprep.subr.mxu0 0.0
    %1735 = vmatpush1.xpose.msra.mxu0 0.0
    %1736 = vmatprep.subr.mxu0 0.0
    %1737 = vmatpush1.xpose.msra.mxu0 0.0
    %1738 = vmatprep.subr.mxu0 0.0
    %1739 = vmatpush1.xpose.msra.mxu0 0.0
    %1740 = vmatprep.subr.mxu0 0.0
    %1741 = vmatpush1.xpose.msra.mxu0 0.0
    %1742 = vmatprep.subr.mxu0 0.0
    %1743 = vmatpush1.xpose.msra.mxu0 0.0
    %1744 = vmatprep.subr.mxu0 0.0
    %1745 = vmatpush1.xpose.msra.mxu0 0.0
    %1746 = vmatprep.subr.mxu0 0.0
    %1747 = vmatpush1.xpose.msra.mxu0 0.0
    %1748 = vmatprep.mubr.f32.mxu0 0.0
    %1749 = vmatmul.mubr.f32.gmra.mrb[0].mxu0 %v1679
    %v1750 = vpop.f32.mrb[0].mxu0
    %v1751 = vadd.f32 0.0, %v1750
    %v1752 = vpop.f32.mrb[0].mxu0
    %1753 = vdwg.mxu0
    %v1754 = vmul.f32 %v1219, 0.35355338
    %v1755 = vmul.f32 %v1295, 0.35355338
    %v1756 = vmul.f32 %v1371, 0.35355338
    %v1757 = vmul.f32 %v1447, 0.35355338
    %v1758 = vmul.f32 %v1523, 0.35355338
    %v1759 = vmul.f32 %v1599, 0.35355338
    %v1760 = vmul.f32 %v1675, 0.35355338
    %v1761 = vmul.f32 %v1751, 0.35355338
    %v1762 = vadd.f32 %v1754, %v146
    %v1763 = vadd.f32 %v1755, %v146
    %v1764 = vadd.f32 %v1756, %v146
    %v1765 = vadd.f32 %v1757, %v146
    %v1766 = vadd.f32 %v1758, %v146
    %v1767 = vadd.f32 %v1759, %v146
    %v1768 = vadd.f32 %v1760, %v146
    %v1769 = vadd.f32 %v1761, %v146
    %v1770 = vsel %vm1145, %v1762, -inf
    %1771 = vmax.xlane.f32.xlu0 %v1770
    %v1772 = vpop.xlane.xlu0 %1771
    %v1773 = vsel %vm1145, %v1763, -inf
    %1774 = vmax.xlane.f32.xlu0 %v1773
    %v1775 = vpop.xlane.xlu0 %1774
    %v1776 = vsel %vm1145, %v1764, -inf
    %1777 = vmax.xlane.f32.xlu0 %v1776
    %v1778 = vpop.xlane.xlu0 %1777
    %v1779 = vsel %vm1145, %v1765, -inf
    %1780 = vmax.xlane.f32.xlu0 %v1779
    %v1781 = vpop.xlane.xlu0 %1780
    %v1782 = vsel %vm1145, %v1766, -inf
    %1783 = vmax.xlane.f32.xlu0 %v1782
    %v1784 = vpop.xlane.xlu0 %1783
    %v1785 = vsel %vm1145, %v1767, -inf
    %1786 = vmax.xlane.f32.xlu0 %v1785
    %v1787 = vpop.xlane.xlu0 %1786
    %v1788 = vsel %vm1145, %v1768, -inf
    %1789 = vmax.xlane.f32.xlu0 %v1788
    %v1790 = vpop.xlane.xlu0 %1789
    %v1791 = vsel %vm1145, %v1769, -inf
    %1792 = vmax.xlane.f32.xlu0 %v1791
    %v1793 = vpop.xlane.xlu0 %1792
    %v1794 = vsub.f32 %v1762, %v1772
    %v1795 = vsub.f32 %v1763, %v1775
    %v1796 = vsub.f32 %v1764, %v1778
    %v1797 = vsub.f32 %v1765, %v1781
    %v1798 = vsub.f32 %v1766, %v1784
    %v1799 = vsub.f32 %v1767, %v1787
    %v1800 = vsub.f32 %v1768, %v1790
    %v1801 = vsub.f32 %v1769, %v1793
    %v1802 = vmul.f32 %v1794, 1.442695
    %v1803 = vpow.pop %v1802
    %v1804 = vmul.f32 %v1795, 1.442695
    %v1805 = vpow.pop %v1804
    %v1806 = vmul.f32 %v1796, 1.442695
    %v1807 = vpow.pop %v1806
    %v1808 = vmul.f32 %v1797, 1.442695
    %v1809 = vpow.pop %v1808
    %v1810 = vmul.f32 %v1798, 1.442695
    %v1811 = vpow.pop %v1810
    %v1812 = vmul.f32 %v1799, 1.442695
    %v1813 = vpow.pop %v1812
    %v1814 = vmul.f32 %v1800, 1.442695
    %v1815 = vpow.pop %v1814
    %v1816 = vmul.f32 %v1801, 1.442695
    %v1817 = vpow.pop %v1816
    %v1818 = vsel %vm1145, %v1803, 0.0
    %1819 = vadd.xlane.f32.xlu0 %v1818
    %v1820 = vpop.xlane.xlu0 %1819
    %v1821 = vsel %vm1145, %v1805, 0.0
    %1822 = vadd.xlane.f32.xlu0 %v1821
    %v1823 = vpop.xlane.xlu0 %1822
    %v1824 = vsel %vm1145, %v1807, 0.0
    %1825 = vadd.xlane.f32.xlu0 %v1824
    %v1826 = vpop.xlane.xlu0 %1825
    %v1827 = vsel %vm1145, %v1809, 0.0
    %1828 = vadd.xlane.f32.xlu0 %v1827
    %v1829 = vpop.xlane.xlu0 %1828
    %v1830 = vsel %vm1145, %v1811, 0.0
    %1831 = vadd.xlane.f32.xlu0 %v1830
    %v1832 = vpop.xlane.xlu0 %1831
    %v1833 = vsel %vm1145, %v1813, 0.0
    %1834 = vadd.xlane.f32.xlu0 %v1833
    %v1835 = vpop.xlane.xlu0 %1834
    %v1836 = vsel %vm1145, %v1815, 0.0
    %1837 = vadd.xlane.f32.xlu0 %v1836
    %v1838 = vpop.xlane.xlu0 %1837
    %v1839 = vsel %vm1145, %v1817, 0.0
    %1840 = vadd.xlane.f32.xlu0 %v1839
    %v1841 = vpop.xlane.xlu0 %1840
    %v1842 = vrcp.pop %v1820
    %v1843 = vrcp.pop %v1823
    %v1844 = vrcp.pop %v1826
    %v1845 = vrcp.pop %v1829
    %v1846 = vrcp.pop %v1832
    %v1847 = vrcp.pop %v1835
    %v1848 = vrcp.pop %v1838
    %v1849 = vrcp.pop %v1841
    %v1850 = vmul.f32 %v1803, %v1842
    %v1851 = vmul.f32 %v1805, %v1843
    %v1852 = vmul.f32 %v1807, %v1844
    %v1853 = vmul.f32 %v1809, %v1845
    %v1854 = vmul.f32 %v1811, %v1846
    %v1855 = vmul.f32 %v1813, %v1847
    %v1856 = vmul.f32 %v1815, %v1848
    %v1857 = vmul.f32 %v1817, %v1849
    %v1859 = vsel %vm1145, %v1850, 0
    %1861 = vmatprep.subr.mxu0 0.0
    %1862 = vmatpush1.msra.mxu0 %v1073
    %1863 = vmatprep.subr.mxu0 0.0
    %1864 = vmatpush1.msra.mxu0 0.0
    %1865 = vmatprep.subr.mxu0 0.0
    %1866 = vmatpush1.msra.mxu0 0.0
    %1867 = vmatprep.subr.mxu0 0.0
    %1868 = vmatpush1.msra.mxu0 0.0
    %1869 = vmatprep.subr.mxu0 0.0
    %1870 = vmatpush1.msra.mxu0 0.0
    %1871 = vmatprep.subr.mxu0 0.0
    %1872 = vmatpush1.msra.mxu0 0.0
    %1873 = vmatprep.subr.mxu0 0.0
    %1874 = vmatpush1.msra.mxu0 0.0
    %1875 = vmatprep.subr.mxu0 0.0
    %1876 = vmatpush1.msra.mxu0 0.0
    %1877 = vmatprep.subr.mxu0 0.0
    %1878 = vmatpush1.msra.mxu0 0.0
    %1879 = vmatprep.subr.mxu0 0.0
    %1880 = vmatpush1.msra.mxu0 0.0
    %1881 = vmatprep.subr.mxu0 0.0
    %1882 = vmatpush1.msra.mxu0 0.0
    %1883 = vmatprep.subr.mxu0 0.0
    %1884 = vmatpush1.msra.mxu0 0.0
    %1885 = vmatprep.subr.mxu0 0.0
    %1886 = vmatpush1.msra.mxu0 0.0
    %1887 = vmatprep.subr.mxu0 0.0
    %1888 = vmatpush1.msra.mxu0 0.0
    %1889 = vmatprep.subr.mxu0 0.0
    %1890 = vmatpush1.msra.mxu0 0.0
    %1891 = vmatprep.subr.mxu0 0.0
    %1892 = vmatpush1.msra.mxu0 0.0
    %1893 = vmatprep.subr.mxu0 0.0
    %1894 = vmatpush1.msra.mxu0 0.0
    %1895 = vmatprep.subr.mxu0 0.0
    %1896 = vmatpush1.msra.mxu0 0.0
    %1897 = vmatprep.subr.mxu0 0.0
    %1898 = vmatpush1.msra.mxu0 0.0
    %1899 = vmatprep.subr.mxu0 0.0
    %1900 = vmatpush1.msra.mxu0 0.0
    %1901 = vmatprep.subr.mxu0 0.0
    %1902 = vmatpush1.msra.mxu0 0.0
    %1903 = vmatprep.subr.mxu0 0.0
    %1904 = vmatpush1.msra.mxu0 0.0
    %1905 = vmatprep.subr.mxu0 0.0
    %1906 = vmatpush1.msra.mxu0 0.0
    %1907 = vmatprep.subr.mxu0 0.0
    %1908 = vmatpush1.msra.mxu0 0.0
    %1909 = vmatprep.subr.mxu0 0.0
    %1910 = vmatpush1.msra.mxu0 0.0
    %1911 = vmatprep.subr.mxu0 0.0
    %1912 = vmatpush1.msra.mxu0 0.0
    %1913 = vmatprep.subr.mxu0 0.0
    %1914 = vmatpush1.msra.mxu0 0.0
    %1915 = vmatprep.subr.mxu0 0.0
    %1916 = vmatpush1.msra.mxu0 0.0
    %1917 = vmatprep.subr.mxu0 0.0
    %1918 = vmatpush1.msra.mxu0 0.0
    %1919 = vmatprep.subr.mxu0 0.0
    %1920 = vmatpush1.msra.mxu0 0.0
    %1921 = vmatprep.subr.mxu0 0.0
    %1922 = vmatpush1.msra.mxu0 0.0
    %1923 = vmatprep.subr.mxu0 0.0
    %1924 = vmatpush1.msra.mxu0 0.0
    %1925 = vmatprep.mubr.f32.mxu0 0.0
    %1926 = vmatmul.mubr.f32.gmra.mrb[0].mxu0 %v1859
    %v1927 = vpop.f32.mrb[0].mxu0
    %v1928 = vadd.f32 0.0, %v1927
    %v1929 = vpop.f32.mrb[0].mxu0
    %1930 = vdwg.mxu0
    %v1932 = vsel %vm1145, %v1851, 0
    %1934 = vmatprep.subr.mxu0 0.0
    %1935 = vmatpush1.msra.mxu0 %v1074
    %1936 = vmatprep.subr.mxu0 0.0
    %1937 = vmatpush1.msra.mxu0 0.0
    %1938 = vmatprep.subr.mxu0 0.0
    %1939 = vmatpush1.msra.mxu0 0.0
    %1940 = vmatprep.subr.mxu0 0.0
    %1941 = vmatpush1.msra.mxu0 0.0
    %1942 = vmatprep.subr.mxu0 0.0
    %1943 = vmatpush1.msra.mxu0 0.0
    %1944 = vmatprep.subr.mxu0 0.0
    %1945 = vmatpush1.msra.mxu0 0.0
    %1946 = vmatprep.subr.mxu0 0.0
    %1947 = vmatpush1.msra.mxu0 0.0
    %1948 = vmatprep.subr.mxu0 0.0
    %1949 = vmatpush1.msra.mxu0 0.0
    %1950 = vmatprep.subr.mxu0 0.0
    %1951 = vmatpush1.msra.mxu0 0.0
    %1952 = vmatprep.subr.mxu0 0.0
    %1953 = vmatpush1.msra.mxu0 0.0
    %1954 = vmatprep.subr.mxu0 0.0
    %1955 = vmatpush1.msra.mxu0 0.0
    %1956 = vmatprep.subr.mxu0 0.0
    %1957 = vmatpush1.msra.mxu0 0.0
    %1958 = vmatprep.subr.mxu0 0.0
    %1959 = vmatpush1.msra.mxu0 0.0
    %1960 = vmatprep.subr.mxu0 0.0
    %1961 = vmatpush1.msra.mxu0 0.0
    %1962 = vmatprep.subr.mxu0 0.0
    %1963 = vmatpush1.msra.mxu0 0.0
    %1964 = vmatprep.subr.mxu0 0.0
    %1965 = vmatpush1.msra.mxu0 0.0
    %1966 = vmatprep.subr.mxu0 0.0
    %1967 = vmatpush1.msra.mxu0 0.0
    %1968 = vmatprep.subr.mxu0 0.0
    %1969 = vmatpush1.msra.mxu0 0.0
    %1970 = vmatprep.subr.mxu0 0.0
    %1971 = vmatpush1.msra.mxu0 0.0
    %1972 = vmatprep.subr.mxu0 0.0
    %1973 = vmatpush1.msra.mxu0 0.0
    %1974 = vmatprep.subr.mxu0 0.0
    %1975 = vmatpush1.msra.mxu0 0.0
    %1976 = vmatprep.subr.mxu0 0.0
    %1977 = vmatpush1.msra.mxu0 0.0
    %1978 = vmatprep.subr.mxu0 0.0
    %1979 = vmatpush1.msra.mxu0 0.0
    %1980 = vmatprep.subr.mxu0 0.0
    %1981 = vmatpush1.msra.mxu0 0.0
    %1982 = vmatprep.subr.mxu0 0.0
    %1983 = vmatpush1.msra.mxu0 0.0
    %1984 = vmatprep.subr.mxu0 0.0
    %1985 = vmatpush1.msra.mxu0 0.0
    %1986 = vmatprep.subr.mxu0 0.0
    %1987 = vmatpush1.msra.mxu0 0.0
    %1988 = vmatprep.subr.mxu0 0.0
    %1989 = vmatpush1.msra.mxu0 0.0
    %1990 = vmatprep.subr.mxu0 0.0
    %1991 = vmatpush1.msra.mxu0 0.0
    %1992 = vmatprep.subr.mxu0 0.0
    %1993 = vmatpush1.msra.mxu0 0.0
    %1994 = vmatprep.subr.mxu0 0.0
    %1995 = vmatpush1.msra.mxu0 0.0
    %1996 = vmatprep.subr.mxu0 0.0
    %1997 = vmatpush1.msra.mxu0 0.0
    %1998 = vmatprep.mubr.f32.mxu0 0.0
    %1999 = vmatmul.mubr.f32.gmra.mrb[0].mxu0 %v1932
    %v2000 = vpop.f32.mrb[0].mxu0
    %v2001 = vadd.f32 0.0, %v2000
    %v2002 = vpop.f32.mrb[0].mxu0
    %2003 = vdwg.mxu0
    %v2005 = vsel %vm1145, %v1852, 0
    %2007 = vmatprep.subr.mxu0 0.0
    %2008 = vmatpush1.msra.mxu0 %v1075
    %2009 = vmatprep.subr.mxu0 0.0
    %2010 = vmatpush1.msra.mxu0 0.0
    %2011 = vmatprep.subr.mxu0 0.0
    %2012 = vmatpush1.msra.mxu0 0.0
    %2013 = vmatprep.subr.mxu0 0.0
    %2014 = vmatpush1.msra.mxu0 0.0
    %2015 = vmatprep.subr.mxu0 0.0
    %2016 = vmatpush1.msra.mxu0 0.0
    %2017 = vmatprep.subr.mxu0 0.0
    %2018 = vmatpush1.msra.mxu0 0.0
    %2019 = vmatprep.subr.mxu0 0.0
    %2020 = vmatpush1.msra.mxu0 0.0
    %2021 = vmatprep.subr.mxu0 0.0
    %2022 = vmatpush1.msra.mxu0 0.0
    %2023 = vmatprep.subr.mxu0 0.0
    %2024 = vmatpush1.msra.mxu0 0.0
    %2025 = vmatprep.subr.mxu0 0.0
    %2026 = vmatpush1.msra.mxu0 0.0
    %2027 = vmatprep.subr.mxu0 0.0
    %2028 = vmatpush1.msra.mxu0 0.0
    %2029 = vmatprep.subr.mxu0 0.0
    %2030 = vmatpush1.msra.mxu0 0.0
    %2031 = vmatprep.subr.mxu0 0.0
    %2032 = vmatpush1.msra.mxu0 0.0
    %2033 = vmatprep.subr.mxu0 0.0
    %2034 = vmatpush1.msra.mxu0 0.0
    %2035 = vmatprep.subr.mxu0 0.0
    %2036 = vmatpush1.msra.mxu0 0.0
    %2037 = vmatprep.subr.mxu0 0.0
    %2038 = vmatpush1.msra.mxu0 0.0
    %2039 = vmatprep.subr.mxu0 0.0
    %2040 = vmatpush1.msra.mxu0 0.0
    %2041 = vmatprep.subr.mxu0 0.0
    %2042 = vmatpush1.msra.mxu0 0.0
    %2043 = vmatprep.subr.mxu0 0.0
    %2044 = vmatpush1.msra.mxu0 0.0
    %2045 = vmatprep.subr.mxu0 0.0
    %2046 = vmatpush1.msra.mxu0 0.0
    %2047 = vmatprep.subr.mxu0 0.0
    %2048 = vmatpush1.msra.mxu0 0.0
    %2049 = vmatprep.subr.mxu0 0.0
    %2050 = vmatpush1.msra.mxu0 0.0
    %2051 = vmatprep.subr.mxu0 0.0
    %2052 = vmatpush1.msra.mxu0 0.0
    %2053 = vmatprep.subr.mxu0 0.0
    %2054 = vmatpush1.msra.mxu0 0.0
    %2055 = vmatprep.subr.mxu0 0.0
    %2056 = vmatpush1.msra.mxu0 0.0
    %2057 = vmatprep.subr.mxu0 0.0
    %2058 = vmatpush1.msra.mxu0 0.0
    %2059 = vmatprep.subr.mxu0 0.0
    %2060 = vmatpush1.msra.mxu0 0.0
    %2061 = vmatprep.subr.mxu0 0.0
    %2062 = vmatpush1.msra.mxu0 0.0
    %2063 = vmatprep.subr.mxu0 0.0
    %2064 = vmatpush1.msra.mxu0 0.0
    %2065 = vmatprep.subr.mxu0 0.0
    %2066 = vmatpush1.msra.mxu0 0.0
    %2067 = vmatprep.subr.mxu0 0.0
    %2068 = vmatpush1.msra.mxu0 0.0
    %2069 = vmatprep.subr.mxu0 0.0
    %2070 = vmatpush1.msra.mxu0 0.0
    %2071 = vmatprep.mubr.f32.mxu0 0.0
    %2072 = vmatmul.mubr.f32.gmra.mrb[0].mxu0 %v2005
    %v2073 = vpop.f32.mrb[0].mxu0
    %v2074 = vadd.f32 0.0, %v2073
    %v2075 = vpop.f32.mrb[0].mxu0
    %2076 = vdwg.mxu0
    %v2078 = vsel %vm1145, %v1853, 0
    %2080 = vmatprep.subr.mxu0 0.0
    %2081 = vmatpush1.msra.mxu0 %v1076
    %2082 = vmatprep.subr.mxu0 0.0
    %2083 = vmatpush1.msra.mxu0 0.0
    %2084 = vmatprep.subr.mxu0 0.0
    %2085 = vmatpush1.msra.mxu0 0.0
    %2086 = vmatprep.subr.mxu0 0.0
    %2087 = vmatpush1.msra.mxu0 0.0
    %2088 = vmatprep.subr.mxu0 0.0
    %2089 = vmatpush1.msra.mxu0 0.0
    %2090 = vmatprep.subr.mxu0 0.0
    %2091 = vmatpush1.msra.mxu0 0.0
    %2092 = vmatprep.subr.mxu0 0.0
    %2093 = vmatpush1.msra.mxu0 0.0
    %2094 = vmatprep.subr.mxu0 0.0
    %2095 = vmatpush1.msra.mxu0 0.0
    %2096 = vmatprep.subr.mxu0 0.0
    %2097 = vmatpush1.msra.mxu0 0.0
    %2098 = vmatprep.subr.mxu0 0.0
    %2099 = vmatpush1.msra.mxu0 0.0
    %2100 = vmatprep.subr.mxu0 0.0
    %2101 = vmatpush1.msra.mxu0 0.0
    %2102 = vmatprep.subr.mxu0 0.0
    %2103 = vmatpush1.msra.mxu0 0.0
    %2104 = vmatprep.subr.mxu0 0.0
    %2105 = vmatpush1.msra.mxu0 0.0
    %2106 = vmatprep.subr.mxu0 0.0
    %2107 = vmatpush1.msra.mxu0 0.0
    %2108 = vmatprep.subr.mxu0 0.0
    %2109 = vmatpush1.msra.mxu0 0.0
    %2110 = vmatprep.subr.mxu0 0.0
    %2111 = vmatpush1.msra.mxu0 0.0
    %2112 = vmatprep.subr.mxu0 0.0
    %2113 = vmatpush1.msra.mxu0 0.0
    %2114 = vmatprep.subr.mxu0 0.0
    %2115 = vmatpush1.msra.mxu0 0.0
    %2116 = vmatprep.subr.mxu0 0.0
    %2117 = vmatpush1.msra.mxu0 0.0
    %2118 = vmatprep.subr.mxu0 0.0
    %2119 = vmatpush1.msra.mxu0 0.0
    %2120 = vmatprep.subr.mxu0 0.0
    %2121 = vmatpush1.msra.mxu0 0.0
    %2122 = vmatprep.subr.mxu0 0.0
    %2123 = vmatpush1.msra.mxu0 0.0
    %2124 = vmatprep.subr.mxu0 0.0
    %2125 = vmatpush1.msra.mxu0 0.0
    %2126 = vmatprep.subr.mxu0 0.0
    %2127 = vmatpush1.msra.mxu0 0.0
    %2128 = vmatprep.subr.mxu0 0.0
    %2129 = vmatpush1.msra.mxu0 0.0
    %2130 = vmatprep.subr.mxu0 0.0
    %2131 = vmatpush1.msra.mxu0 0.0
    %2132 = vmatprep.subr.mxu0 0.0
    %2133 = vmatpush1.msra.mxu0 0.0
    %2134 = vmatprep.subr.mxu0 0.0
    %2135 = vmatpush1.msra.mxu0 0.0
    %2136 = vmatprep.subr.mxu0 0.0
    %2137 = vmatpush1.msra.mxu0 0.0
    %2138 = vmatprep.subr.mxu0 0.0
    %2139 = vmatpush1.msra.mxu0 0.0
    %2140 = vmatprep.subr.mxu0 0.0
    %2141 = vmatpush1.msra.mxu0 0.0
    %2142 = vmatprep.subr.mxu0 0.0
    %2143 = vmatpush1.msra.mxu0 0.0
    %2144 = vmatprep.mubr.f32.mxu0 0.0
    %2145 = vmatmul.mubr.f32.gmra.mrb[0].mxu0 %v2078
    %v2146 = vpop.f32.mrb[0].mxu0
    %v2147 = vadd.f32 0.0, %v2146
    %v2148 = vpop.f32.mrb[0].mxu0
    %2149 = vdwg.mxu0
    %v2151 = vsel %vm1145, %v1854, 0
    %2153 = vmatprep.subr.mxu0 0.0
    %2154 = vmatpush1.msra.mxu0 %v1141
    %2155 = vmatprep.subr.mxu0 0.0
    %2156 = vmatpush1.msra.mxu0 0.0
    %2157 = vmatprep.subr.mxu0 0.0
    %2158 = vmatpush1.msra.mxu0 0.0
    %2159 = vmatprep.subr.mxu0 0.0
    %2160 = vmatpush1.msra.mxu0 0.0
    %2161 = vmatprep.subr.mxu0 0.0
    %2162 = vmatpush1.msra.mxu0 0.0
    %2163 = vmatprep.subr.mxu0 0.0
    %2164 = vmatpush1.msra.mxu0 0.0
    %2165 = vmatprep.subr.mxu0 0.0
    %2166 = vmatpush1.msra.mxu0 0.0
    %2167 = vmatprep.subr.mxu0 0.0
    %2168 = vmatpush1.msra.mxu0 0.0
    %2169 = vmatprep.subr.mxu0 0.0
    %2170 = vmatpush1.msra.mxu0 0.0
    %2171 = vmatprep.subr.mxu0 0.0
    %2172 = vmatpush1.msra.mxu0 0.0
    %2173 = vmatprep.subr.mxu0 0.0
    %2174 = vmatpush1.msra.mxu0 0.0
    %2175 = vmatprep.subr.mxu0 0.0
    %2176 = vmatpush1.msra.mxu0 0.0
    %2177 = vmatprep.subr.mxu0 0.0
    %2178 = vmatpush1.msra.mxu0 0.0
    %2179 = vmatprep.subr.mxu0 0.0
    %2180 = vmatpush1.msra.mxu0 0.0
    %2181 = vmatprep.subr.mxu0 0.0
    %2182 = vmatpush1.msra.mxu0 0.0
    %2183 = vmatprep.subr.mxu0 0.0
    %2184 = vmatpush1.msra.mxu0 0.0
    %2185 = vmatprep.subr.mxu0 0.0
    %2186 = vmatpush1.msra.mxu0 0.0
    %2187 = vmatprep.subr.mxu0 0.0
    %2188 = vmatpush1.msra.mxu0 0.0
    %2189 = vmatprep.subr.mxu0 0.0
    %2190 = vmatpush1.msra.mxu0 0.0
    %2191 = vmatprep.subr.mxu0 0.0
    %2192 = vmatpush1.msra.mxu0 0.0
    %2193 = vmatprep.subr.mxu0 0.0
    %2194 = vmatpush1.msra.mxu0 0.0
    %2195 = vmatprep.subr.mxu0 0.0
    %2196 = vmatpush1.msra.mxu0 0.0
    %2197 = vmatprep.subr.mxu0 0.0
    %2198 = vmatpush1.msra.mxu0 0.0
    %2199 = vmatprep.subr.mxu0 0.0
    %2200 = vmatpush1.msra.mxu0 0.0
    %2201 = vmatprep.subr.mxu0 0.0
    %2202 = vmatpush1.msra.mxu0 0.0
    %2203 = vmatprep.subr.mxu0 0.0
    %2204 = vmatpush1.msra.mxu0 0.0
    %2205 = vmatprep.subr.mxu0 0.0
    %2206 = vmatpush1.msra.mxu0 0.0
    %2207 = vmatprep.subr.mxu0 0.0
    %2208 = vmatpush1.msra.mxu0 0.0
    %2209 = vmatprep.subr.mxu0 0.0
    %2210 = vmatpush1.msra.mxu0 0.0
    %2211 = vmatprep.subr.mxu0 0.0
    %2212 = vmatpush1.msra.mxu0 0.0
    %2213 = vmatprep.subr.mxu0 0.0
    %2214 = vmatpush1.msra.mxu0 0.0
    %2215 = vmatprep.subr.mxu0 0.0
    %2216 = vmatpush1.msra.mxu0 0.0
    %2217 = vmatprep.mubr.f32.mxu0 0.0
    %2218 = vmatmul.mubr.f32.gmra.mrb[0].mxu0 %v2151
    %v2219 = vpop.f32.mrb[0].mxu0
    %v2220 = vadd.f32 0.0, %v2219
    %v2221 = vpop.f32.mrb[0].mxu0
    %2222 = vdwg.mxu0
    %v2224 = vsel %vm1145, %v1855, 0
    %2226 = vmatprep.subr.mxu0 0.0
    %2227 = vmatpush1.msra.mxu0 %v1142
    %2228 = vmatprep.subr.mxu0 0.0
    %2229 = vmatpush1.msra.mxu0 0.0
    %2230 = vmatprep.subr.mxu0 0.0
    %2231 = vmatpush1.msra.mxu0 0.0
    %2232 = vmatprep.subr.mxu0 0.0
    %2233 = vmatpush1.msra.mxu0 0.0
    %2234 = vmatprep.subr.mxu0 0.0
    %2235 = vmatpush1.msra.mxu0 0.0
    %2236 = vmatprep.subr.mxu0 0.0
    %2237 = vmatpush1.msra.mxu0 0.0
    %2238 = vmatprep.subr.mxu0 0.0
    %2239 = vmatpush1.msra.mxu0 0.0
    %2240 = vmatprep.subr.mxu0 0.0
    %2241 = vmatpush1.msra.mxu0 0.0
    %2242 = vmatprep.subr.mxu0 0.0
    %2243 = vmatpush1.msra.mxu0 0.0
    %2244 = vmatprep.subr.mxu0 0.0
    %2245 = vmatpush1.msra.mxu0 0.0
    %2246 = vmatprep.subr.mxu0 0.0
    %2247 = vmatpush1.msra.mxu0 0.0
    %2248 = vmatprep.subr.mxu0 0.0
    %2249 = vmatpush1.msra.mxu0 0.0
    %2250 = vmatprep.subr.mxu0 0.0
    %2251 = vmatpush1.msra.mxu0 0.0
    %2252 = vmatprep.subr.mxu0 0.0
    %2253 = vmatpush1.msra.mxu0 0.0
    %2254 = vmatprep.subr.mxu0 0.0
    %2255 = vmatpush1.msra.mxu0 0.0
    %2256 = vmatprep.subr.mxu0 0.0
    %2257 = vmatpush1.msra.mxu0 0.0
    %2258 = vmatprep.subr.mxu0 0.0
    %2259 = vmatpush1.msra.mxu0 0.0
    %2260 = vmatprep.subr.mxu0 0.0
    %2261 = vmatpush1.msra.mxu0 0.0
    %2262 = vmatprep.subr.mxu0 0.0
    %2263 = vmatpush1.msra.mxu0 0.0
    %2264 = vmatprep.subr.mxu0 0.0
    %2265 = vmatpush1.msra.mxu0 0.0
    %2266 = vmatprep.subr.mxu0 0.0
    %2267 = vmatpush1.msra.mxu0 0.0
    %2268 = vmatprep.subr.mxu0 0.0
    %2269 = vmatpush1.msra.mxu0 0.0
    %2270 = vmatprep.subr.mxu0 0.0
    %2271 = vmatpush1.msra.mxu0 0.0
    %2272 = vmatprep.subr.mxu0 0.0
    %2273 = vmatpush1.msra.mxu0 0.0
    %2274 = vmatprep.subr.mxu0 0.0
    %2275 = vmatpush1.msra.mxu0 0.0
    %2276 = vmatprep.subr.mxu0 0.0
    %2277 = vmatpush1.msra.mxu0 0.0
    %2278 = vmatprep.subr.mxu0 0.0
    %2279 = vmatpush1.msra.mxu0 0.0
    %2280 = vmatprep.subr.mxu0 0.0
    %2281 = vmatpush1.msra.mxu0 0.0
    %2282 = vmatprep.subr.mxu0 0.0
    %2283 = vmatpush1.msra.mxu0 0.0
    %2284 = vmatprep.subr.mxu0 0.0
    %2285 = vmatpush1.msra.mxu0 0.0
    %2286 = vmatprep.subr.mxu0 0.0
    %2287 = vmatpush1.msra.mxu0 0.0
    %2288 = vmatprep.subr.mxu0 0.0
    %2289 = vmatpush1.msra.mxu0 0.0
    %2290 = vmatprep.mubr.f32.mxu0 0.0
    %2291 = vmatmul.mubr.f32.gmra.mrb[0].mxu0 %v2224
    %v2292 = vpop.f32.mrb[0].mxu0
    %v2293 = vadd.f32 0.0, %v2292
    %v2294 = vpop.f32.mrb[0].mxu0
    %2295 = vdwg.mxu0
    %v2297 = vsel %vm1145, %v1856, 0
    %2299 = vmatprep.subr.mxu0 0.0
    %2300 = vmatpush1.msra.mxu0 %v1143
    %2301 = vmatprep.subr.mxu0 0.0
    %2302 = vmatpush1.msra.mxu0 0.0
    %2303 = vmatprep.subr.mxu0 0.0
    %2304 = vmatpush1.msra.mxu0 0.0
    %2305 = vmatprep.subr.mxu0 0.0
    %2306 = vmatpush1.msra.mxu0 0.0
    %2307 = vmatprep.subr.mxu0 0.0
    %2308 = vmatpush1.msra.mxu0 0.0
    %2309 = vmatprep.subr.mxu0 0.0
    %2310 = vmatpush1.msra.mxu0 0.0
    %2311 = vmatprep.subr.mxu0 0.0
    %2312 = vmatpush1.msra.mxu0 0.0
    %2313 = vmatprep.subr.mxu0 0.0
    %2314 = vmatpush1.msra.mxu0 0.0
    %2315 = vmatprep.subr.mxu0 0.0
    %2316 = vmatpush1.msra.mxu0 0.0
    %2317 = vmatprep.subr.mxu0 0.0
    %2318 = vmatpush1.msra.mxu0 0.0
    %2319 = vmatprep.subr.mxu0 0.0
    %2320 = vmatpush1.msra.mxu0 0.0
    %2321 = vmatprep.subr.mxu0 0.0
    %2322 = vmatpush1.msra.mxu0 0.0
    %2323 = vmatprep.subr.mxu0 0.0
    %2324 = vmatpush1.msra.mxu0 0.0
    %2325 = vmatprep.subr.mxu0 0.0
    %2326 = vmatpush1.msra.mxu0 0.0
    %2327 = vmatprep.subr.mxu0 0.0
    %2328 = vmatpush1.msra.mxu0 0.0
    %2329 = vmatprep.subr.mxu0 0.0
    %2330 = vmatpush1.msra.mxu0 0.0
    %2331 = vmatprep.subr.mxu0 0.0
    %2332 = vmatpush1.msra.mxu0 0.0
    %2333 = vmatprep.subr.mxu0 0.0
    %2334 = vmatpush1.msra.mxu0 0.0
    %2335 = vmatprep.subr.mxu0 0.0
    %2336 = vmatpush1.msra.mxu0 0.0
    %2337 = vmatprep.subr.mxu0 0.0
    %2338 = vmatpush1.msra.mxu0 0.0
    %2339 = vmatprep.subr.mxu0 0.0
    %2340 = vmatpush1.msra.mxu0 0.0
    %2341 = vmatprep.subr.mxu0 0.0
    %2342 = vmatpush1.msra.mxu0 0.0
    %2343 = vmatprep.subr.mxu0 0.0
    %2344 = vmatpush1.msra.mxu0 0.0
    %2345 = vmatprep.subr.mxu0 0.0
    %2346 = vmatpush1.msra.mxu0 0.0
    %2347 = vmatprep.subr.mxu0 0.0
    %2348 = vmatpush1.msra.mxu0 0.0
    %2349 = vmatprep.subr.mxu0 0.0
    %2350 = vmatpush1.msra.mxu0 0.0
    %2351 = vmatprep.subr.mxu0 0.0
    %2352 = vmatpush1.msra.mxu0 0.0
    %2353 = vmatprep.subr.mxu0 0.0
    %2354 = vmatpush1.msra.mxu0 0.0
    %2355 = vmatprep.subr.mxu0 0.0
    %2356 = vmatpush1.msra.mxu0 0.0
    %2357 = vmatprep.subr.mxu0 0.0
    %2358 = vmatpush1.msra.mxu0 0.0
    %2359 = vmatprep.subr.mxu0 0.0
    %2360 = vmatpush1.msra.mxu0 0.0
    %2361 = vmatprep.subr.mxu0 0.0
    %2362 = vmatpush1.msra.mxu0 0.0
    %2363 = vmatprep.mubr.f32.mxu0 0.0
    %2364 = vmatmul.mubr.f32.gmra.mrb[0].mxu0 %v2297
    %v2365 = vpop.f32.mrb[0].mxu0
    %v2366 = vadd.f32 0.0, %v2365
    %v2367 = vpop.f32.mrb[0].mxu0
    %2368 = vdwg.mxu0
    %v2370 = vsel %vm1145, %v1857, 0
    %2372 = vmatprep.subr.mxu0 0.0
    %2373 = vmatpush1.msra.mxu0 %v1144
    %2374 = vmatprep.subr.mxu0 0.0
    %2375 = vmatpush1.msra.mxu0 0.0
    %2376 = vmatprep.subr.mxu0 0.0
    %2377 = vmatpush1.msra.mxu0 0.0
    %2378 = vmatprep.subr.mxu0 0.0
    %2379 = vmatpush1.msra.mxu0 0.0
    %2380 = vmatprep.subr.mxu0 0.0
    %2381 = vmatpush1.msra.mxu0 0.0
    %2382 = vmatprep.subr.mxu0 0.0
    %2383 = vmatpush1.msra.mxu0 0.0
    %2384 = vmatprep.subr.mxu0 0.0
    %2385 = vmatpush1.msra.mxu0 0.0
    %2386 = vmatprep.subr.mxu0 0.0
    %2387 = vmatpush1.msra.mxu0 0.0
    %2388 = vmatprep.subr.mxu0 0.0
    %2389 = vmatpush1.msra.mxu0 0.0
    %2390 = vmatprep.subr.mxu0 0.0
    %2391 = vmatpush1.msra.mxu0 0.0
    %2392 = vmatprep.subr.mxu0 0.0
    %2393 = vmatpush1.msra.mxu0 0.0
    %2394 = vmatprep.subr.mxu0 0.0
    %2395 = vmatpush1.msra.mxu0 0.0
    %2396 = vmatprep.subr.mxu0 0.0
    %2397 = vmatpush1.msra.mxu0 0.0
    %2398 = vmatprep.subr.mxu0 0.0
    %2399 = vmatpush1.msra.mxu0 0.0
    %2400 = vmatprep.subr.mxu0 0.0
    %2401 = vmatpush1.msra.mxu0 0.0
    %2402 = vmatprep.subr.mxu0 0.0
    %2403 = vmatpush1.msra.mxu0 0.0
    %2404 = vmatprep.subr.mxu0 0.0
    %2405 = vmatpush1.msra.mxu0 0.0
    %2406 = vmatprep.subr.mxu0 0.0
    %2407 = vmatpush1.msra.mxu0 0.0
    %2408 = vmatprep.subr.mxu0 0.0
    %2409 = vmatpush1.msra.mxu0 0.0
    %2410 = vmatprep.subr.mxu0 0.0
    %2411 = vmatpush1.msra.mxu0 0.0
    %2412 = vmatprep.subr.mxu0 0.0
    %2413 = vmatpush1.msra.mxu0 0.0
    %2414 = vmatprep.subr.mxu0 0.0
    %2415 = vmatpush1.msra.mxu0 0.0
    %2416 = vmatprep.subr.mxu0 0.0
    %2417 = vmatpush1.msra.mxu0 0.0
    %2418 = vmatprep.subr.mxu0 0.0
    %2419 = vmatpush1.msra.mxu0 0.0
    %2420 = vmatprep.subr.mxu0 0.0
    %2421 = vmatpush1.msra.mxu0 0.0
    %2422 = vmatprep.subr.mxu0 0.0
    %2423 = vmatpush1.msra.mxu0 0.0
    %2424 = vmatprep.subr.mxu0 0.0
    %2425 = vmatpush1.msra.mxu0 0.0
    %2426 = vmatprep.subr.mxu0 0.0
    %2427 = vmatpush1.msra.mxu0 0.0
    %2428 = vmatprep.subr.mxu0 0.0
    %2429 = vmatpush1.msra.mxu0 0.0
    %2430 = vmatprep.subr.mxu0 0.0
    %2431 = vmatpush1.msra.mxu0 0.0
    %2432 = vmatprep.subr.mxu0 0.0
    %2433 = vmatpush1.msra.mxu0 0.0
    %2434 = vmatprep.subr.mxu0 0.0
    %2435 = vmatpush1.msra.mxu0 0.0
    %2436 = vmatprep.mubr.f32.mxu0 0.0
    %2437 = vmatmul.mubr.f32.gmra.mrb[0].mxu0 %v2370
    %v2438 = vpop.f32.mrb[0].mxu0
    %v2439 = vadd.f32 0.0, %v2438
    %v2440 = vpop.f32.mrb[0].mxu0
    %2441 = vdwg.mxu0
    %v2442 = vcombine.low %v1928, %v2074
    %v2443 = vcombine.high %v1928, %v2074
    %v2445 = vunpack.c.l.s4 1983009808
    %v2446 = vunpack.c.0.s8 %v2445
    %v2447 = vlaneseq
    %v2448 = vshrl.u32 %v2447, 7
    %v2449 = vsub.s32 %v2446, %v2448
    %v2450 = vrot.slane %v2442, %v2449
    %v2452 = vunpack.c.l.s4 1983009808
    %v2453 = vunpack.c.0.s8 %v2452
    %v2454 = vlaneseq
    %v2455 = vshrl.u32 %v2454, 7
    %v2456 = vsub.s32 %v2453, %v2455
    %v2457 = vrot.slane %v2443, %v2456
    %v2458 = vcombine.low %v2001, %v2147
    %v2459 = vcombine.high %v2001, %v2147
    %v2461 = vunpack.c.l.s4 1983009808
    %v2462 = vunpack.c.0.s8 %v2461
    %v2463 = vlaneseq
    %v2464 = vshrl.u32 %v2463, 7
    %v2465 = vsub.s32 %v2462, %v2464
    %v2466 = vrot.slane %v2458, %v2465
    %v2468 = vunpack.c.l.s4 1983009808
    %v2469 = vunpack.c.0.s8 %v2468
    %v2470 = vlaneseq
    %v2471 = vshrl.u32 %v2470, 7
    %v2472 = vsub.s32 %v2469, %v2471
    %v2473 = vrot.slane %v2459, %v2472
    %v2474 = vcombine.low %v2450, %v2466
    %v2475 = vcombine.high %v2450, %v2466
    %v2477 = vunpack.c.l.s4 1934713408
    %v2478 = vunpack.c.0.s8 %v2477
    %v2479 = vlaneseq
    %v2480 = vshrl.u32 %v2479, 7
    %v2481 = vsub.s32 %v2478, %v2480
    %v2482 = vrot.slane %v2474, %v2481
    %v2484 = vunpack.c.l.s4 1934713408
    %v2485 = vunpack.c.0.s8 %v2484
    %v2486 = vlaneseq
    %v2487 = vshrl.u32 %v2486, 7
    %v2488 = vsub.s32 %v2485, %v2487
    %v2489 = vrot.slane %v2475, %v2488
    %v2490 = vcombine.low %v2457, %v2473
    %v2491 = vcombine.high %v2457, %v2473
    %v2493 = vunpack.c.l.s4 1934713408
    %v2494 = vunpack.c.0.s8 %v2493
    %v2495 = vlaneseq
    %v2496 = vshrl.u32 %v2495, 7
    %v2497 = vsub.s32 %v2494, %v2496
    %v2498 = vrot.slane %v2490, %v2497
    %v2500 = vunpack.c.l.s4 1934713408
    %v2501 = vunpack.c.0.s8 %v2500
    %v2502 = vlaneseq
    %v2503 = vshrl.u32 %v2502, 7
    %v2504 = vsub.s32 %v2501, %v2503
    %v2505 = vrot.slane %v2491, %v2504
    %v2506 = vcombine.high %v2482, 0.0
    %v2507 = vcombine.high %v2489, 0.0
    %v2508 = vcombine.high %v2498, 0.0
    %v2509 = vcombine.high %v2505, 0.0
    %v2510 = vcombine.low %v2220, %v2366
    %v2511 = vcombine.high %v2220, %v2366
    %v2513 = vunpack.c.l.s4 1983009808
    %v2514 = vunpack.c.0.s8 %v2513
    %v2515 = vlaneseq
    %v2516 = vshrl.u32 %v2515, 7
    %v2517 = vsub.s32 %v2514, %v2516
    %v2518 = vrot.slane %v2510, %v2517
    %v2520 = vunpack.c.l.s4 1983009808
    %v2521 = vunpack.c.0.s8 %v2520
    %v2522 = vlaneseq
    %v2523 = vshrl.u32 %v2522, 7
    %v2524 = vsub.s32 %v2521, %v2523
    %v2525 = vrot.slane %v2511, %v2524
    %v2526 = vcombine.low %v2293, %v2439
    %v2527 = vcombine.high %v2293, %v2439
    %v2529 = vunpack.c.l.s4 1983009808
    %v2530 = vunpack.c.0.s8 %v2529
    %v2531 = vlaneseq
    %v2532 = vshrl.u32 %v2531, 7
    %v2533 = vsub.s32 %v2530, %v2532
    %v2534 = vrot.slane %v2526, %v2533
    %v2536 = vunpack.c.l.s4 1983009808
    %v2537 = vunpack.c.0.s8 %v2536
    %v2538 = vlaneseq
    %v2539 = vshrl.u32 %v2538, 7
    %v2540 = vsub.s32 %v2537, %v2539
    %v2541 = vrot.slane %v2527, %v2540
    %v2542 = vcombine.low %v2518, %v2534
    %v2543 = vcombine.high %v2518, %v2534
    %v2545 = vunpack.c.l.s4 1934713408
    %v2546 = vunpack.c.0.s8 %v2545
    %v2547 = vlaneseq
    %v2548 = vshrl.u32 %v2547, 7
    %v2549 = vsub.s32 %v2546, %v2548
    %v2550 = vrot.slane %v2542, %v2549
    %v2552 = vunpack.c.l.s4 1934713408
    %v2553 = vunpack.c.0.s8 %v2552
    %v2554 = vlaneseq
    %v2555 = vshrl.u32 %v2554, 7
    %v2556 = vsub.s32 %v2553, %v2555
    %v2557 = vrot.slane %v2543, %v2556
    %v2558 = vcombine.low %v2525, %v2541
    %v2559 = vcombine.high %v2525, %v2541
    %v2561 = vunpack.c.l.s4 1934713408
    %v2562 = vunpack.c.0.s8 %v2561
    %v2563 = vlaneseq
    %v2564 = vshrl.u32 %v2563, 7
    %v2565 = vsub.s32 %v2562, %v2564
    %v2566 = vrot.slane %v2558, %v2565
    %v2568 = vunpack.c.l.s4 1934713408
    %v2569 = vunpack.c.0.s8 %v2568
    %v2570 = vlaneseq
    %v2571 = vshrl.u32 %v2570, 7
    %v2572 = vsub.s32 %v2569, %v2571
    %v2573 = vrot.slane %v2559, %v2572
    %v2574 = vcombine.high %v2550, 0.0
    %v2575 = vcombine.high %v2557, 0.0
    %v2576 = vcombine.high %v2566, 0.0
    %v2577 = vcombine.high %v2573, 0.0
    %v2578 = vcombine.low %v2482, %v2489
    %v2580 = vunpack.c.l.s4 1983009808
    %v2581 = vunpack.c.0.s8 %v2580
    %v2582 = vlaneseq
    %v2583 = vshrl.u32 %v2582, 7
    %v2584 = vsub.s32 %v2581, %v2583
    %v2585 = vrot.slane %v2578, %v2584
    %v2586 = vcombine.low %v2506, %v2507
    %v2588 = vunpack.c.l.s4 1983009808
    %v2589 = vunpack.c.0.s8 %v2588
    %v2590 = vlaneseq
    %v2591 = vshrl.u32 %v2590, 7
    %v2592 = vsub.s32 %v2589, %v2591
    %v2593 = vrot.slane %v2586, %v2592
    %v2594 = vcombine.low %v2498, %v2505
    %v2596 = vunpack.c.l.s4 1983009808
    %v2597 = vunpack.c.0.s8 %v2596
    %v2598 = vlaneseq
    %v2599 = vshrl.u32 %v2598, 7
    %v2600 = vsub.s32 %v2597, %v2599
    %v2601 = vrot.slane %v2594, %v2600
    %v2602 = vcombine.low %v2508, %v2509
    %v2604 = vunpack.c.l.s4 1983009808
    %v2605 = vunpack.c.0.s8 %v2604
    %v2606 = vlaneseq
    %v2607 = vshrl.u32 %v2606, 7
    %v2608 = vsub.s32 %v2605, %v2607
    %v2609 = vrot.slane %v2602, %v2608
    %v2610 = vcombine.low %v2585, %v2593
    %v2611 = vcombine.high %v2585, %v2593
    %v2613 = vunpack.c.l.s4 1934713408
    %v2614 = vunpack.c.0.s8 %v2613
    %v2615 = vlaneseq
    %v2616 = vshrl.u32 %v2615, 7
    %v2617 = vsub.s32 %v2614, %v2616
    %v2618 = vrot.slane %v2610, %v2617
    %v2620 = vunpack.c.l.s4 1934713408
    %v2621 = vunpack.c.0.s8 %v2620
    %v2622 = vlaneseq
    %v2623 = vshrl.u32 %v2622, 7
    %v2624 = vsub.s32 %v2621, %v2623
    %v2625 = vrot.slane %v2611, %v2624
    %v2626 = vcombine.low %v2601, %v2609
    %v2627 = vcombine.high %v2601, %v2609
    %v2629 = vunpack.c.l.s4 1934713408
    %v2630 = vunpack.c.0.s8 %v2629
    %v2631 = vlaneseq
    %v2632 = vshrl.u32 %v2631, 7
    %v2633 = vsub.s32 %v2630, %v2632
    %v2634 = vrot.slane %v2626, %v2633
    %v2636 = vunpack.c.l.s4 1934713408
    %v2637 = vunpack.c.0.s8 %v2636
    %v2638 = vlaneseq
    %v2639 = vshrl.u32 %v2638, 7
    %v2640 = vsub.s32 %v2637, %v2639
    %v2641 = vrot.slane %v2627, %v2640
    %v2642 = vcombine.low %v2618, %v2634
    %v2643 = vcombine.high %v2618, %v2634
    %v2644 = vcombine.low %v2625, %v2641
    %v2645 = vcombine.high %v2625, %v2641
    %v2646 = vcombine.low %v2550, %v2557
    %v2648 = vunpack.c.l.s4 1983009808
    %v2649 = vunpack.c.0.s8 %v2648
    %v2650 = vlaneseq
    %v2651 = vshrl.u32 %v2650, 7
    %v2652 = vsub.s32 %v2649, %v2651
    %v2653 = vrot.slane %v2646, %v2652
    %v2654 = vcombine.low %v2574, %v2575
    %v2656 = vunpack.c.l.s4 1983009808
    %v2657 = vunpack.c.0.s8 %v2656
    %v2658 = vlaneseq
    %v2659 = vshrl.u32 %v2658, 7
    %v2660 = vsub.s32 %v2657, %v2659
    %v2661 = vrot.slane %v2654, %v2660
    %v2662 = vcombine.low %v2566, %v2573
    %v2664 = vunpack.c.l.s4 1983009808
    %v2665 = vunpack.c.0.s8 %v2664
    %v2666 = vlaneseq
    %v2667 = vshrl.u32 %v2666, 7
    %v2668 = vsub.s32 %v2665, %v2667
    %v2669 = vrot.slane %v2662, %v2668
    %v2670 = vcombine.low %v2576, %v2577
    %v2672 = vunpack.c.l.s4 1983009808
    %v2673 = vunpack.c.0.s8 %v2672
    %v2674 = vlaneseq
    %v2675 = vshrl.u32 %v2674, 7
    %v2676 = vsub.s32 %v2673, %v2675
    %v2677 = vrot.slane %v2670, %v2676
    %v2678 = vcombine.low %v2653, %v2661
    %v2679 = vcombine.high %v2653, %v2661
    %v2681 = vunpack.c.l.s4 1934713408
    %v2682 = vunpack.c.0.s8 %v2681
    %v2683 = vlaneseq
    %v2684 = vshrl.u32 %v2683, 7
    %v2685 = vsub.s32 %v2682, %v2684
    %v2686 = vrot.slane %v2678, %v2685
    %v2688 = vunpack.c.l.s4 1934713408
    %v2689 = vunpack.c.0.s8 %v2688
    %v2690 = vlaneseq
    %v2691 = vshrl.u32 %v2690, 7
    %v2692 = vsub.s32 %v2689, %v2691
    %v2693 = vrot.slane %v2679, %v2692
    %v2694 = vcombine.low %v2669, %v2677
    %v2695 = vcombine.high %v2669, %v2677
    %v2697 = vunpack.c.l.s4 1934713408
    %v2698 = vunpack.c.0.s8 %v2697
    %v2699 = vlaneseq
    %v2700 = vshrl.u32 %v2699, 7
    %v2701 = vsub.s32 %v2698, %v2700
    %v2702 = vrot.slane %v2694, %v2701
    %v2704 = vunpack.c.l.s4 1934713408
    %v2705 = vunpack.c.0.s8 %v2704
    %v2706 = vlaneseq
    %v2707 = vshrl.u32 %v2706, 7
    %v2708 = vsub.s32 %v2705, %v2707
    %v2709 = vrot.slane %v2695, %v2708
    %v2710 = vcombine.low %v2686, %v2702
    %v2711 = vcombine.high %v2686, %v2702
    %v2712 = vcombine.low %v2693, %v2709
    %v2713 = vcombine.high %v2693, %v2709
    %2716 = vrot.lane.b32.xlu0 %v2643, 8
    %v2717 = vpop.permute.xlu0 %2716
    %2718 = vrot.lane.b32.xlu0 %v2711, 8
    %v2719 = vpop.permute.xlu0 %2718
    %2724 = vrot.lane.b32.xlu0 %v2644, 16
    %v2725 = vpop.permute.xlu0 %2724
    %2726 = vrot.lane.b32.xlu0 %v2712, 16
    %v2727 = vpop.permute.xlu0 %2726
    %2732 = vrot.lane.b32.xlu0 %v2645, 24
    %v2733 = vpop.permute.xlu0 %2732
    %2734 = vrot.lane.b32.xlu0 %v2713, 24
    %v2735 = vpop.permute.xlu0 %2734
    %v2738 = vsel %vm1145, %v2642, %v2717
    %v2739 = vsel %vm1145, %v2710, %v2719
    %vm2740 = vcmask 130048
    %v2741 = vsel %vm2740, %v2738, %v2725
    %v2742 = vsel %vm2740, %v2739, %v2727
    %vm2743 = vcmask 195584
    %v2744 = vsel %vm2743, %v2741, %v2733
    %v2745 = vsel %vm2743, %v2742, %v2735
    %v2746 = vlaneseq
    %v2747 = vshrl.u32 %v2746, 7
    %v2748 = vsub.s32 0, %v2747
    %v2749 = vrot.slane %v168, %v2748
    %v2751 = vsel %vm179, %v2744, 0
    %v2754 = vsel %vm179, %v2745, 0
    %2756 = vmatprep.subr.mxu0 0.0
    %2757 = vmatpush1.msra.mxu0 %v151
    %2758 = vmatprep.subr.mxu0 0.0
    %2759 = vmatpush1.msra.mxu0 %v152
    %2760 = vmatprep.subr.mxu0 0.0
    %2761 = vmatpush1.msra.mxu0 %v153
    %2762 = vmatprep.subr.mxu0 0.0
    %2763 = vmatpush1.msra.mxu0 %v154
    %2764 = vmatprep.subr.mxu0 0.0
    %2765 = vmatpush1.msra.mxu0 0.0
    %2766 = vmatprep.subr.mxu0 0.0
    %2767 = vmatpush1.msra.mxu0 0.0
    %2768 = vmatprep.subr.mxu0 0.0
    %2769 = vmatpush1.msra.mxu0 0.0
    %2770 = vmatprep.subr.mxu0 0.0
    %2771 = vmatpush1.msra.mxu0 0.0
    %2772 = vmatprep.subr.mxu0 0.0
    %2773 = vmatpush1.msra.mxu0 0.0
    %2774 = vmatprep.subr.mxu0 0.0
    %2775 = vmatpush1.msra.mxu0 0.0
    %2776 = vmatprep.subr.mxu0 0.0
    %2777 = vmatpush1.msra.mxu0 0.0
    %2778 = vmatprep.subr.mxu0 0.0
    %2779 = vmatpush1.msra.mxu0 0.0
    %2780 = vmatprep.subr.mxu0 0.0
    %2781 = vmatpush1.msra.mxu0 0.0
    %2782 = vmatprep.subr.mxu0 0.0
    %2783 = vmatpush1.msra.mxu0 0.0
    %2784 = vmatprep.subr.mxu0 0.0
    %2785 = vmatpush1.msra.mxu0 0.0
    %2786 = vmatprep.subr.mxu0 0.0
    %2787 = vmatpush1.msra.mxu0 0.0
    %2788 = vmatprep.subr.mxu0 0.0
    %2789 = vmatpush1.msra.mxu0 0.0
    %2790 = vmatprep.subr.mxu0 0.0
    %2791 = vmatpush1.msra.mxu0 0.0
    %2792 = vmatprep.subr.mxu0 0.0
    %2793 = vmatpush1.msra.mxu0 0.0
    %2794 = vmatprep.subr.mxu0 0.0
    %2795 = vmatpush1.msra.mxu0 0.0
    %2796 = vmatprep.subr.mxu0 0.0
    %2797 = vmatpush1.msra.mxu0 0.0
    %2798 = vmatprep.subr.mxu0 0.0
    %2799 = vmatpush1.msra.mxu0 0.0
    %2800 = vmatprep.subr.mxu0 0.0
    %2801 = vmatpush1.msra.mxu0 0.0
    %2802 = vmatprep.subr.mxu0 0.0
    %2803 = vmatpush1.msra.mxu0 0.0
    %2804 = vmatprep.subr.mxu0 0.0
    %2805 = vmatpush1.msra.mxu0 0.0
    %2806 = vmatprep.subr.mxu0 0.0
    %2807 = vmatpush1.msra.mxu0 0.0
    %2808 = vmatprep.subr.mxu0 0.0
    %2809 = vmatpush1.msra.mxu0 0.0
    %2810 = vmatprep.subr.mxu0 0.0
    %2811 = vmatpush1.msra.mxu0 0.0
    %2812 = vmatprep.subr.mxu0 0.0
    %2813 = vmatpush1.msra.mxu0 0.0
    %2814 = vmatprep.subr.mxu0 0.0
    %2815 = vmatpush1.msra.mxu0 0.0
    %2816 = vmatprep.subr.mxu0 0.0
    %2817 = vmatpush1.msra.mxu0 0.0
    %2818 = vmatprep.subr.mxu0 0.0
    %2819 = vmatpush1.msra.mxu0 0.0
    %2820 = vmatprep.mubr.f32.mxu0 0.0
    %2821 = vmatmul.mubr.f32.gmra.mrb[0].mxu0 %v2751
    %v2822 = vpop.f32.mrb[0].mxu0
    %v2823 = vadd.f32 %v2749, %v2822
    %v2824 = vpop.f32.mrb[0].mxu0
    %2825 = vmatprep.mubr.f32.mxu0 0.0
    %2826 = vmatmul.mubr.f32.gmra.mrb[0].mxu0 %v2754
    %v2827 = vpop.f32.mrb[0].mxu0
    %v2828 = vadd.f32 %v2749, %v2827
    %v2829 = vpop.f32.mrb[0].mxu0
    %2830 = vdwg.mxu0
    %v2831 = vadd.f32 %v138, %v2823
    %v2832 = vadd.f32 %v143, %v2828
    %v2833 = vsel %vm179, %v2831, 0.0
    %2834 = vadd.xlane.f32.xlu0 %v2833
    %v2835 = vpop.xlane.xlu0 %2834
    %v2836 = vsel %vm179, %v2832, 0.0
    %2837 = vadd.xlane.f32.xlu0 %v2836
    %v2838 = vpop.xlane.xlu0 %2837
    %v2839 = vrcp.pop 32.0
    %v2840 = vmul.f32 %v2835, %v2839
    %v2841 = vmul.f32 %v2838, %v2839
    %v2842 = vsub.f32 %v2831, %v2840
    %v2843 = vsub.f32 %v2832, %v2841
    %v2844 = vmul.f32 %v2842, %v2842
    %v2845 = vmul.f32 %v2843, %v2843
    %v2846 = vsel %vm179, %v2844, 0.0
    %2847 = vadd.xlane.f32.xlu0 %v2846
    %v2848 = vpop.xlane.xlu0 %2847
    %v2849 = vsel %vm179, %v2845, 0.0
    %2850 = vadd.xlane.f32.xlu0 %v2849
    %v2851 = vpop.xlane.xlu0 %2850
    %v2852 = vmul.f32 %v2848, %v2839
    %v2853 = vmul.f32 %v2851, %v2839
    %v2854 = vadd.f32 %v2852, 1e-05
    %v2855 = vadd.f32 %v2853, 1e-05
    %v2856 = vrsqrt.pop %v2854
    %v2857 = vrsqrt.pop %v2855
    %v2858 = vmul.f32 %v2842, %v2856
    %v2859 = vmul.f32 %v2843, %v2857
    %v2860 = vlaneseq
    %v2861 = vshrl.u32 %v2860, 7
    %v2862 = vsub.s32 0, %v2861
    %v2863 = vrot.slane %v169, %v2862
    %v2864 = vmul.f32 %v2858, %v2863
    %v2865 = vmul.f32 %v2859, %v2863
    %v2866 = vlaneseq
    %v2867 = vshrl.u32 %v2866, 7
    %v2868 = vsub.s32 0, %v2867
    %v2869 = vrot.slane %v170, %v2868
    %v2870 = vadd.f32 %v2864, %v2869
    %v2871 = vadd.f32 %v2865, %v2869
    %v2872 = vlaneseq
    %v2873 = vshrl.u32 %v2872, 7
    %v2874 = vsub.s32 0, %v2873
    %v2875 = vrot.slane %v171, %v2874
    %v2877 = vsel %vm179, %v2870, 0
    %v2880 = vsel %vm179, %v2871, 0
    %2882 = vmatprep.subr.mxu0 0.0
    %2883 = vmatpush1.msra.mxu0 %v155
    %2884 = vmatprep.subr.mxu0 0.0
    %2885 = vmatpush1.msra.mxu0 %v156
    %2886 = vmatprep.subr.mxu0 0.0
    %2887 = vmatpush1.msra.mxu0 %v157
    %2888 = vmatprep.subr.mxu0 0.0
    %2889 = vmatpush1.msra.mxu0 %v158
    %2890 = vmatprep.subr.mxu0 0.0
    %2891 = vmatpush1.msra.mxu0 0.0
    %2892 = vmatprep.subr.mxu0 0.0
    %2893 = vmatpush1.msra.mxu0 0.0
    %2894 = vmatprep.subr.mxu0 0.0
    %2895 = vmatpush1.msra.mxu0 0.0
    %2896 = vmatprep.subr.mxu0 0.0
    %2897 = vmatpush1.msra.mxu0 0.0
    %2898 = vmatprep.subr.mxu0 0.0
    %2899 = vmatpush1.msra.mxu0 0.0
    %2900 = vmatprep.subr.mxu0 0.0
    %2901 = vmatpush1.msra.mxu0 0.0
    %2902 = vmatprep.subr.mxu0 0.0
    %2903 = vmatpush1.msra.mxu0 0.0
    %2904 = vmatprep.subr.mxu0 0.0
    %2905 = vmatpush1.msra.mxu0 0.0
    %2906 = vmatprep.subr.mxu0 0.0
    %2907 = vmatpush1.msra.mxu0 0.0
    %2908 = vmatprep.subr.mxu0 0.0
    %2909 = vmatpush1.msra.mxu0 0.0
    %2910 = vmatprep.subr.mxu0 0.0
    %2911 = vmatpush1.msra.mxu0 0.0
    %2912 = vmatprep.subr.mxu0 0.0
    %2913 = vmatpush1.msra.mxu0 0.0
    %2914 = vmatprep.subr.mxu0 0.0
    %2915 = vmatpush1.msra.mxu0 0.0
    %2916 = vmatprep.subr.mxu0 0.0
    %2917 = vmatpush1.msra.mxu0 0.0
    %2918 = vmatprep.subr.mxu0 0.0
    %2919 = vmatpush1.msra.mxu0 0.0
    %2920 = vmatprep.subr.mxu0 0.0
    %2921 = vmatpush1.msra.mxu0 0.0
    %2922 = vmatprep.subr.mxu0 0.0
    %2923 = vmatpush1.msra.mxu0 0.0
    %2924 = vmatprep.subr.mxu0 0.0
    %2925 = vmatpush1.msra.mxu0 0.0
    %2926 = vmatprep.subr.mxu0 0.0
    %2927 = vmatpush1.msra.mxu0 0.0
    %2928 = vmatprep.subr.mxu0 0.0
    %2929 = vmatpush1.msra.mxu0 0.0
    %2930 = vmatprep.subr.mxu0 0.0
    %2931 = vmatpush1.msra.mxu0 0.0
    %2932 = vmatprep.subr.mxu0 0.0
    %2933 = vmatpush1.msra.mxu0 0.0
    %2934 = vmatprep.subr.mxu0 0.0
    %2935 = vmatpush1.msra.mxu0 0.0
    %2936 = vmatprep.subr.mxu0 0.0
    %2937 = vmatpush1.msra.mxu0 0.0
    %2938 = vmatprep.subr.mxu0 0.0
    %2939 = vmatpush1.msra.mxu0 0.0
    %2940 = vmatprep.subr.mxu0 0.0
    %2941 = vmatpush1.msra.mxu0 0.0
    %2942 = vmatprep.subr.mxu0 0.0
    %2943 = vmatpush1.msra.mxu0 0.0
    %2944 = vmatprep.subr.mxu0 0.0
    %2945 = vmatpush1.msra.mxu0 0.0
    %2946 = vmatprep.mubr.f32.mxu0 0.0
    %2947 = vmatmul.mubr.f32.gmra.mrb[0].mxu0 %v2877
    %v2948 = vpop.f32.mrb[0].mxu0
    %v2949 = vadd.f32 %v2875, %v2948
    %v2950 = vpop.f32.mrb[0].mxu0
    %2951 = vmatprep.mubr.f32.mxu0 0.0
    %2952 = vmatmul.mubr.f32.gmra.mrb[0].mxu0 %v2880
    %v2953 = vpop.f32.mrb[0].mxu0
    %v2954 = vadd.f32 %v2875, %v2953
    %v2955 = vpop.f32.mrb[0].mxu0
    %2956 = vdwg.mxu0
    %v2957 = vmul.f32 %v2949, 0.5
    %v2958 = vmul.f32 %v2954, 0.5
    %v2959 = vmul.f32 %v2949, %v2949
    %v2960 = vmul.f32 %v2954, %v2954
    %v2961 = vmul.f32 %v2959, %v2949
    %v2962 = vmul.f32 %v2960, %v2954
    %v2963 = vmul.f32 %v2961, 0.044715
    %v2964 = vmul.f32 %v2962, 0.044715
    %v2965 = vadd.f32 %v2949, %v2963
    %v2966 = vadd.f32 %v2954, %v2964
    %v2967 = vmul.f32 %v2965, 0.7978846
    %v2968 = vmul.f32 %v2966, 0.7978846
    %v2969 = vtanh.pop %v2967
    %v2970 = vtanh.pop %v2968
    %v2971 = vadd.f32 %v2969, 1.0
    %v2972 = vadd.f32 %v2970, 1.0
    %v2973 = vmul.f32 %v2957, %v2971
    %v2974 = vmul.f32 %v2958, %v2972
    %v2975 = vlaneseq
    %v2976 = vshrl.u32 %v2975, 7
    %v2977 = vsub.s32 0, %v2976
    %v2978 = vrot.slane %v172, %v2977
    %vm2979 = vcmask 523264
    %v2981 = vsel %vm2979, %v2973, 0
    %v2984 = vsel %vm2979, %v2974, 0
    %2986 = vmatprep.subr.mxu0 0.0
    %2987 = vmatpush1.msra.mxu0 %v159
    %2988 = vmatprep.subr.mxu0 0.0
    %2989 = vmatpush1.msra.mxu0 %v160
    %2990 = vmatprep.subr.mxu0 0.0
    %2991 = vmatpush1.msra.mxu0 %v161
    %2992 = vmatprep.subr.mxu0 0.0
    %2993 = vmatpush1.msra.mxu0 %v162
    %2994 = vmatprep.subr.mxu0 0.0
    %2995 = vmatpush1.msra.mxu0 %v163
    %2996 = vmatprep.subr.mxu0 0.0
    %2997 = vmatpush1.msra.mxu0 %v164
    %2998 = vmatprep.subr.mxu0 0.0
    %2999 = vmatpush1.msra.mxu0 %v165
    %3000 = vmatprep.subr.mxu0 0.0
    %3001 = vmatpush1.msra.mxu0 %v166
    %3002 = vmatprep.subr.mxu0 0.0
    %3003 = vmatpush1.msra.mxu0 0.0
    %3004 = vmatprep.subr.mxu0 0.0
    %3005 = vmatpush1.msra.mxu0 0.0
    %3006 = vmatprep.subr.mxu0 0.0
    %3007 = vmatpush1.msra.mxu0 0.0
    %3008 = vmatprep.subr.mxu0 0.0
    %3009 = vmatpush1.msra.mxu0 0.0
    %3010 = vmatprep.subr.mxu0 0.0
    %3011 = vmatpush1.msra.mxu0 0.0
    %3012 = vmatprep.subr.mxu0 0.0
    %3013 = vmatpush1.msra.mxu0 0.0
    %3014 = vmatprep.subr.mxu0 0.0
    %3015 = vmatpush1.msra.mxu0 0.0
    %3016 = vmatprep.subr.mxu0 0.0
    %3017 = vmatpush1.msra.mxu0 0.0
    %3018 = vmatprep.subr.mxu0 0.0
    %3019 = vmatpush1.msra.mxu0 0.0
    %3020 = vmatprep.subr.mxu0 0.0
    %3021 = vmatpush1.msra.mxu0 0.0
    %3022 = vmatprep.subr.mxu0 0.0
    %3023 = vmatpush1.msra.mxu0 0.0
    %3024 = vmatprep.subr.mxu0 0.0
    %3025 = vmatpush1.msra.mxu0 0.0
    %3026 = vmatprep.subr.mxu0 0.0
    %3027 = vmatpush1.msra.mxu0 0.0
    %3028 = vmatprep.subr.mxu0 0.0
    %3029 = vmatpush1.msra.mxu0 0.0
    %3030 = vmatprep.subr.mxu0 0.0
    %3031 = vmatpush1.msra.mxu0 0.0
    %3032 = vmatprep.subr.mxu0 0.0
    %3033 = vmatpush1.msra.mxu0 0.0
    %3034 = vmatprep.subr.mxu0 0.0
    %3035 = vmatpush1.msra.mxu0 0.0
    %3036 = vmatprep.subr.mxu0 0.0
    %3037 = vmatpush1.msra.mxu0 0.0
    %3038 = vmatprep.subr.mxu0 0.0
    %3039 = vmatpush1.msra.mxu0 0.0
    %3040 = vmatprep.subr.mxu0 0.0
    %3041 = vmatpush1.msra.mxu0 0.0
    %3042 = vmatprep.subr.mxu0 0.0
    %3043 = vmatpush1.msra.mxu0 0.0
    %3044 = vmatprep.subr.mxu0 0.0
    %3045 = vmatpush1.msra.mxu0 0.0
    %3046 = vmatprep.subr.mxu0 0.0
    %3047 = vmatpush1.msra.mxu0 0.0
    %3048 = vmatprep.subr.mxu0 0.0
    %3049 = vmatpush1.msra.mxu0 0.0
    %3050 = vmatprep.mubr.f32.mxu0 0.0
    %3051 = vmatmul.mubr.f32.gmra.mrb[0].mxu0 %v2981
    %v3052 = vpop.f32.mrb[0].mxu0
    %v3053 = vadd.f32 %v2978, %v3052
    %v3054 = vpop.f32.mrb[0].mxu0
    %3055 = vmatprep.mubr.f32.mxu0 0.0
    %3056 = vmatmul.mubr.f32.gmra.mrb[0].mxu0 %v2984
    %v3057 = vpop.f32.mrb[0].mxu0
    %v3058 = vadd.f32 %v2978, %v3057
    %v3059 = vpop.f32.mrb[0].mxu0
    %3060 = vdwg.mxu0
    %v3061 = vadd.f32 %v2870, %v3053
    %v3062 = vadd.f32 %v2871, %v3058
    %v3063 = vsel %vm179, %v3061, 0.0
    %3064 = vadd.xlane.f32.xlu0 %v3063
    %v3065 = vpop.xlane.xlu0 %3064
    %v3066 = vsel %vm179, %v3062, 0.0
    %3067 = vadd.xlane.f32.xlu0 %v3066
    %v3068 = vpop.xlane.xlu0 %3067
    %v3069 = vmul.f32 %v3065, %v2839
    %v3070 = vmul.f32 %v3068, %v2839
    %v3071 = vsub.f32 %v3061, %v3069
    %v3072 = vsub.f32 %v3062, %v3070
    %v3073 = vmul.f32 %v3071, %v3071
    %v3074 = vmul.f32 %v3072, %v3072
    %v3075 = vsel %vm179, %v3073, 0.0
    %3076 = vadd.xlane.f32.xlu0 %v3075
    %v3077 = vpop.xlane.xlu0 %3076
    %v3078 = vsel %vm179, %v3074, 0.0
    %3079 = vadd.xlane.f32.xlu0 %v3078
    %v3080 = vpop.xlane.xlu0 %3079
    %v3081 = vmul.f32 %v3077, %v2839
    %v3082 = vmul.f32 %v3080, %v2839
    %v3083 = vadd.f32 %v3081, 1e-05
    %v3084 = vadd.f32 %v3082, 1e-05
    %v3085 = vrsqrt.pop %v3083
    %v3086 = vrsqrt.pop %v3084
    %v3087 = vmul.f32 %v3071, %v3085
    %v3088 = vmul.f32 %v3072, %v3086
    %v3089 = vlaneseq
    %v3090 = vshrl.u32 %v3089, 7
    %v3091 = vsub.s32 0, %v3090
    %v3092 = vrot.slane %v173, %v3091
    %v3093 = vmul.f32 %v3087, %v3092
    %v3094 = vmul.f32 %v3088, %v3092
    %v3095 = vlaneseq
    %v3096 = vshrl.u32 %v3095, 7
    %v3097 = vsub.s32 0, %v3096
    %v3098 = vrot.slane %v174, %v3097
    %v3099 = vadd.f32 %v3093, %v3098
    %v3100 = vadd.f32 %v3094, %v3098
    %v3101 = vld [vmem:[#allocation2 + $0xa0] sm:$0xff]
    %v3102 = vld [vmem:[#allocation2 + $0xa8] sm:$0xff]
    %v3103 = vld [vmem:[#allocation2 + $0xb0] sm:$0xff]
    %v3104 = vld [vmem:[#allocation2 + $0xb8] sm:$0xff]
    %v3105 = vld [vmem:[#allocation2 + $0xc0] sm:$0xff]
    %v3106 = vld [vmem:[#allocation2 + $0xc8] sm:$0xff]
    %v3107 = vld [vmem:[#allocation2 + $0xd0] sm:$0xff]
    %v3108 = vld [vmem:[#allocation2 + $0xd8] sm:$0xff]
    %v3109 = vld [vmem:[#allocation2 + $0xe0] sm:$0xff]
    %v3110 = vld [vmem:[#allocation2 + $0xe8] sm:$0xff]
    %v3111 = vld [vmem:[#allocation2 + $0xf0] sm:$0xff]
    %v3112 = vld [vmem:[#allocation2 + $0xf8] sm:$0xff]
    %v3113 = vld [vmem:[#allocation2 + $0x100] sm:$0xff]
    %v3114 = vld [vmem:[#allocation2 + $0x108] sm:$0xff]
    %v3115 = vld [vmem:[#allocation2 + $0x110] sm:$0xff]
    %v3116 = vld [vmem:[#allocation2 + $0x118] sm:$0xff]
    %v3117 = vld [vmem:[#allocation2 + $0x120] sm:$0xff]
    %v3118 = vld [vmem:[#allocation2 + $0x128] sm:$0xff]
    %v3119 = vld [vmem:[#allocation2 + $0x130] sm:$0xff]
    %v3120 = vld [vmem:[#allocation2 + $0x138] sm:$0xff]
    %v3121 = vld [vmem:[%s5 + $0x8] sm:$0x1]
    %v3122 = vld [vmem:[%s5 + $0x9] sm:$0x1]
    %v3123 = vld [vmem:[%s5 + $0xa] sm:$0x1]
    %v3124 = vld [vmem:[%s5 + $0xb] sm:$0x1]
    %v3125 = vld [vmem:[%s5 + $0xc] sm:$0x1]
    %v3126 = vld [vmem:[%s5 + $0xd] sm:$0x1]
    %v3127 = vld [vmem:[%s5 + $0xe] sm:$0x1]
    %v3128 = vld [vmem:[%s5 + $0xf] sm:$0x1]
    %v3129 = vlaneseq
    %v3130 = vshrl.u32 %v3129, 7
    %v3131 = vsub.s32 0, %v3130
    %v3132 = vrot.slane %v3121, %v3131
    %v3134 = vsel %vm179, %v3099, 0
    %v3137 = vsel %vm179, %v3100, 0
    %3139 = vmatprep.subr.mxu0 0.0
    %3140 = vmatpush1.msra.mxu0 %v3101
    %3141 = vmatprep.subr.mxu0 0.0
    %3142 = vmatpush1.msra.mxu0 %v3102
    %3143 = vmatprep.subr.mxu0 0.0
    %3144 = vmatpush1.msra.mxu0 %v3103
    %3145 = vmatprep.subr.mxu0 0.0
    %3146 = vmatpush1.msra.mxu0 %v3104
    %3147 = vmatprep.subr.mxu0 0.0
    %3148 = vmatpush1.msra.mxu0 0.0
    %3149 = vmatprep.subr.mxu0 0.0
    %3150 = vmatpush1.msra.mxu0 0.0
    %3151 = vmatprep.subr.mxu0 0.0
    %3152 = vmatpush1.msra.mxu0 0.0
    %3153 = vmatprep.subr.mxu0 0.0
    %3154 = vmatpush1.msra.mxu0 0.0
    %3155 = vmatprep.subr.mxu0 0.0
    %3156 = vmatpush1.msra.mxu0 0.0
    %3157 = vmatprep.subr.mxu0 0.0
    %3158 = vmatpush1.msra.mxu0 0.0
    %3159 = vmatprep.subr.mxu0 0.0
    %3160 = vmatpush1.msra.mxu0 0.0
    %3161 = vmatprep.subr.mxu0 0.0
    %3162 = vmatpush1.msra.mxu0 0.0
    %3163 = vmatprep.subr.mxu0 0.0
    %3164 = vmatpush1.msra.mxu0 0.0
    %3165 = vmatprep.subr.mxu0 0.0
    %3166 = vmatpush1.msra.mxu0 0.0
    %3167 = vmatprep.subr.mxu0 0.0
    %3168 = vmatpush1.msra.mxu0 0.0
    %3169 = vmatprep.subr.mxu0 0.0
    %3170 = vmatpush1.msra.mxu0 0.0
    %3171 = vmatprep.subr.mxu0 0.0
    %3172 = vmatpush1.msra.mxu0 0.0
    %3173 = vmatprep.subr.mxu0 0.0
    %3174 = vmatpush1.msra.mxu0 0.0
    %3175 = vmatprep.subr.mxu0 0.0
    %3176 = vmatpush1.msra.mxu0 0.0
    %3177 = vmatprep.subr.mxu0 0.0
    %3178 = vmatpush1.msra.mxu0 0.0
    %3179 = vmatprep.subr.mxu0 0.0
    %3180 = vmatpush1.msra.mxu0 0.0
    %3181 = vmatprep.subr.mxu0 0.0
    %3182 = vmatpush1.msra.mxu0 0.0
    %3183 = vmatprep.subr.mxu0 0.0
    %3184 = vmatpush1.msra.mxu0 0.0
    %3185 = vmatprep.subr.mxu0 0.0
    %3186 = vmatpush1.msra.mxu0 0.0
    %3187 = vmatprep.subr.mxu0 0.0
    %3188 = vmatpush1.msra.mxu0 0.0
    %3189 = vmatprep.subr.mxu0 0.0
    %3190 = vmatpush1.msra.mxu0 0.0
    %3191 = vmatprep.subr.mxu0 0.0
    %3192 = vmatpush1.msra.mxu0 0.0
    %3193 = vmatprep.subr.mxu0 0.0
    %3194 = vmatpush1.msra.mxu0 0.0
    %3195 = vmatprep.subr.mxu0 0.0
    %3196 = vmatpush1.msra.mxu0 0.0
    %3197 = vmatprep.subr.mxu0 0.0
    %3198 = vmatpush1.msra.mxu0 0.0
    %3199 = vmatprep.subr.mxu0 0.0
    %3200 = vmatpush1.msra.mxu0 0.0
    %3201 = vmatprep.subr.mxu0 0.0
    %3202 = vmatpush1.msra.mxu0 0.0
    %3203 = vmatprep.mubr.f32.mxu0 0.0
    %3204 = vmatmul.mubr.f32.gmra.mrb[0].mxu0 %v3134
    %v3205 = vpop.f32.mrb[0].mxu0
    %v3206 = vadd.f32 %v3132, %v3205
    %v3207 = vpop.f32.mrb[0].mxu0
    %3208 = vmatprep.mubr.f32.mxu0 0.0
    %3209 = vmatmul.mubr.f32.gmra.mrb[0].mxu0 %v3137
    %v3210 = vpop.f32.mrb[0].mxu0
    %v3211 = vadd.f32 %v3132, %v3210
    %v3212 = vpop.f32.mrb[0].mxu0
    %3213 = vdwg.mxu0
    %3216 = vrot.lane.b32.xlu0 %v3206, 120
    %v3217 = vpop.permute.xlu0 %3216
    %3218 = vrot.lane.b32.xlu0 %v3211, 120
    %v3219 = vpop.permute.xlu0 %3218
    %3222 = vrot.lane.b32.xlu0 %v3206, 112
    %v3223 = vpop.permute.xlu0 %3222
    %3224 = vrot.lane.b32.xlu0 %v3211, 112
    %v3225 = vpop.permute.xlu0 %3224
    %3228 = vrot.lane.b32.xlu0 %v3206, 104
    %v3229 = vpop.permute.xlu0 %3228
    %3230 = vrot.lane.b32.xlu0 %v3211, 104
    %v3231 = vpop.permute.xlu0 %3230
    %v3234 = vcombine.low %v3206, %v3223
    %v3235 = vcombine.high %v3206, %v3223
    %v3237 = vunpack.c.l.s4 1983009808
    %v3238 = vunpack.c.0.s8 %v3237
    %v3239 = vlaneseq
    %v3240 = vshrl.u32 %v3239, 7
    %v3241 = vsub.s32 %v3238, %v3240
    %v3242 = vrot.slane %v3234, %v3241
    %v3244 = vunpack.c.l.s4 1983009808
    %v3245 = vunpack.c.0.s8 %v3244
    %v3246 = vlaneseq
    %v3247 = vshrl.u32 %v3246, 7
    %v3248 = vsub.s32 %v3245, %v3247
    %v3249 = vrot.slane %v3235, %v3248
    %v3250 = vcombine.low %v3217, %v3229
    %v3251 = vcombine.high %v3217, %v3229
    %v3253 = vunpack.c.l.s4 1983009808
    %v3254 = vunpack.c.0.s8 %v3253
    %v3255 = vlaneseq
    %v3256 = vshrl.u32 %v3255, 7
    %v3257 = vsub.s32 %v3254, %v3256
    %v3258 = vrot.slane %v3250, %v3257
    %v3260 = vunpack.c.l.s4 1983009808
    %v3261 = vunpack.c.0.s8 %v3260
    %v3262 = vlaneseq
    %v3263 = vshrl.u32 %v3262, 7
    %v3264 = vsub.s32 %v3261, %v3263
    %v3265 = vrot.slane %v3251, %v3264
    %v3266 = vcombine.low %v3242, %v3258
    %v3267 = vcombine.high %v3242, %v3258
    %v3269 = vunpack.c.l.s4 1934713408
    %v3270 = vunpack.c.0.s8 %v3269
    %v3271 = vlaneseq
    %v3272 = vshrl.u32 %v3271, 7
    %v3273 = vsub.s32 %v3270, %v3272
    %v3274 = vrot.slane %v3266, %v3273
    %v3276 = vunpack.c.l.s4 1934713408
    %v3277 = vunpack.c.0.s8 %v3276
    %v3278 = vlaneseq
    %v3279 = vshrl.u32 %v3278, 7
    %v3280 = vsub.s32 %v3277, %v3279
    %v3281 = vrot.slane %v3267, %v3280
    %v3282 = vcombine.low %v3249, %v3265
    %v3283 = vcombine.high %v3249, %v3265
    %v3285 = vunpack.c.l.s4 1934713408
    %v3286 = vunpack.c.0.s8 %v3285
    %v3287 = vlaneseq
    %v3288 = vshrl.u32 %v3287, 7
    %v3289 = vsub.s32 %v3286, %v3288
    %v3290 = vrot.slane %v3282, %v3289
    %v3292 = vunpack.c.l.s4 1934713408
    %v3293 = vunpack.c.0.s8 %v3292
    %v3294 = vlaneseq
    %v3295 = vshrl.u32 %v3294, 7
    %v3296 = vsub.s32 %v3293, %v3295
    %v3297 = vrot.slane %v3283, %v3296
    %v3298 = vcombine.high %v3274, 0.0
    %v3299 = vcombine.high %v3281, 0.0
    %v3300 = vcombine.high %v3290, 0.0
    %v3301 = vcombine.high %v3297, 0.0
    %v3302 = vcombine.low %v3211, %v3225
    %v3303 = vcombine.high %v3211, %v3225
    %v3305 = vunpack.c.l.s4 1983009808
    %v3306 = vunpack.c.0.s8 %v3305
    %v3307 = vlaneseq
    %v3308 = vshrl.u32 %v3307, 7
    %v3309 = vsub.s32 %v3306, %v3308
    %v3310 = vrot.slane %v3302, %v3309
    %v3312 = vunpack.c.l.s4 1983009808
    %v3313 = vunpack.c.0.s8 %v3312
    %v3314 = vlaneseq
    %v3315 = vshrl.u32 %v3314, 7
    %v3316 = vsub.s32 %v3313, %v3315
    %v3317 = vrot.slane %v3303, %v3316
    %v3318 = vcombine.low %v3219, %v3231
    %v3319 = vcombine.high %v3219, %v3231
    %v3321 = vunpack.c.l.s4 1983009808
    %v3322 = vunpack.c.0.s8 %v3321
    %v3323 = vlaneseq
    %v3324 = vshrl.u32 %v3323, 7
    %v3325 = vsub.s32 %v3322, %v3324
    %v3326 = vrot.slane %v3318, %v3325
    %v3328 = vunpack.c.l.s4 1983009808
    %v3329 = vunpack.c.0.s8 %v3328
    %v3330 = vlaneseq
    %v3331 = vshrl.u32 %v3330, 7
    %v3332 = vsub.s32 %v3329, %v3331
    %v3333 = vrot.slane %v3319, %v3332
    %v3334 = vcombine.low %v3310, %v3326
    %v3335 = vcombine.high %v3310, %v3326
    %v3337 = vunpack.c.l.s4 1934713408
    %v3338 = vunpack.c.0.s8 %v3337
    %v3339 = vlaneseq
    %v3340 = vshrl.u32 %v3339, 7
    %v3341 = vsub.s32 %v3338, %v3340
    %v3342 = vrot.slane %v3334, %v3341
    %v3344 = vunpack.c.l.s4 1934713408
    %v3345 = vunpack.c.0.s8 %v3344
    %v3346 = vlaneseq
    %v3347 = vshrl.u32 %v3346, 7
    %v3348 = vsub.s32 %v3345, %v3347
    %v3349 = vrot.slane %v3335, %v3348
    %v3350 = vcombine.low %v3317, %v3333
    %v3351 = vcombine.high %v3317, %v3333
    %v3353 = vunpack.c.l.s4 1934713408
    %v3354 = vunpack.c.0.s8 %v3353
    %v3355 = vlaneseq
    %v3356 = vshrl.u32 %v3355, 7
    %v3357 = vsub.s32 %v3354, %v3356
    %v3358 = vrot.slane %v3350, %v3357
    %v3360 = vunpack.c.l.s4 1934713408
    %v3361 = vunpack.c.0.s8 %v3360
    %v3362 = vlaneseq
    %v3363 = vshrl.u32 %v3362, 7
    %v3364 = vsub.s32 %v3361, %v3363
    %v3365 = vrot.slane %v3351, %v3364
    %v3366 = vcombine.high %v3342, 0.0
    %v3367 = vcombine.high %v3349, 0.0
    %v3368 = vcombine.high %v3358, 0.0
    %v3369 = vcombine.high %v3365, 0.0
    %v3370 = vcombine.low %v3274, %v3281
    %v3372 = vunpack.c.l.s4 1983009808
    %v3373 = vunpack.c.0.s8 %v3372
    %v3374 = vlaneseq
    %v3375 = vshrl.u32 %v3374, 7
    %v3376 = vsub.s32 %v3373, %v3375
    %v3377 = vrot.slane %v3370, %v3376
    %v3378 = vcombine.low %v3298, %v3299
    %v3380 = vunpack.c.l.s4 1983009808
    %v3381 = vunpack.c.0.s8 %v3380
    %v3382 = vlaneseq
    %v3383 = vshrl.u32 %v3382, 7
    %v3384 = vsub.s32 %v3381, %v3383
    %v3385 = vrot.slane %v3378, %v3384
    %v3386 = vcombine.low %v3290, %v3297
    %v3388 = vunpack.c.l.s4 1983009808
    %v3389 = vunpack.c.0.s8 %v3388
    %v3390 = vlaneseq
    %v3391 = vshrl.u32 %v3390, 7
    %v3392 = vsub.s32 %v3389, %v3391
    %v3393 = vrot.slane %v3386, %v3392
    %v3394 = vcombine.low %v3300, %v3301
    %v3396 = vunpack.c.l.s4 1983009808
    %v3397 = vunpack.c.0.s8 %v3396
    %v3398 = vlaneseq
    %v3399 = vshrl.u32 %v3398, 7
    %v3400 = vsub.s32 %v3397, %v3399
    %v3401 = vrot.slane %v3394, %v3400
    %v3402 = vcombine.low %v3377, %v3385
    %v3403 = vcombine.high %v3377, %v3385
    %v3405 = vunpack.c.l.s4 1934713408
    %v3406 = vunpack.c.0.s8 %v3405
    %v3407 = vlaneseq
    %v3408 = vshrl.u32 %v3407, 7
    %v3409 = vsub.s32 %v3406, %v3408
    %v3410 = vrot.slane %v3402, %v3409
    %v3412 = vunpack.c.l.s4 1934713408
    %v3413 = vunpack.c.0.s8 %v3412
    %v3414 = vlaneseq
    %v3415 = vshrl.u32 %v3414, 7
    %v3416 = vsub.s32 %v3413, %v3415
    %v3417 = vrot.slane %v3403, %v3416
    %v3418 = vcombine.low %v3393, %v3401
    %v3419 = vcombine.high %v3393, %v3401
    %v3421 = vunpack.c.l.s4 1934713408
    %v3422 = vunpack.c.0.s8 %v3421
    %v3423 = vlaneseq
    %v3424 = vshrl.u32 %v3423, 7
    %v3425 = vsub.s32 %v3422, %v3424
    %v3426 = vrot.slane %v3418, %v3425
    %v3428 = vunpack.c.l.s4 1934713408
    %v3429 = vunpack.c.0.s8 %v3428
    %v3430 = vlaneseq
    %v3431 = vshrl.u32 %v3430, 7
    %v3432 = vsub.s32 %v3429, %v3431
    %v3433 = vrot.slane %v3419, %v3432
    %v3434 = vcombine.low %v3410, %v3426
    %v3435 = vcombine.high %v3410, %v3426
    %v3436 = vcombine.low %v3417, %v3433
    %v3437 = vcombine.high %v3417, %v3433
    %v3438 = vcombine.low %v3342, %v3349
    %v3440 = vunpack.c.l.s4 1983009808
    %v3441 = vunpack.c.0.s8 %v3440
    %v3442 = vlaneseq
    %v3443 = vshrl.u32 %v3442, 7
    %v3444 = vsub.s32 %v3441, %v3443
    %v3445 = vrot.slane %v3438, %v3444
    %v3446 = vcombine.low %v3366, %v3367
    %v3448 = vunpack.c.l.s4 1983009808
    %v3449 = vunpack.c.0.s8 %v3448
    %v3450 = vlaneseq
    %v3451 = vshrl.u32 %v3450, 7
    %v3452 = vsub.s32 %v3449, %v3451
    %v3453 = vrot.slane %v3446, %v3452
    %v3454 = vcombine.low %v3358, %v3365
    %v3456 = vunpack.c.l.s4 1983009808
    %v3457 = vunpack.c.0.s8 %v3456
    %v3458 = vlaneseq
    %v3459 = vshrl.u32 %v3458, 7
    %v3460 = vsub.s32 %v3457, %v3459
    %v3461 = vrot.slane %v3454, %v3460
    %v3462 = vcombine.low %v3368, %v3369
    %v3464 = vunpack.c.l.s4 1983009808
    %v3465 = vunpack.c.0.s8 %v3464
    %v3466 = vlaneseq
    %v3467 = vshrl.u32 %v3466, 7
    %v3468 = vsub.s32 %v3465, %v3467
    %v3469 = vrot.slane %v3462, %v3468
    %v3470 = vcombine.low %v3445, %v3453
    %v3471 = vcombine.high %v3445, %v3453
    %v3473 = vunpack.c.l.s4 1934713408
    %v3474 = vunpack.c.0.s8 %v3473
    %v3475 = vlaneseq
    %v3476 = vshrl.u32 %v3475, 7
    %v3477 = vsub.s32 %v3474, %v3476
    %v3478 = vrot.slane %v3470, %v3477
    %v3480 = vunpack.c.l.s4 1934713408
    %v3481 = vunpack.c.0.s8 %v3480
    %v3482 = vlaneseq
    %v3483 = vshrl.u32 %v3482, 7
    %v3484 = vsub.s32 %v3481, %v3483
    %v3485 = vrot.slane %v3471, %v3484
    %v3486 = vcombine.low %v3461, %v3469
    %v3487 = vcombine.high %v3461, %v3469
    %v3489 = vunpack.c.l.s4 1934713408
    %v3490 = vunpack.c.0.s8 %v3489
    %v3491 = vlaneseq
    %v3492 = vshrl.u32 %v3491, 7
    %v3493 = vsub.s32 %v3490, %v3492
    %v3494 = vrot.slane %v3486, %v3493
    %v3496 = vunpack.c.l.s4 1934713408
    %v3497 = vunpack.c.0.s8 %v3496
    %v3498 = vlaneseq
    %v3499 = vshrl.u32 %v3498, 7
    %v3500 = vsub.s32 %v3497, %v3499
    %v3501 = vrot.slane %v3487, %v3500
    %v3502 = vcombine.low %v3478, %v3494
    %v3503 = vcombine.high %v3478, %v3494
    %v3504 = vcombine.low %v3485, %v3501
    %v3505 = vcombine.high %v3485, %v3501
    %3506 = vrot.lane.b32.xlu0 %v3206, 96
    %v3507 = vpop.permute.xlu0 %3506
    %3508 = vrot.lane.b32.xlu0 %v3211, 96
    %v3509 = vpop.permute.xlu0 %3508
    %3510 = vrot.lane.b32.xlu0 %v3217, 96
    %v3511 = vpop.permute.xlu0 %3510
    %3512 = vrot.lane.b32.xlu0 %v3219, 96
    %v3513 = vpop.permute.xlu0 %3512
    %3514 = vrot.lane.b32.xlu0 %v3223, 96
    %v3515 = vpop.permute.xlu0 %3514
    %3516 = vrot.lane.b32.xlu0 %v3225, 96
    %v3517 = vpop.permute.xlu0 %3516
    %3518 = vrot.lane.b32.xlu0 %v3229, 96
    %v3519 = vpop.permute.xlu0 %3518
    %3520 = vrot.lane.b32.xlu0 %v3231, 96
    %v3521 = vpop.permute.xlu0 %3520
    %v3530 = vcombine.low %v3507, %v3515
    %v3531 = vcombine.high %v3507, %v3515
    %v3533 = vunpack.c.l.s4 1983009808
    %v3534 = vunpack.c.0.s8 %v3533
    %v3535 = vlaneseq
    %v3536 = vshrl.u32 %v3535, 7
    %v3537 = vsub.s32 %v3534, %v3536
    %v3538 = vrot.slane %v3530, %v3537
    %v3540 = vunpack.c.l.s4 1983009808
    %v3541 = vunpack.c.0.s8 %v3540
    %v3542 = vlaneseq
    %v3543 = vshrl.u32 %v3542, 7
    %v3544 = vsub.s32 %v3541, %v3543
    %v3545 = vrot.slane %v3531, %v3544
    %v3546 = vcombine.low %v3511, %v3519
    %v3547 = vcombine.high %v3511, %v3519
    %v3549 = vunpack.c.l.s4 1983009808
    %v3550 = vunpack.c.0.s8 %v3549
    %v3551 = vlaneseq
    %v3552 = vshrl.u32 %v3551, 7
    %v3553 = vsub.s32 %v3550, %v3552
    %v3554 = vrot.slane %v3546, %v3553
    %v3556 = vunpack.c.l.s4 1983009808
    %v3557 = vunpack.c.0.s8 %v3556
    %v3558 = vlaneseq
    %v3559 = vshrl.u32 %v3558, 7
    %v3560 = vsub.s32 %v3557, %v3559
    %v3561 = vrot.slane %v3547, %v3560
    %v3562 = vcombine.low %v3538, %v3554
    %v3563 = vcombine.high %v3538, %v3554
    %v3565 = vunpack.c.l.s4 1934713408
    %v3566 = vunpack.c.0.s8 %v3565
    %v3567 = vlaneseq
    %v3568 = vshrl.u32 %v3567, 7
    %v3569 = vsub.s32 %v3566, %v3568
    %v3570 = vrot.slane %v3562, %v3569
    %v3572 = vunpack.c.l.s4 1934713408
    %v3573 = vunpack.c.0.s8 %v3572
    %v3574 = vlaneseq
    %v3575 = vshrl.u32 %v3574, 7
    %v3576 = vsub.s32 %v3573, %v3575
    %v3577 = vrot.slane %v3563, %v3576
    %v3578 = vcombine.low %v3545, %v3561
    %v3579 = vcombine.high %v3545, %v3561
    %v3581 = vunpack.c.l.s4 1934713408
    %v3582 = vunpack.c.0.s8 %v3581
    %v3583 = vlaneseq
    %v3584 = vshrl.u32 %v3583, 7
    %v3585 = vsub.s32 %v3582, %v3584
    %v3586 = vrot.slane %v3578, %v3585
    %v3588 = vunpack.c.l.s4 1934713408
    %v3589 = vunpack.c.0.s8 %v3588
    %v3590 = vlaneseq
    %v3591 = vshrl.u32 %v3590, 7
    %v3592 = vsub.s32 %v3589, %v3591
    %v3593 = vrot.slane %v3579, %v3592
    %v3594 = vcombine.high %v3570, 0.0
    %v3595 = vcombine.high %v3577, 0.0
    %v3596 = vcombine.high %v3586, 0.0
    %v3597 = vcombine.high %v3593, 0.0
    %v3598 = vcombine.low %v3509, %v3517
    %v3599 = vcombine.high %v3509, %v3517
    %v3601 = vunpack.c.l.s4 1983009808
    %v3602 = vunpack.c.0.s8 %v3601
    %v3603 = vlaneseq
    %v3604 = vshrl.u32 %v3603, 7
    %v3605 = vsub.s32 %v3602, %v3604
    %v3606 = vrot.slane %v3598, %v3605
    %v3608 = vunpack.c.l.s4 1983009808
    %v3609 = vunpack.c.0.s8 %v3608
    %v3610 = vlaneseq
    %v3611 = vshrl.u32 %v3610, 7
    %v3612 = vsub.s32 %v3609, %v3611
    %v3613 = vrot.slane %v3599, %v3612
    %v3614 = vcombine.low %v3513, %v3521
    %v3615 = vcombine.high %v3513, %v3521
    %v3617 = vunpack.c.l.s4 1983009808
    %v3618 = vunpack.c.0.s8 %v3617
    %v3619 = vlaneseq
    %v3620 = vshrl.u32 %v3619, 7
    %v3621 = vsub.s32 %v3618, %v3620
    %v3622 = vrot.slane %v3614, %v3621
    %v3624 = vunpack.c.l.s4 1983009808
    %v3625 = vunpack.c.0.s8 %v3624
    %v3626 = vlaneseq
    %v3627 = vshrl.u32 %v3626, 7
    %v3628 = vsub.s32 %v3625, %v3627
    %v3629 = vrot.slane %v3615, %v3628
    %v3630 = vcombine.low %v3606, %v3622
    %v3631 = vcombine.high %v3606, %v3622
    %v3633 = vunpack.c.l.s4 1934713408
    %v3634 = vunpack.c.0.s8 %v3633
    %v3635 = vlaneseq
    %v3636 = vshrl.u32 %v3635, 7
    %v3637 = vsub.s32 %v3634, %v3636
    %v3638 = vrot.slane %v3630, %v3637
    %v3640 = vunpack.c.l.s4 1934713408
    %v3641 = vunpack.c.0.s8 %v3640
    %v3642 = vlaneseq
    %v3643 = vshrl.u32 %v3642, 7
    %v3644 = vsub.s32 %v3641, %v3643
    %v3645 = vrot.slane %v3631, %v3644
    %v3646 = vcombine.low %v3613, %v3629
    %v3647 = vcombine.high %v3613, %v3629
    %v3649 = vunpack.c.l.s4 1934713408
    %v3650 = vunpack.c.0.s8 %v3649
    %v3651 = vlaneseq
    %v3652 = vshrl.u32 %v3651, 7
    %v3653 = vsub.s32 %v3650, %v3652
    %v3654 = vrot.slane %v3646, %v3653
    %v3656 = vunpack.c.l.s4 1934713408
    %v3657 = vunpack.c.0.s8 %v3656
    %v3658 = vlaneseq
    %v3659 = vshrl.u32 %v3658, 7
    %v3660 = vsub.s32 %v3657, %v3659
    %v3661 = vrot.slane %v3647, %v3660
    %v3662 = vcombine.high %v3638, 0.0
    %v3663 = vcombine.high %v3645, 0.0
    %v3664 = vcombine.high %v3654, 0.0
    %v3665 = vcombine.high %v3661, 0.0
    %v3666 = vcombine.low %v3570, %v3577
    %v3668 = vunpack.c.l.s4 1983009808
    %v3669 = vunpack.c.0.s8 %v3668
    %v3670 = vlaneseq
    %v3671 = vshrl.u32 %v3670, 7
    %v3672 = vsub.s32 %v3669, %v3671
    %v3673 = vrot.slane %v3666, %v3672
    %v3674 = vcombine.low %v3594, %v3595
    %v3676 = vunpack.c.l.s4 1983009808
    %v3677 = vunpack.c.0.s8 %v3676
    %v3678 = vlaneseq
    %v3679 = vshrl.u32 %v3678, 7
    %v3680 = vsub.s32 %v3677, %v3679
    %v3681 = vrot.slane %v3674, %v3680
    %v3682 = vcombine.low %v3586, %v3593
    %v3684 = vunpack.c.l.s4 1983009808
    %v3685 = vunpack.c.0.s8 %v3684
    %v3686 = vlaneseq
    %v3687 = vshrl.u32 %v3686, 7
    %v3688 = vsub.s32 %v3685, %v3687
    %v3689 = vrot.slane %v3682, %v3688
    %v3690 = vcombine.low %v3596, %v3597
    %v3692 = vunpack.c.l.s4 1983009808
    %v3693 = vunpack.c.0.s8 %v3692
    %v3694 = vlaneseq
    %v3695 = vshrl.u32 %v3694, 7
    %v3696 = vsub.s32 %v3693, %v3695
    %v3697 = vrot.slane %v3690, %v3696
    %v3698 = vcombine.low %v3673, %v3681
    %v3699 = vcombine.high %v3673, %v3681
    %v3701 = vunpack.c.l.s4 1934713408
    %v3702 = vunpack.c.0.s8 %v3701
    %v3703 = vlaneseq
    %v3704 = vshrl.u32 %v3703, 7
    %v3705 = vsub.s32 %v3702, %v3704
    %v3706 = vrot.slane %v3698, %v3705
    %v3708 = vunpack.c.l.s4 1934713408
    %v3709 = vunpack.c.0.s8 %v3708
    %v3710 = vlaneseq
    %v3711 = vshrl.u32 %v3710, 7
    %v3712 = vsub.s32 %v3709, %v3711
    %v3713 = vrot.slane %v3699, %v3712
    %v3714 = vcombine.low %v3689, %v3697
    %v3715 = vcombine.high %v3689, %v3697
    %v3717 = vunpack.c.l.s4 1934713408
    %v3718 = vunpack.c.0.s8 %v3717
    %v3719 = vlaneseq
    %v3720 = vshrl.u32 %v3719, 7
    %v3721 = vsub.s32 %v3718, %v3720
    %v3722 = vrot.slane %v3714, %v3721
    %v3724 = vunpack.c.l.s4 1934713408
    %v3725 = vunpack.c.0.s8 %v3724
    %v3726 = vlaneseq
    %v3727 = vshrl.u32 %v3726, 7
    %v3728 = vsub.s32 %v3725, %v3727
    %v3729 = vrot.slane %v3715, %v3728
    %v3730 = vcombine.low %v3706, %v3722
    %v3731 = vcombine.high %v3706, %v3722
    %v3732 = vcombine.low %v3713, %v3729
    %v3733 = vcombine.high %v3713, %v3729
    %v3734 = vcombine.low %v3638, %v3645
    %v3736 = vunpack.c.l.s4 1983009808
    %v3737 = vunpack.c.0.s8 %v3736
    %v3738 = vlaneseq
    %v3739 = vshrl.u32 %v3738, 7
    %v3740 = vsub.s32 %v3737, %v3739
    %v3741 = vrot.slane %v3734, %v3740
    %v3742 = vcombine.low %v3662, %v3663
    %v3744 = vunpack.c.l.s4 1983009808
    %v3745 = vunpack.c.0.s8 %v3744
    %v3746 = vlaneseq
    %v3747 = vshrl.u32 %v3746, 7
    %v3748 = vsub.s32 %v3745, %v3747
    %v3749 = vrot.slane %v3742, %v3748
    %v3750 = vcombine.low %v3654, %v3661
    %v3752 = vunpack.c.l.s4 1983009808
    %v3753 = vunpack.c.0.s8 %v3752
    %v3754 = vlaneseq
    %v3755 = vshrl.u32 %v3754, 7
    %v3756 = vsub.s32 %v3753, %v3755
    %v3757 = vrot.slane %v3750, %v3756
    %v3758 = vcombine.low %v3664, %v3665
    %v3760 = vunpack.c.l.s4 1983009808
    %v3761 = vunpack.c.0.s8 %v3760
    %v3762 = vlaneseq
    %v3763 = vshrl.u32 %v3762, 7
    %v3764 = vsub.s32 %v3761, %v3763
    %v3765 = vrot.slane %v3758, %v3764
    %v3766 = vcombine.low %v3741, %v3749
    %v3767 = vcombine.high %v3741, %v3749
    %v3769 = vunpack.c.l.s4 1934713408
    %v3770 = vunpack.c.0.s8 %v3769
    %v3771 = vlaneseq
    %v3772 = vshrl.u32 %v3771, 7
    %v3773 = vsub.s32 %v3770, %v3772
    %v3774 = vrot.slane %v3766, %v3773
    %v3776 = vunpack.c.l.s4 1934713408
    %v3777 = vunpack.c.0.s8 %v3776
    %v3778 = vlaneseq
    %v3779 = vshrl.u32 %v3778, 7
    %v3780 = vsub.s32 %v3777, %v3779
    %v3781 = vrot.slane %v3767, %v3780
    %v3782 = vcombine.low %v3757, %v3765
    %v3783 = vcombine.high %v3757, %v3765
    %v3785 = vunpack.c.l.s4 1934713408
    %v3786 = vunpack.c.0.s8 %v3785
    %v3787 = vlaneseq
    %v3788 = vshrl.u32 %v3787, 7
    %v3789 = vsub.s32 %v3786, %v3788
    %v3790 = vrot.slane %v3782, %v3789
    %v3792 = vunpack.c.l.s4 1934713408
    %v3793 = vunpack.c.0.s8 %v3792
    %v3794 = vlaneseq
    %v3795 = vshrl.u32 %v3794, 7
    %v3796 = vsub.s32 %v3793, %v3795
    %v3797 = vrot.slane %v3783, %v3796
    %v3798 = vcombine.low %v3774, %v3790
    %v3799 = vcombine.high %v3774, %v3790
    %v3800 = vcombine.low %v3781, %v3797
    %v3801 = vcombine.high %v3781, %v3797
    %3802 = vrot.lane.b32.xlu0 %v3206, 64
    %v3803 = vpop.permute.xlu0 %3802
    %3804 = vrot.lane.b32.xlu0 %v3211, 64
    %v3805 = vpop.permute.xlu0 %3804
    %3806 = vrot.lane.b32.xlu0 %v3217, 64
    %v3807 = vpop.permute.xlu0 %3806
    %3808 = vrot.lane.b32.xlu0 %v3219, 64
    %v3809 = vpop.permute.xlu0 %3808
    %3810 = vrot.lane.b32.xlu0 %v3223, 64
    %v3811 = vpop.permute.xlu0 %3810
    %3812 = vrot.lane.b32.xlu0 %v3225, 64
    %v3813 = vpop.permute.xlu0 %3812
    %3814 = vrot.lane.b32.xlu0 %v3229, 64
    %v3815 = vpop.permute.xlu0 %3814
    %3816 = vrot.lane.b32.xlu0 %v3231, 64
    %v3817 = vpop.permute.xlu0 %3816
    %v3826 = vcombine.low %v3803, %v3811
    %v3827 = vcombine.high %v3803, %v3811
    %v3829 = vunpack.c.l.s4 1983009808
    %v3830 = vunpack.c.0.s8 %v3829
    %v3831 = vlaneseq
    %v3832 = vshrl.u32 %v3831, 7
    %v3833 = vsub.s32 %v3830, %v3832
    %v3834 = vrot.slane %v3826, %v3833
    %v3836 = vunpack.c.l.s4 1983009808
    %v3837 = vunpack.c.0.s8 %v3836
    %v3838 = vlaneseq
    %v3839 = vshrl.u32 %v3838, 7
    %v3840 = vsub.s32 %v3837, %v3839
    %v3841 = vrot.slane %v3827, %v3840
    %v3842 = vcombine.low %v3807, %v3815
    %v3843 = vcombine.high %v3807, %v3815
    %v3845 = vunpack.c.l.s4 1983009808
    %v3846 = vunpack.c.0.s8 %v3845
    %v3847 = vlaneseq
    %v3848 = vshrl.u32 %v3847, 7
    %v3849 = vsub.s32 %v3846, %v3848
    %v3850 = vrot.slane %v3842, %v3849
    %v3852 = vunpack.c.l.s4 1983009808
    %v3853 = vunpack.c.0.s8 %v3852
    %v3854 = vlaneseq
    %v3855 = vshrl.u32 %v3854, 7
    %v3856 = vsub.s32 %v3853, %v3855
    %v3857 = vrot.slane %v3843, %v3856
    %v3858 = vcombine.low %v3834, %v3850
    %v3859 = vcombine.high %v3834, %v3850
    %v3861 = vunpack.c.l.s4 1934713408
    %v3862 = vunpack.c.0.s8 %v3861
    %v3863 = vlaneseq
    %v3864 = vshrl.u32 %v3863, 7
    %v3865 = vsub.s32 %v3862, %v3864
    %v3866 = vrot.slane %v3858, %v3865
    %v3868 = vunpack.c.l.s4 1934713408
    %v3869 = vunpack.c.0.s8 %v3868
    %v3870 = vlaneseq
    %v3871 = vshrl.u32 %v3870, 7
    %v3872 = vsub.s32 %v3869, %v3871
    %v3873 = vrot.slane %v3859, %v3872
    %v3874 = vcombine.low %v3841, %v3857
    %v3875 = vcombine.high %v3841, %v3857
    %v3877 = vunpack.c.l.s4 1934713408
    %v3878 = vunpack.c.0.s8 %v3877
    %v3879 = vlaneseq
    %v3880 = vshrl.u32 %v3879, 7
    %v3881 = vsub.s32 %v3878, %v3880
    %v3882 = vrot.slane %v3874, %v3881
    %v3884 = vunpack.c.l.s4 1934713408
    %v3885 = vunpack.c.0.s8 %v3884
    %v3886 = vlaneseq
    %v3887 = vshrl.u32 %v3886, 7
    %v3888 = vsub.s32 %v3885, %v3887
    %v3889 = vrot.slane %v3875, %v3888
    %v3890 = vcombine.high %v3866, 0.0
    %v3891 = vcombine.high %v3873, 0.0
    %v3892 = vcombine.high %v3882, 0.0
    %v3893 = vcombine.high %v3889, 0.0
    %v3894 = vcombine.low %v3805, %v3813
    %v3895 = vcombine.high %v3805, %v3813
    %v3897 = vunpack.c.l.s4 1983009808
    %v3898 = vunpack.c.0.s8 %v3897
    %v3899 = vlaneseq
    %v3900 = vshrl.u32 %v3899, 7
    %v3901 = vsub.s32 %v3898, %v3900
    %v3902 = vrot.slane %v3894, %v3901
    %v3904 = vunpack.c.l.s4 1983009808
    %v3905 = vunpack.c.0.s8 %v3904
    %v3906 = vlaneseq
    %v3907 = vshrl.u32 %v3906, 7
    %v3908 = vsub.s32 %v3905, %v3907
    %v3909 = vrot.slane %v3895, %v3908
    %v3910 = vcombine.low %v3809, %v3817
    %v3911 = vcombine.high %v3809, %v3817
    %v3913 = vunpack.c.l.s4 1983009808
    %v3914 = vunpack.c.0.s8 %v3913
    %v3915 = vlaneseq
    %v3916 = vshrl.u32 %v3915, 7
    %v3917 = vsub.s32 %v3914, %v3916
    %v3918 = vrot.slane %v3910, %v3917
    %v3920 = vunpack.c.l.s4 1983009808
    %v3921 = vunpack.c.0.s8 %v3920
    %v3922 = vlaneseq
    %v3923 = vshrl.u32 %v3922, 7
    %v3924 = vsub.s32 %v3921, %v3923
    %v3925 = vrot.slane %v3911, %v3924
    %v3926 = vcombine.low %v3902, %v3918
    %v3927 = vcombine.high %v3902, %v3918
    %v3929 = vunpack.c.l.s4 1934713408
    %v3930 = vunpack.c.0.s8 %v3929
    %v3931 = vlaneseq
    %v3932 = vshrl.u32 %v3931, 7
    %v3933 = vsub.s32 %v3930, %v3932
    %v3934 = vrot.slane %v3926, %v3933
    %v3936 = vunpack.c.l.s4 1934713408
    %v3937 = vunpack.c.0.s8 %v3936
    %v3938 = vlaneseq
    %v3939 = vshrl.u32 %v3938, 7
    %v3940 = vsub.s32 %v3937, %v3939
    %v3941 = vrot.slane %v3927, %v3940
    %v3942 = vcombine.low %v3909, %v3925
    %v3943 = vcombine.high %v3909, %v3925
    %v3945 = vunpack.c.l.s4 1934713408
    %v3946 = vunpack.c.0.s8 %v3945
    %v3947 = vlaneseq
    %v3948 = vshrl.u32 %v3947, 7
    %v3949 = vsub.s32 %v3946, %v3948
    %v3950 = vrot.slane %v3942, %v3949
    %v3952 = vunpack.c.l.s4 1934713408
    %v3953 = vunpack.c.0.s8 %v3952
    %v3954 = vlaneseq
    %v3955 = vshrl.u32 %v3954, 7
    %v3956 = vsub.s32 %v3953, %v3955
    %v3957 = vrot.slane %v3943, %v3956
    %v3958 = vcombine.high %v3934, 0.0
    %v3959 = vcombine.high %v3941, 0.0
    %v3960 = vcombine.high %v3950, 0.0
    %v3961 = vcombine.high %v3957, 0.0
    %v3962 = vcombine.low %v3866, %v3873
    %v3964 = vunpack.c.l.s4 1983009808
    %v3965 = vunpack.c.0.s8 %v3964
    %v3966 = vlaneseq
    %v3967 = vshrl.u32 %v3966, 7
    %v3968 = vsub.s32 %v3965, %v3967
    %v3969 = vrot.slane %v3962, %v3968
    %v3970 = vcombine.low %v3890, %v3891
    %v3972 = vunpack.c.l.s4 1983009808
    %v3973 = vunpack.c.0.s8 %v3972
    %v3974 = vlaneseq
    %v3975 = vshrl.u32 %v3974, 7
    %v3976 = vsub.s32 %v3973, %v3975
    %v3977 = vrot.slane %v3970, %v3976
    %v3978 = vcombine.low %v3882, %v3889
    %v3980 = vunpack.c.l.s4 1983009808
    %v3981 = vunpack.c.0.s8 %v3980
    %v3982 = vlaneseq
    %v3983 = vshrl.u32 %v3982, 7
    %v3984 = vsub.s32 %v3981, %v3983
    %v3985 = vrot.slane %v3978, %v3984
    %v3986 = vcombine.low %v3892, %v3893
    %v3988 = vunpack.c.l.s4 1983009808
    %v3989 = vunpack.c.0.s8 %v3988
    %v3990 = vlaneseq
    %v3991 = vshrl.u32 %v3990, 7
    %v3992 = vsub.s32 %v3989, %v3991
    %v3993 = vrot.slane %v3986, %v3992
    %v3994 = vcombine.low %v3969, %v3977
    %v3995 = vcombine.high %v3969, %v3977
    %v3997 = vunpack.c.l.s4 1934713408
    %v3998 = vunpack.c.0.s8 %v3997
    %v3999 = vlaneseq
    %v4000 = vshrl.u32 %v3999, 7
    %v4001 = vsub.s32 %v3998, %v4000
    %v4002 = vrot.slane %v3994, %v4001
    %v4004 = vunpack.c.l.s4 1934713408
    %v4005 = vunpack.c.0.s8 %v4004
    %v4006 = vlaneseq
    %v4007 = vshrl.u32 %v4006, 7
    %v4008 = vsub.s32 %v4005, %v4007
    %v4009 = vrot.slane %v3995, %v4008
    %v4010 = vcombine.low %v3985, %v3993
    %v4011 = vcombine.high %v3985, %v3993
    %v4013 = vunpack.c.l.s4 1934713408
    %v4014 = vunpack.c.0.s8 %v4013
    %v4015 = vlaneseq
    %v4016 = vshrl.u32 %v4015, 7
    %v4017 = vsub.s32 %v4014, %v4016
    %v4018 = vrot.slane %v4010, %v4017
    %v4020 = vunpack.c.l.s4 1934713408
    %v4021 = vunpack.c.0.s8 %v4020
    %v4022 = vlaneseq
    %v4023 = vshrl.u32 %v4022, 7
    %v4024 = vsub.s32 %v4021, %v4023
    %v4025 = vrot.slane %v4011, %v4024
    %v4026 = vcombine.low %v4002, %v4018
    %v4027 = vcombine.high %v4002, %v4018
    %v4028 = vcombine.low %v4009, %v4025
    %v4029 = vcombine.high %v4009, %v4025
    %v4030 = vcombine.low %v3934, %v3941
    %v4032 = vunpack.c.l.s4 1983009808
    %v4033 = vunpack.c.0.s8 %v4032
    %v4034 = vlaneseq
    %v4035 = vshrl.u32 %v4034, 7
    %v4036 = vsub.s32 %v4033, %v4035
    %v4037 = vrot.slane %v4030, %v4036
    %v4038 = vcombine.low %v3958, %v3959
    %v4040 = vunpack.c.l.s4 1983009808
    %v4041 = vunpack.c.0.s8 %v4040
    %v4042 = vlaneseq
    %v4043 = vshrl.u32 %v4042, 7
    %v4044 = vsub.s32 %v4041, %v4043
    %v4045 = vrot.slane %v4038, %v4044
    %v4046 = vcombine.low %v3950, %v3957
    %v4048 = vunpack.c.l.s4 1983009808
    %v4049 = vunpack.c.0.s8 %v4048
    %v4050 = vlaneseq
    %v4051 = vshrl.u32 %v4050, 7
    %v4052 = vsub.s32 %v4049, %v4051
    %v4053 = vrot.slane %v4046, %v4052
    %v4054 = vcombine.low %v3960, %v3961
    %v4056 = vunpack.c.l.s4 1983009808
    %v4057 = vunpack.c.0.s8 %v4056
    %v4058 = vlaneseq
    %v4059 = vshrl.u32 %v4058, 7
    %v4060 = vsub.s32 %v4057, %v4059
    %v4061 = vrot.slane %v4054, %v4060
    %v4062 = vcombine.low %v4037, %v4045
    %v4063 = vcombine.high %v4037, %v4045
    %v4065 = vunpack.c.l.s4 1934713408
    %v4066 = vunpack.c.0.s8 %v4065
    %v4067 = vlaneseq
    %v4068 = vshrl.u32 %v4067, 7
    %v4069 = vsub.s32 %v4066, %v4068
    %v4070 = vrot.slane %v4062, %v4069
    %v4072 = vunpack.c.l.s4 1934713408
    %v4073 = vunpack.c.0.s8 %v4072
    %v4074 = vlaneseq
    %v4075 = vshrl.u32 %v4074, 7
    %v4076 = vsub.s32 %v4073, %v4075
    %v4077 = vrot.slane %v4063, %v4076
    %v4078 = vcombine.low %v4053, %v4061
    %v4079 = vcombine.high %v4053, %v4061
    %v4081 = vunpack.c.l.s4 1934713408
    %v4082 = vunpack.c.0.s8 %v4081
    %v4083 = vlaneseq
    %v4084 = vshrl.u32 %v4083, 7
    %v4085 = vsub.s32 %v4082, %v4084
    %v4086 = vrot.slane %v4078, %v4085
    %v4088 = vunpack.c.l.s4 1934713408
    %v4089 = vunpack.c.0.s8 %v4088
    %v4090 = vlaneseq
    %v4091 = vshrl.u32 %v4090, 7
    %v4092 = vsub.s32 %v4089, %v4091
    %v4093 = vrot.slane %v4079, %v4092
    %v4094 = vcombine.low %v4070, %v4086
    %v4095 = vcombine.high %v4070, %v4086
    %v4096 = vcombine.low %v4077, %v4093
    %v4097 = vcombine.high %v4077, %v4093
    %v4099 = vsel %vm1145, %v3434, 0
    %v4102 = vsel %vm1145, %v3730, 0
    %4104 = vmatprep.subr.mxu0 0.0
    %4105 = vmatpush1.xpose.msra.mxu0 %v4102
    %4106 = vmatprep.subr.mxu0 0.0
    %4107 = vmatpush1.xpose.msra.mxu0 0.0
    %4108 = vmatprep.subr.mxu0 0.0
    %4109 = vmatpush1.xpose.msra.mxu0 0.0
    %4110 = vmatprep.subr.mxu0 0.0
    %4111 = vmatpush1.xpose.msra.mxu0 0.0
    %4112 = vmatprep.subr.mxu0 0.0
    %4113 = vmatpush1.xpose.msra.mxu0 0.0
    %4114 = vmatprep.subr.mxu0 0.0
    %4115 = vmatpush1.xpose.msra.mxu0 0.0
    %4116 = vmatprep.subr.mxu0 0.0
    %4117 = vmatpush1.xpose.msra.mxu0 0.0
    %4118 = vmatprep.subr.mxu0 0.0
    %4119 = vmatpush1.xpose.msra.mxu0 0.0
    %4120 = vmatprep.subr.mxu0 0.0
    %4121 = vmatpush1.xpose.msra.mxu0 0.0
    %4122 = vmatprep.subr.mxu0 0.0
    %4123 = vmatpush1.xpose.msra.mxu0 0.0
    %4124 = vmatprep.subr.mxu0 0.0
    %4125 = vmatpush1.xpose.msra.mxu0 0.0
    %4126 = vmatprep.subr.mxu0 0.0
    %4127 = vmatpush1.xpose.msra.mxu0 0.0
    %4128 = vmatprep.subr.mxu0 0.0
    %4129 = vmatpush1.xpose.msra.mxu0 0.0
    %4130 = vmatprep.subr.mxu0 0.0
    %4131 = vmatpush1.xpose.msra.mxu0 0.0
    %4132 = vmatprep.subr.mxu0 0.0
    %4133 = vmatpush1.xpose.msra.mxu0 0.0
    %4134 = vmatprep.subr.mxu0 0.0
    %4135 = vmatpush1.xpose.msra.mxu0 0.0
    %4136 = vmatprep.subr.mxu0 0.0
    %4137 = vmatpush1.xpose.msra.mxu0 0.0
    %4138 = vmatprep.subr.mxu0 0.0
    %4139 = vmatpush1.xpose.msra.mxu0 0.0
    %4140 = vmatprep.subr.mxu0 0.0
    %4141 = vmatpush1.xpose.msra.mxu0 0.0
    %4142 = vmatprep.subr.mxu0 0.0
    %4143 = vmatpush1.xpose.msra.mxu0 0.0
    %4144 = vmatprep.subr.mxu0 0.0
    %4145 = vmatpush1.xpose.msra.mxu0 0.0
    %4146 = vmatprep.subr.mxu0 0.0
    %4147 = vmatpush1.xpose.msra.mxu0 0.0
    %4148 = vmatprep.subr.mxu0 0.0
    %4149 = vmatpush1.xpose.msra.mxu0 0.0
    %4150 = vmatprep.subr.mxu0 0.0
    %4151 = vmatpush1.xpose.msra.mxu0 0.0
    %4152 = vmatprep.subr.mxu0 0.0
    %4153 = vmatpush1.xpose.msra.mxu0 0.0
    %4154 = vmatprep.subr.mxu0 0.0
    %4155 = vmatpush1.xpose.msra.mxu0 0.0
    %4156 = vmatprep.subr.mxu0 0.0
    %4157 = vmatpush1.xpose.msra.mxu0 0.0
    %4158 = vmatprep.subr.mxu0 0.0
    %4159 = vmatpush1.xpose.msra.mxu0 0.0
    %4160 = vmatprep.subr.mxu0 0.0
    %4161 = vmatpush1.xpose.msra.mxu0 0.0
    %4162 = vmatprep.subr.mxu0 0.0
    %4163 = vmatpush1.xpose.msra.mxu0 0.0
    %4164 = vmatprep.subr.mxu0 0.0
    %4165 = vmatpush1.xpose.msra.mxu0 0.0
    %4166 = vmatprep.subr.mxu0 0.0
    %4167 = vmatpush1.xpose.msra.mxu0 0.0
    %4168 = vmatprep.mubr.f32.mxu0 0.0
    %4169 = vmatmul.mubr.f32.gmra.mrb[0].mxu0 %v4099
    %v4170 = vpop.f32.mrb[0].mxu0
    %v4171 = vadd.f32 0.0, %v4170
    %v4172 = vpop.f32.mrb[0].mxu0
    %4173 = vdwg.mxu0
    %v4175 = vsel %vm1145, %v3435, 0
    %v4178 = vsel %vm1145, %v3731, 0
    %4180 = vmatprep.subr.mxu0 0.0
    %4181 = vmatpush1.xpose.msra.mxu0 %v4178
    %4182 = vmatprep.subr.mxu0 0.0
    %4183 = vmatpush1.xpose.msra.mxu0 0.0
    %4184 = vmatprep.subr.mxu0 0.0
    %4185 = vmatpush1.xpose.msra.mxu0 0.0
    %4186 = vmatprep.subr.mxu0 0.0
    %4187 = vmatpush1.xpose.msra.mxu0 0.0
    %4188 = vmatprep.subr.mxu0 0.0
    %4189 = vmatpush1.xpose.msra.mxu0 0.0
    %4190 = vmatprep.subr.mxu0 0.0
    %4191 = vmatpush1.xpose.msra.mxu0 0.0
    %4192 = vmatprep.subr.mxu0 0.0
    %4193 = vmatpush1.xpose.msra.mxu0 0.0
    %4194 = vmatprep.subr.mxu0 0.0
    %4195 = vmatpush1.xpose.msra.mxu0 0.0
    %4196 = vmatprep.subr.mxu0 0.0
    %4197 = vmatpush1.xpose.msra.mxu0 0.0
    %4198 = vmatprep.subr.mxu0 0.0
    %4199 = vmatpush1.xpose.msra.mxu0 0.0
    %4200 = vmatprep.subr.mxu0 0.0
    %4201 = vmatpush1.xpose.msra.mxu0 0.0
    %4202 = vmatprep.subr.mxu0 0.0
    %4203 = vmatpush1.xpose.msra.mxu0 0.0
    %4204 = vmatprep.subr.mxu0 0.0
    %4205 = vmatpush1.xpose.msra.mxu0 0.0
    %4206 = vmatprep.subr.mxu0 0.0
    %4207 = vmatpush1.xpose.msra.mxu0 0.0
    %4208 = vmatprep.subr.mxu0 0.0
    %4209 = vmatpush1.xpose.msra.mxu0 0.0
    %4210 = vmatprep.subr.mxu0 0.0
    %4211 = vmatpush1.xpose.msra.mxu0 0.0
    %4212 = vmatprep.subr.mxu0 0.0
    %4213 = vmatpush1.xpose.msra.mxu0 0.0
    %4214 = vmatprep.subr.mxu0 0.0
    %4215 = vmatpush1.xpose.msra.mxu0 0.0
    %4216 = vmatprep.subr.mxu0 0.0
    %4217 = vmatpush1.xpose.msra.mxu0 0.0
    %4218 = vmatprep.subr.mxu0 0.0
    %4219 = vmatpush1.xpose.msra.mxu0 0.0
    %4220 = vmatprep.subr.mxu0 0.0
    %4221 = vmatpush1.xpose.msra.mxu0 0.0
    %4222 = vmatprep.subr.mxu0 0.0
    %4223 = vmatpush1.xpose.msra.mxu0 0.0
    %4224 = vmatprep.subr.mxu0 0.0
    %4225 = vmatpush1.xpose.msra.mxu0 0.0
    %4226 = vmatprep.subr.mxu0 0.0
    %4227 = vmatpush1.xpose.msra.mxu0 0.0
    %4228 = vmatprep.subr.mxu0 0.0
    %4229 = vmatpush1.xpose.msra.mxu0 0.0
    %4230 = vmatprep.subr.mxu0 0.0
    %4231 = vmatpush1.xpose.msra.mxu0 0.0
    %4232 = vmatprep.subr.mxu0 0.0
    %4233 = vmatpush1.xpose.msra.mxu0 0.0
    %4234 = vmatprep.subr.mxu0 0.0
    %4235 = vmatpush1.xpose.msra.mxu0 0.0
    %4236 = vmatprep.subr.mxu0 0.0
    %4237 = vmatpush1.xpose.msra.mxu0 0.0
    %4238 = vmatprep.subr.mxu0 0.0
    %4239 = vmatpush1.xpose.msra.mxu0 0.0
    %4240 = vmatprep.subr.mxu0 0.0
    %4241 = vmatpush1.xpose.msra.mxu0 0.0
    %4242 = vmatprep.subr.mxu0 0.0
    %4243 = vmatpush1.xpose.msra.mxu0 0.0
    %4244 = vmatprep.mubr.f32.mxu0 0.0
    %4245 = vmatmul.mubr.f32.gmra.mrb[0].mxu0 %v4175
    %v4246 = vpop.f32.mrb[0].mxu0
    %v4247 = vadd.f32 0.0, %v4246
    %v4248 = vpop.f32.mrb[0].mxu0
    %4249 = vdwg.mxu0
    %v4251 = vsel %vm1145, %v3436, 0
    %v4254 = vsel %vm1145, %v3732, 0
    %4256 = vmatprep.subr.mxu0 0.0
    %4257 = vmatpush1.xpose.msra.mxu0 %v4254
    %4258 = vmatprep.subr.mxu0 0.0
    %4259 = vmatpush1.xpose.msra.mxu0 0.0
    %4260 = vmatprep.subr.mxu0 0.0
    %4261 = vmatpush1.xpose.msra.mxu0 0.0
    %4262 = vmatprep.subr.mxu0 0.0
    %4263 = vmatpush1.xpose.msra.mxu0 0.0
    %4264 = vmatprep.subr.mxu0 0.0
    %4265 = vmatpush1.xpose.msra.mxu0 0.0
    %4266 = vmatprep.subr.mxu0 0.0
    %4267 = vmatpush1.xpose.msra.mxu0 0.0
    %4268 = vmatprep.subr.mxu0 0.0
    %4269 = vmatpush1.xpose.msra.mxu0 0.0
    %4270 = vmatprep.subr.mxu0 0.0
    %4271 = vmatpush1.xpose.msra.mxu0 0.0
    %4272 = vmatprep.subr.mxu0 0.0
    %4273 = vmatpush1.xpose.msra.mxu0 0.0
    %4274 = vmatprep.subr.mxu0 0.0
    %4275 = vmatpush1.xpose.msra.mxu0 0.0
    %4276 = vmatprep.subr.mxu0 0.0
    %4277 = vmatpush1.xpose.msra.mxu0 0.0
    %4278 = vmatprep.subr.mxu0 0.0
    %4279 = vmatpush1.xpose.msra.mxu0 0.0
    %4280 = vmatprep.subr.mxu0 0.0
    %4281 = vmatpush1.xpose.msra.mxu0 0.0
    %4282 = vmatprep.subr.mxu0 0.0
    %4283 = vmatpush1.xpose.msra.mxu0 0.0
    %4284 = vmatprep.subr.mxu0 0.0
    %4285 = vmatpush1.xpose.msra.mxu0 0.0
    %4286 = vmatprep.subr.mxu0 0.0
    %4287 = vmatpush1.xpose.msra.mxu0 0.0
    %4288 = vmatprep.subr.mxu0 0.0
    %4289 = vmatpush1.xpose.msra.mxu0 0.0
    %4290 = vmatprep.subr.mxu0 0.0
    %4291 = vmatpush1.xpose.msra.mxu0 0.0
    %4292 = vmatprep.subr.mxu0 0.0
    %4293 = vmatpush1.xpose.msra.mxu0 0.0
    %4294 = vmatprep.subr.mxu0 0.0
    %4295 = vmatpush1.xpose.msra.mxu0 0.0
    %4296 = vmatprep.subr.mxu0 0.0
    %4297 = vmatpush1.xpose.msra.mxu0 0.0
    %4298 = vmatprep.subr.mxu0 0.0
    %4299 = vmatpush1.xpose.msra.mxu0 0.0
    %4300 = vmatprep.subr.mxu0 0.0
    %4301 = vmatpush1.xpose.msra.mxu0 0.0
    %4302 = vmatprep.subr.mxu0 0.0
    %4303 = vmatpush1.xpose.msra.mxu0 0.0
    %4304 = vmatprep.subr.mxu0 0.0
    %4305 = vmatpush1.xpose.msra.mxu0 0.0
    %4306 = vmatprep.subr.mxu0 0.0
    %4307 = vmatpush1.xpose.msra.mxu0 0.0
    %4308 = vmatprep.subr.mxu0 0.0
    %4309 = vmatpush1.xpose.msra.mxu0 0.0
    %4310 = vmatprep.subr.mxu0 0.0
    %4311 = vmatpush1.xpose.msra.mxu0 0.0
    %4312 = vmatprep.subr.mxu0 0.0
    %4313 = vmatpush1.xpose.msra.mxu0 0.0
    %4314 = vmatprep.subr.mxu0 0.0
    %4315 = vmatpush1.xpose.msra.mxu0 0.0
    %4316 = vmatprep.subr.mxu0 0.0
    %4317 = vmatpush1.xpose.msra.mxu0 0.0
    %4318 = vmatprep.subr.mxu0 0.0
    %4319 = vmatpush1.xpose.msra.mxu0 0.0
    %4320 = vmatprep.mubr.f32.mxu0 0.0
    %4321 = vmatmul.mubr.f32.gmra.mrb[0].mxu0 %v4251
    %v4322 = vpop.f32.mrb[0].mxu0
    %v4323 = vadd.f32 0.0, %v4322
    %v4324 = vpop.f32.mrb[0].mxu0
    %4325 = vdwg.mxu0
    %v4327 = vsel %vm1145, %v3437, 0
    %v4330 = vsel %vm1145, %v3733, 0
    %4332 = vmatprep.subr.mxu0 0.0
    %4333 = vmatpush1.xpose.msra.mxu0 %v4330
    %4334 = vmatprep.subr.mxu0 0.0
    %4335 = vmatpush1.xpose.msra.mxu0 0.0
    %4336 = vmatprep.subr.mxu0 0.0
    %4337 = vmatpush1.xpose.msra.mxu0 0.0
    %4338 = vmatprep.subr.mxu0 0.0
    %4339 = vmatpush1.xpose.msra.mxu0 0.0
    %4340 = vmatprep.subr.mxu0 0.0
    %4341 = vmatpush1.xpose.msra.mxu0 0.0
    %4342 = vmatprep.subr.mxu0 0.0
    %4343 = vmatpush1.xpose.msra.mxu0 0.0
    %4344 = vmatprep.subr.mxu0 0.0
    %4345 = vmatpush1.xpose.msra.mxu0 0.0
    %4346 = vmatprep.subr.mxu0 0.0
    %4347 = vmatpush1.xpose.msra.mxu0 0.0
    %4348 = vmatprep.subr.mxu0 0.0
    %4349 = vmatpush1.xpose.msra.mxu0 0.0
    %4350 = vmatprep.subr.mxu0 0.0
    %4351 = vmatpush1.xpose.msra.mxu0 0.0
    %4352 = vmatprep.subr.mxu0 0.0
    %4353 = vmatpush1.xpose.msra.mxu0 0.0
    %4354 = vmatprep.subr.mxu0 0.0
    %4355 = vmatpush1.xpose.msra.mxu0 0.0
    %4356 = vmatprep.subr.mxu0 0.0
    %4357 = vmatpush1.xpose.msra.mxu0 0.0
    %4358 = vmatprep.subr.mxu0 0.0
    %4359 = vmatpush1.xpose.msra.mxu0 0.0
    %4360 = vmatprep.subr.mxu0 0.0
    %4361 = vmatpush1.xpose.msra.mxu0 0.0
    %4362 = vmatprep.subr.mxu0 0.0
    %4363 = vmatpush1.xpose.msra.mxu0 0.0
    %4364 = vmatprep.subr.mxu0 0.0
    %4365 = vmatpush1.xpose.msra.mxu0 0.0
    %4366 = vmatprep.subr.mxu0 0.0
    %4367 = vmatpush1.xpose.msra.mxu0 0.0
    %4368 = vmatprep.subr.mxu0 0.0
    %4369 = vmatpush1.xpose.msra.mxu0 0.0
    %4370 = vmatprep.subr.mxu0 0.0
    %4371 = vmatpush1.xpose.msra.mxu0 0.0
    %4372 = vmatprep.subr.mxu0 0.0
    %4373 = vmatpush1.xpose.msra.mxu0 0.0
    %4374 = vmatprep.subr.mxu0 0.0
    %4375 = vmatpush1.xpose.msra.mxu0 0.0
    %4376 = vmatprep.subr.mxu0 0.0
    %4377 = vmatpush1.xpose.msra.mxu0 0.0
    %4378 = vmatprep.subr.mxu0 0.0
    %4379 = vmatpush1.xpose.msra.mxu0 0.0
    %4380 = vmatprep.subr.mxu0 0.0
    %4381 = vmatpush1.xpose.msra.mxu0 0.0
    %4382 = vmatprep.subr.mxu0 0.0
    %4383 = vmatpush1.xpose.msra.mxu0 0.0
    %4384 = vmatprep.subr.mxu0 0.0
    %4385 = vmatpush1.xpose.msra.mxu0 0.0
    %4386 = vmatprep.subr.mxu0 0.0
    %4387 = vmatpush1.xpose.msra.mxu0 0.0
    %4388 = vmatprep.subr.mxu0 0.0
    %4389 = vmatpush1.xpose.msra.mxu0 0.0
    %4390 = vmatprep.subr.mxu0 0.0
    %4391 = vmatpush1.xpose.msra.mxu0 0.0
    %4392 = vmatprep.subr.mxu0 0.0
    %4393 = vmatpush1.xpose.msra.mxu0 0.0
    %4394 = vmatprep.subr.mxu0 0.0
    %4395 = vmatpush1.xpose.msra.mxu0 0.0
    %4396 = vmatprep.mubr.f32.mxu0 0.0
    %4397 = vmatmul.mubr.f32.gmra.mrb[0].mxu0 %v4327
    %v4398 = vpop.f32.mrb[0].mxu0
    %v4399 = vadd.f32 0.0, %v4398
    %v4400 = vpop.f32.mrb[0].mxu0
    %4401 = vdwg.mxu0
    %v4403 = vsel %vm1145, %v3502, 0
    %v4406 = vsel %vm1145, %v3798, 0
    %4408 = vmatprep.subr.mxu0 0.0
    %4409 = vmatpush1.xpose.msra.mxu0 %v4406
    %4410 = vmatprep.subr.mxu0 0.0
    %4411 = vmatpush1.xpose.msra.mxu0 0.0
    %4412 = vmatprep.subr.mxu0 0.0
    %4413 = vmatpush1.xpose.msra.mxu0 0.0
    %4414 = vmatprep.subr.mxu0 0.0
    %4415 = vmatpush1.xpose.msra.mxu0 0.0
    %4416 = vmatprep.subr.mxu0 0.0
    %4417 = vmatpush1.xpose.msra.mxu0 0.0
    %4418 = vmatprep.subr.mxu0 0.0
    %4419 = vmatpush1.xpose.msra.mxu0 0.0
    %4420 = vmatprep.subr.mxu0 0.0
    %4421 = vmatpush1.xpose.msra.mxu0 0.0
    %4422 = vmatprep.subr.mxu0 0.0
    %4423 = vmatpush1.xpose.msra.mxu0 0.0
    %4424 = vmatprep.subr.mxu0 0.0
    %4425 = vmatpush1.xpose.msra.mxu0 0.0
    %4426 = vmatprep.subr.mxu0 0.0
    %4427 = vmatpush1.xpose.msra.mxu0 0.0
    %4428 = vmatprep.subr.mxu0 0.0
    %4429 = vmatpush1.xpose.msra.mxu0 0.0
    %4430 = vmatprep.subr.mxu0 0.0
    %4431 = vmatpush1.xpose.msra.mxu0 0.0
    %4432 = vmatprep.subr.mxu0 0.0
    %4433 = vmatpush1.xpose.msra.mxu0 0.0
    %4434 = vmatprep.subr.mxu0 0.0
    %4435 = vmatpush1.xpose.msra.mxu0 0.0
    %4436 = vmatprep.subr.mxu0 0.0
    %4437 = vmatpush1.xpose.msra.mxu0 0.0
    %4438 = vmatprep.subr.mxu0 0.0
    %4439 = vmatpush1.xpose.msra.mxu0 0.0
    %4440 = vmatprep.subr.mxu0 0.0
    %4441 = vmatpush1.xpose.msra.mxu0 0.0
    %4442 = vmatprep.subr.mxu0 0.0
    %4443 = vmatpush1.xpose.msra.mxu0 0.0
    %4444 = vmatprep.subr.mxu0 0.0
    %4445 = vmatpush1.xpose.msra.mxu0 0.0
    %4446 = vmatprep.subr.mxu0 0.0
    %4447 = vmatpush1.xpose.msra.mxu0 0.0
    %4448 = vmatprep.subr.mxu0 0.0
    %4449 = vmatpush1.xpose.msra.mxu0 0.0
    %4450 = vmatprep.subr.mxu0 0.0
    %4451 = vmatpush1.xpose.msra.mxu0 0.0
    %4452 = vmatprep.subr.mxu0 0.0
    %4453 = vmatpush1.xpose.msra.mxu0 0.0
    %4454 = vmatprep.subr.mxu0 0.0
    %4455 = vmatpush1.xpose.msra.mxu0 0.0
    %4456 = vmatprep.subr.mxu0 0.0
    %4457 = vmatpush1.xpose.msra.mxu0 0.0
    %4458 = vmatprep.subr.mxu0 0.0
    %4459 = vmatpush1.xpose.msra.mxu0 0.0
    %4460 = vmatprep.subr.mxu0 0.0
    %4461 = vmatpush1.xpose.msra.mxu0 0.0
    %4462 = vmatprep.subr.mxu0 0.0
    %4463 = vmatpush1.xpose.msra.mxu0 0.0
    %4464 = vmatprep.subr.mxu0 0.0
    %4465 = vmatpush1.xpose.msra.mxu0 0.0
    %4466 = vmatprep.subr.mxu0 0.0
    %4467 = vmatpush1.xpose.msra.mxu0 0.0
    %4468 = vmatprep.subr.mxu0 0.0
    %4469 = vmatpush1.xpose.msra.mxu0 0.0
    %4470 = vmatprep.subr.mxu0 0.0
    %4471 = vmatpush1.xpose.msra.mxu0 0.0
    %4472 = vmatprep.mubr.f32.mxu0 0.0
    %4473 = vmatmul.mubr.f32.gmra.mrb[0].mxu0 %v4403
    %v4474 = vpop.f32.mrb[0].mxu0
    %v4475 = vadd.f32 0.0, %v4474
    %v4476 = vpop.f32.mrb[0].mxu0
    %4477 = vdwg.mxu0
    %v4479 = vsel %vm1145, %v3503, 0
    %v4482 = vsel %vm1145, %v3799, 0
    %4484 = vmatprep.subr.mxu0 0.0
    %4485 = vmatpush1.xpose.msra.mxu0 %v4482
    %4486 = vmatprep.subr.mxu0 0.0
    %4487 = vmatpush1.xpose.msra.mxu0 0.0
    %4488 = vmatprep.subr.mxu0 0.0
    %4489 = vmatpush1.xpose.msra.mxu0 0.0
    %4490 = vmatprep.subr.mxu0 0.0
    %4491 = vmatpush1.xpose.msra.mxu0 0.0
    %4492 = vmatprep.subr.mxu0 0.0
    %4493 = vmatpush1.xpose.msra.mxu0 0.0
    %4494 = vmatprep.subr.mxu0 0.0
    %4495 = vmatpush1.xpose.msra.mxu0 0.0
    %4496 = vmatprep.subr.mxu0 0.0
    %4497 = vmatpush1.xpose.msra.mxu0 0.0
    %4498 = vmatprep.subr.mxu0 0.0
    %4499 = vmatpush1.xpose.msra.mxu0 0.0
    %4500 = vmatprep.subr.mxu0 0.0
    %4501 = vmatpush1.xpose.msra.mxu0 0.0
    %4502 = vmatprep.subr.mxu0 0.0
    %4503 = vmatpush1.xpose.msra.mxu0 0.0
    %4504 = vmatprep.subr.mxu0 0.0
    %4505 = vmatpush1.xpose.msra.mxu0 0.0
    %4506 = vmatprep.subr.mxu0 0.0
    %4507 = vmatpush1.xpose.msra.mxu0 0.0
    %4508 = vmatprep.subr.mxu0 0.0
    %4509 = vmatpush1.xpose.msra.mxu0 0.0
    %4510 = vmatprep.subr.mxu0 0.0
    %4511 = vmatpush1.xpose.msra.mxu0 0.0
    %4512 = vmatprep.subr.mxu0 0.0
    %4513 = vmatpush1.xpose.msra.mxu0 0.0
    %4514 = vmatprep.subr.mxu0 0.0
    %4515 = vmatpush1.xpose.msra.mxu0 0.0
    %4516 = vmatprep.subr.mxu0 0.0
    %4517 = vmatpush1.xpose.msra.mxu0 0.0
    %4518 = vmatprep.subr.mxu0 0.0
    %4519 = vmatpush1.xpose.msra.mxu0 0.0
    %4520 = vmatprep.subr.mxu0 0.0
    %4521 = vmatpush1.xpose.msra.mxu0 0.0
    %4522 = vmatprep.subr.mxu0 0.0
    %4523 = vmatpush1.xpose.msra.mxu0 0.0
    %4524 = vmatprep.subr.mxu0 0.0
    %4525 = vmatpush1.xpose.msra.mxu0 0.0
    %4526 = vmatprep.subr.mxu0 0.0
    %4527 = vmatpush1.xpose.msra.mxu0 0.0
    %4528 = vmatprep.subr.mxu0 0.0
    %4529 = vmatpush1.xpose.msra.mxu0 0.0
    %4530 = vmatprep.subr.mxu0 0.0
    %4531 = vmatpush1.xpose.msra.mxu0 0.0
    %4532 = vmatprep.subr.mxu0 0.0
    %4533 = vmatpush1.xpose.msra.mxu0 0.0
    %4534 = vmatprep.subr.mxu0 0.0
    %4535 = vmatpush1.xpose.msra.mxu0 0.0
    %4536 = vmatprep.subr.mxu0 0.0
    %4537 = vmatpush1.xpose.msra.mxu0 0.0
    %4538 = vmatprep.subr.mxu0 0.0
    %4539 = vmatpush1.xpose.msra.mxu0 0.0
    %4540 = vmatprep.subr.mxu0 0.0
    %4541 = vmatpush1.xpose.msra.mxu0 0.0
    %4542 = vmatprep.subr.mxu0 0.0
    %4543 = vmatpush1.xpose.msra.mxu0 0.0
    %4544 = vmatprep.subr.mxu0 0.0
    %4545 = vmatpush1.xpose.msra.mxu0 0.0
    %4546 = vmatprep.subr.mxu0 0.0
    %4547 = vmatpush1.xpose.msra.mxu0 0.0
    %4548 = vmatprep.mubr.f32.mxu0 0.0
    %4549 = vmatmul.mubr.f32.gmra.mrb[0].mxu0 %v4479
    %v4550 = vpop.f32.mrb[0].mxu0
    %v4551 = vadd.f32 0.0, %v4550
    %v4552 = vpop.f32.mrb[0].mxu0
    %4553 = vdwg.mxu0
    %v4555 = vsel %vm1145, %v3504, 0
    %v4558 = vsel %vm1145, %v3800, 0
    %4560 = vmatprep.subr.mxu0 0.0
    %4561 = vmatpush1.xpose.msra.mxu0 %v4558
    %4562 = vmatprep.subr.mxu0 0.0
    %4563 = vmatpush1.xpose.msra.mxu0 0.0
    %4564 = vmatprep.subr.mxu0 0.0
    %4565 = vmatpush1.xpose.msra.mxu0 0.0
    %4566 = vmatprep.subr.mxu0 0.0
    %4567 = vmatpush1.xpose.msra.mxu0 0.0
    %4568 = vmatprep.subr.mxu0 0.0
    %4569 = vmatpush1.xpose.msra.mxu0 0.0
    %4570 = vmatprep.subr.mxu0 0.0
    %4571 = vmatpush1.xpose.msra.mxu0 0.0
    %4572 = vmatprep.subr.mxu0 0.0
    %4573 = vmatpush1.xpose.msra.mxu0 0.0
    %4574 = vmatprep.subr.mxu0 0.0
    %4575 = vmatpush1.xpose.msra.mxu0 0.0
    %4576 = vmatprep.subr.mxu0 0.0
    %4577 = vmatpush1.xpose.msra.mxu0 0.0
    %4578 = vmatprep.subr.mxu0 0.0
    %4579 = vmatpush1.xpose.msra.mxu0 0.0
    %4580 = vmatprep.subr.mxu0 0.0
    %4581 = vmatpush1.xpose.msra.mxu0 0.0
    %4582 = vmatprep.subr.mxu0 0.0
    %4583 = vmatpush1.xpose.msra.mxu0 0.0
    %4584 = vmatprep.subr.mxu0 0.0
    %4585 = vmatpush1.xpose.msra.mxu0 0.0
    %4586 = vmatprep.subr.mxu0 0.0
    %4587 = vmatpush1.xpose.msra.mxu0 0.0
    %4588 = vmatprep.subr.mxu0 0.0
    %4589 = vmatpush1.xpose.msra.mxu0 0.0
    %4590 = vmatprep.subr.mxu0 0.0
    %4591 = vmatpush1.xpose.msra.mxu0 0.0
    %4592 = vmatprep.subr.mxu0 0.0
    %4593 = vmatpush1.xpose.msra.mxu0 0.0
    %4594 = vmatprep.subr.mxu0 0.0
    %4595 = vmatpush1.xpose.msra.mxu0 0.0
    %4596 = vmatprep.subr.mxu0 0.0
    %4597 = vmatpush1.xpose.msra.mxu0 0.0
    %4598 = vmatprep.subr.mxu0 0.0
    %4599 = vmatpush1.xpose.msra.mxu0 0.0
    %4600 = vmatprep.subr.mxu0 0.0
    %4601 = vmatpush1.xpose.msra.mxu0 0.0
    %4602 = vmatprep.subr.mxu0 0.0
    %4603 = vmatpush1.xpose.msra.mxu0 0.0
    %4604 = vmatprep.subr.mxu0 0.0
    %4605 = vmatpush1.xpose.msra.mxu0 0.0
    %4606 = vmatprep.subr.mxu0 0.0
    %4607 = vmatpush1.xpose.msra.mxu0 0.0
    %4608 = vmatprep.subr.mxu0 0.0
    %4609 = vmatpush1.xpose.msra.mxu0 0.0
    %4610 = vmatprep.subr.mxu0 0.0
    %4611 = vmatpush1.xpose.msra.mxu0 0.0
    %4612 = vmatprep.subr.mxu0 0.0
    %4613 = vmatpush1.xpose.msra.mxu0 0.0
    %4614 = vmatprep.subr.mxu0 0.0
    %4615 = vmatpush1.xpose.msra.mxu0 0.0
    %4616 = vmatprep.subr.mxu0 0.0
    %4617 = vmatpush1.xpose.msra.mxu0 0.0
    %4618 = vmatprep.subr.mxu0 0.0
    %4619 = vmatpush1.xpose.msra.mxu0 0.0
    %4620 = vmatprep.subr.mxu0 0.0
    %4621 = vmatpush1.xpose.msra.mxu0 0.0
    %4622 = vmatprep.subr.mxu0 0.0
    %4623 = vmatpush1.xpose.msra.mxu0 0.0
    %4624 = vmatprep.mubr.f32.mxu0 0.0
    %4625 = vmatmul.mubr.f32.gmra.mrb[0].mxu0 %v4555
    %v4626 = vpop.f32.mrb[0].mxu0
    %v4627 = vadd.f32 0.0, %v4626
    %v4628 = vpop.f32.mrb[0].mxu0
    %4629 = vdwg.mxu0
    %v4631 = vsel %vm1145, %v3505, 0
    %v4634 = vsel %vm1145, %v3801, 0
    %4636 = vmatprep.subr.mxu0 0.0
    %4637 = vmatpush1.xpose.msra.mxu0 %v4634
    %4638 = vmatprep.subr.mxu0 0.0
    %4639 = vmatpush1.xpose.msra.mxu0 0.0
    %4640 = vmatprep.subr.mxu0 0.0
    %4641 = vmatpush1.xpose.msra.mxu0 0.0
    %4642 = vmatprep.subr.mxu0 0.0
    %4643 = vmatpush1.xpose.msra.mxu0 0.0
    %4644 = vmatprep.subr.mxu0 0.0
    %4645 = vmatpush1.xpose.msra.mxu0 0.0
    %4646 = vmatprep.subr.mxu0 0.0
    %4647 = vmatpush1.xpose.msra.mxu0 0.0
    %4648 = vmatprep.subr.mxu0 0.0
    %4649 = vmatpush1.xpose.msra.mxu0 0.0
    %4650 = vmatprep.subr.mxu0 0.0
    %4651 = vmatpush1.xpose.msra.mxu0 0.0
    %4652 = vmatprep.subr.mxu0 0.0
    %4653 = vmatpush1.xpose.msra.mxu0 0.0
    %4654 = vmatprep.subr.mxu0 0.0
    %4655 = vmatpush1.xpose.msra.mxu0 0.0
    %4656 = vmatprep.subr.mxu0 0.0
    %4657 = vmatpush1.xpose.msra.mxu0 0.0
    %4658 = vmatprep.subr.mxu0 0.0
    %4659 = vmatpush1.xpose.msra.mxu0 0.0
    %4660 = vmatprep.subr.mxu0 0.0
    %4661 = vmatpush1.xpose.msra.mxu0 0.0
    %4662 = vmatprep.subr.mxu0 0.0
    %4663 = vmatpush1.xpose.msra.mxu0 0.0
    %4664 = vmatprep.subr.mxu0 0.0
    %4665 = vmatpush1.xpose.msra.mxu0 0.0
    %4666 = vmatprep.subr.mxu0 0.0
    %4667 = vmatpush1.xpose.msra.mxu0 0.0
    %4668 = vmatprep.subr.mxu0 0.0
    %4669 = vmatpush1.xpose.msra.mxu0 0.0
    %4670 = vmatprep.subr.mxu0 0.0
    %4671 = vmatpush1.xpose.msra.mxu0 0.0
    %4672 = vmatprep.subr.mxu0 0.0
    %4673 = vmatpush1.xpose.msra.mxu0 0.0
    %4674 = vmatprep.subr.mxu0 0.0
    %4675 = vmatpush1.xpose.msra.mxu0 0.0
    %4676 = vmatprep.subr.mxu0 0.0
    %4677 = vmatpush1.xpose.msra.mxu0 0.0
    %4678 = vmatprep.subr.mxu0 0.0
    %4679 = vmatpush1.xpose.msra.mxu0 0.0
    %4680 = vmatprep.subr.mxu0 0.0
    %4681 = vmatpush1.xpose.msra.mxu0 0.0
    %4682 = vmatprep.subr.mxu0 0.0
    %4683 = vmatpush1.xpose.msra.mxu0 0.0
    %4684 = vmatprep.subr.mxu0 0.0
    %4685 = vmatpush1.xpose.msra.mxu0 0.0
    %4686 = vmatprep.subr.mxu0 0.0
    %4687 = vmatpush1.xpose.msra.mxu0 0.0
    %4688 = vmatprep.subr.mxu0 0.0
    %4689 = vmatpush1.xpose.msra.mxu0 0.0
    %4690 = vmatprep.subr.mxu0 0.0
    %4691 = vmatpush1.xpose.msra.mxu0 0.0
    %4692 = vmatprep.subr.mxu0 0.0
    %4693 = vmatpush1.xpose.msra.mxu0 0.0
    %4694 = vmatprep.subr.mxu0 0.0
    %4695 = vmatpush1.xpose.msra.mxu0 0.0
    %4696 = vmatprep.subr.mxu0 0.0
    %4697 = vmatpush1.xpose.msra.mxu0 0.0
    %4698 = vmatprep.subr.mxu0 0.0
    %4699 = vmatpush1.xpose.msra.mxu0 0.0
    %4700 = vmatprep.mubr.f32.mxu0 0.0
    %4701 = vmatmul.mubr.f32.gmra.mrb[0].mxu0 %v4631
    %v4702 = vpop.f32.mrb[0].mxu0
    %v4703 = vadd.f32 0.0, %v4702
    %v4704 = vpop.f32.mrb[0].mxu0
    %4705 = vdwg.mxu0
    %v4706 = vmul.f32 %v4171, 0.35355338
    %v4707 = vmul.f32 %v4247, 0.35355338
    %v4708 = vmul.f32 %v4323, 0.35355338
    %v4709 = vmul.f32 %v4399, 0.35355338
    %v4710 = vmul.f32 %v4475, 0.35355338
    %v4711 = vmul.f32 %v4551, 0.35355338
    %v4712 = vmul.f32 %v4627, 0.35355338
    %v4713 = vmul.f32 %v4703, 0.35355338
    %v4714 = vadd.f32 %v4706, %v146
    %v4715 = vadd.f32 %v4707, %v146
    %v4716 = vadd.f32 %v4708, %v146
    %v4717 = vadd.f32 %v4709, %v146
    %v4718 = vadd.f32 %v4710, %v146
    %v4719 = vadd.f32 %v4711, %v146
    %v4720 = vadd.f32 %v4712, %v146
    %v4721 = vadd.f32 %v4713, %v146
    %v4722 = vsel %vm1145, %v4714, -inf
    %4723 = vmax.xlane.f32.xlu0 %v4722
    %v4724 = vpop.xlane.xlu0 %4723
    %v4725 = vsel %vm1145, %v4715, -inf
    %4726 = vmax.xlane.f32.xlu0 %v4725
    %v4727 = vpop.xlane.xlu0 %4726
    %v4728 = vsel %vm1145, %v4716, -inf
    %4729 = vmax.xlane.f32.xlu0 %v4728
    %v4730 = vpop.xlane.xlu0 %4729
    %v4731 = vsel %vm1145, %v4717, -inf
    %4732 = vmax.xlane.f32.xlu0 %v4731
    %v4733 = vpop.xlane.xlu0 %4732
    %v4734 = vsel %vm1145, %v4718, -inf
    %4735 = vmax.xlane.f32.xlu0 %v4734
    %v4736 = vpop.xlane.xlu0 %4735
    %v4737 = vsel %vm1145, %v4719, -inf
    %4738 = vmax.xlane.f32.xlu0 %v4737
    %v4739 = vpop.xlane.xlu0 %4738
    %v4740 = vsel %vm1145, %v4720, -inf
    %4741 = vmax.xlane.f32.xlu0 %v4740
    %v4742 = vpop.xlane.xlu0 %4741
    %v4743 = vsel %vm1145, %v4721, -inf
    %4744 = vmax.xlane.f32.xlu0 %v4743
    %v4745 = vpop.xlane.xlu0 %4744
    %v4746 = vsub.f32 %v4714, %v4724
    %v4747 = vsub.f32 %v4715, %v4727
    %v4748 = vsub.f32 %v4716, %v4730
    %v4749 = vsub.f32 %v4717, %v4733
    %v4750 = vsub.f32 %v4718, %v4736
    %v4751 = vsub.f32 %v4719, %v4739
    %v4752 = vsub.f32 %v4720, %v4742
    %v4753 = vsub.f32 %v4721, %v4745
    %v4754 = vmul.f32 %v4746, 1.442695
    %v4755 = vpow.pop %v4754
    %v4756 = vmul.f32 %v4747, 1.442695
    %v4757 = vpow.pop %v4756
    %v4758 = vmul.f32 %v4748, 1.442695
    %v4759 = vpow.pop %v4758
    %v4760 = vmul.f32 %v4749, 1.442695
    %v4761 = vpow.pop %v4760
    %v4762 = vmul.f32 %v4750, 1.442695
    %v4763 = vpow.pop %v4762
    %v4764 = vmul.f32 %v4751, 1.442695
    %v4765 = vpow.pop %v4764
    %v4766 = vmul.f32 %v4752, 1.442695
    %v4767 = vpow.pop %v4766
    %v4768 = vmul.f32 %v4753, 1.442695
    %v4769 = vpow.pop %v4768
    %v4770 = vsel %vm1145, %v4755, 0.0
    %4771 = vadd.xlane.f32.xlu0 %v4770
    %v4772 = vpop.xlane.xlu0 %4771
    %v4773 = vsel %vm1145, %v4757, 0.0
    %4774 = vadd.xlane.f32.xlu0 %v4773
    %v4775 = vpop.xlane.xlu0 %4774
    %v4776 = vsel %vm1145, %v4759, 0.0
    %4777 = vadd.xlane.f32.xlu0 %v4776
    %v4778 = vpop.xlane.xlu0 %4777
    %v4779 = vsel %vm1145, %v4761, 0.0
    %4780 = vadd.xlane.f32.xlu0 %v4779
    %v4781 = vpop.xlane.xlu0 %4780
    %v4782 = vsel %vm1145, %v4763, 0.0
    %4783 = vadd.xlane.f32.xlu0 %v4782
    %v4784 = vpop.xlane.xlu0 %4783
    %v4785 = vsel %vm1145, %v4765, 0.0
    %4786 = vadd.xlane.f32.xlu0 %v4785
    %v4787 = vpop.xlane.xlu0 %4786
    %v4788 = vsel %vm1145, %v4767, 0.0
    %4789 = vadd.xlane.f32.xlu0 %v4788
    %v4790 = vpop.xlane.xlu0 %4789
    %v4791 = vsel %vm1145, %v4769, 0.0
    %4792 = vadd.xlane.f32.xlu0 %v4791
    %v4793 = vpop.xlane.xlu0 %4792
    %v4794 = vrcp.pop %v4772
    %v4795 = vrcp.pop %v4775
    %v4796 = vrcp.pop %v4778
    %v4797 = vrcp.pop %v4781
    %v4798 = vrcp.pop %v4784
    %v4799 = vrcp.pop %v4787
    %v4800 = vrcp.pop %v4790
    %v4801 = vrcp.pop %v4793
    %v4802 = vmul.f32 %v4755, %v4794
    %v4803 = vmul.f32 %v4757, %v4795
    %v4804 = vmul.f32 %v4759, %v4796
    %v4805 = vmul.f32 %v4761, %v4797
    %v4806 = vmul.f32 %v4763, %v4798
    %v4807 = vmul.f32 %v4765, %v4799
    %v4808 = vmul.f32 %v4767, %v4800
    %v4809 = vmul.f32 %v4769, %v4801
    %v4811 = vsel %vm1145, %v4802, 0
    %4813 = vmatprep.subr.mxu0 0.0
    %4814 = vmatpush1.msra.mxu0 %v4026
    %4815 = vmatprep.subr.mxu0 0.0
    %4816 = vmatpush1.msra.mxu0 0.0
    %4817 = vmatprep.subr.mxu0 0.0
    %4818 = vmatpush1.msra.mxu0 0.0
    %4819 = vmatprep.subr.mxu0 0.0
    %4820 = vmatpush1.msra.mxu0 0.0
    %4821 = vmatprep.subr.mxu0 0.0
    %4822 = vmatpush1.msra.mxu0 0.0
    %4823 = vmatprep.subr.mxu0 0.0
    %4824 = vmatpush1.msra.mxu0 0.0
    %4825 = vmatprep.subr.mxu0 0.0
    %4826 = vmatpush1.msra.mxu0 0.0
    %4827 = vmatprep.subr.mxu0 0.0
    %4828 = vmatpush1.msra.mxu0 0.0
    %4829 = vmatprep.subr.mxu0 0.0
    %4830 = vmatpush1.msra.mxu0 0.0
    %4831 = vmatprep.subr.mxu0 0.0
    %4832 = vmatpush1.msra.mxu0 0.0
    %4833 = vmatprep.subr.mxu0 0.0
    %4834 = vmatpush1.msra.mxu0 0.0
    %4835 = vmatprep.subr.mxu0 0.0
    %4836 = vmatpush1.msra.mxu0 0.0
    %4837 = vmatprep.subr.mxu0 0.0
    %4838 = vmatpush1.msra.mxu0 0.0
    %4839 = vmatprep.subr.mxu0 0.0
    %4840 = vmatpush1.msra.mxu0 0.0
    %4841 = vmatprep.subr.mxu0 0.0
    %4842 = vmatpush1.msra.mxu0 0.0
    %4843 = vmatprep.subr.mxu0 0.0
    %4844 = vmatpush1.msra.mxu0 0.0
    %4845 = vmatprep.subr.mxu0 0.0
    %4846 = vmatpush1.msra.mxu0 0.0
    %4847 = vmatprep.subr.mxu0 0.0
    %4848 = vmatpush1.msra.mxu0 0.0
    %4849 = vmatprep.subr.mxu0 0.0
    %4850 = vmatpush1.msra.mxu0 0.0
    %4851 = vmatprep.subr.mxu0 0.0
    %4852 = vmatpush1.msra.mxu0 0.0
    %4853 = vmatprep.subr.mxu0 0.0
    %4854 = vmatpush1.msra.mxu0 0.0
    %4855 = vmatprep.subr.mxu0 0.0
    %4856 = vmatpush1.msra.mxu0 0.0
    %4857 = vmatprep.subr.mxu0 0.0
    %4858 = vmatpush1.msra.mxu0 0.0
    %4859 = vmatprep.subr.mxu0 0.0
    %4860 = vmatpush1.msra.mxu0 0.0
    %4861 = vmatprep.subr.mxu0 0.0
    %4862 = vmatpush1.msra.mxu0 0.0
    %4863 = vmatprep.subr.mxu0 0.0
    %4864 = vmatpush1.msra.mxu0 0.0
    %4865 = vmatprep.subr.mxu0 0.0
    %4866 = vmatpush1.msra.mxu0 0.0
    %4867 = vmatprep.subr.mxu0 0.0
    %4868 = vmatpush1.msra.mxu0 0.0
    %4869 = vmatprep.subr.mxu0 0.0
    %4870 = vmatpush1.msra.mxu0 0.0
    %4871 = vmatprep.subr.mxu0 0.0
    %4872 = vmatpush1.msra.mxu0 0.0
    %4873 = vmatprep.subr.mxu0 0.0
    %4874 = vmatpush1.msra.mxu0 0.0
    %4875 = vmatprep.subr.mxu0 0.0
    %4876 = vmatpush1.msra.mxu0 0.0
    %4877 = vmatprep.mubr.f32.mxu0 0.0
    %4878 = vmatmul.mubr.f32.gmra.mrb[0].mxu0 %v4811
    %v4879 = vpop.f32.mrb[0].mxu0
    %v4880 = vadd.f32 0.0, %v4879
    %v4881 = vpop.f32.mrb[0].mxu0
    %4882 = vdwg.mxu0
    %v4884 = vsel %vm1145, %v4803, 0
    %4886 = vmatprep.subr.mxu0 0.0
    %4887 = vmatpush1.msra.mxu0 %v4027
    %4888 = vmatprep.subr.mxu0 0.0
    %4889 = vmatpush1.msra.mxu0 0.0
    %4890 = vmatprep.subr.mxu0 0.0
    %4891 = vmatpush1.msra.mxu0 0.0
    %4892 = vmatprep.subr.mxu0 0.0
    %4893 = vmatpush1.msra.mxu0 0.0
    %4894 = vmatprep.subr.mxu0 0.0
    %4895 = vmatpush1.msra.mxu0 0.0
    %4896 = vmatprep.subr.mxu0 0.0
    %4897 = vmatpush1.msra.mxu0 0.0
    %4898 = vmatprep.subr.mxu0 0.0
    %4899 = vmatpush1.msra.mxu0 0.0
    %4900 = vmatprep.subr.mxu0 0.0
    %4901 = vmatpush1.msra.mxu0 0.0
    %4902 = vmatprep.subr.mxu0 0.0
    %4903 = vmatpush1.msra.mxu0 0.0
    %4904 = vmatprep.subr.mxu0 0.0
    %4905 = vmatpush1.msra.mxu0 0.0
    %4906 = vmatprep.subr.mxu0 0.0
    %4907 = vmatpush1.msra.mxu0 0.0
    %4908 = vmatprep.subr.mxu0 0.0
    %4909 = vmatpush1.msra.mxu0 0.0
    %4910 = vmatprep.subr.mxu0 0.0
    %4911 = vmatpush1.msra.mxu0 0.0
    %4912 = vmatprep.subr.mxu0 0.0
    %4913 = vmatpush1.msra.mxu0 0.0
    %4914 = vmatprep.subr.mxu0 0.0
    %4915 = vmatpush1.msra.mxu0 0.0
    %4916 = vmatprep.subr.mxu0 0.0
    %4917 = vmatpush1.msra.mxu0 0.0
    %4918 = vmatprep.subr.mxu0 0.0
    %4919 = vmatpush1.msra.mxu0 0.0
    %4920 = vmatprep.subr.mxu0 0.0
    %4921 = vmatpush1.msra.mxu0 0.0
    %4922 = vmatprep.subr.mxu0 0.0
    %4923 = vmatpush1.msra.mxu0 0.0
    %4924 = vmatprep.subr.mxu0 0.0
    %4925 = vmatpush1.msra.mxu0 0.0
    %4926 = vmatprep.subr.mxu0 0.0
    %4927 = vmatpush1.msra.mxu0 0.0
    %4928 = vmatprep.subr.mxu0 0.0
    %4929 = vmatpush1.msra.mxu0 0.0
    %4930 = vmatprep.subr.mxu0 0.0
    %4931 = vmatpush1.msra.mxu0 0.0
    %4932 = vmatprep.subr.mxu0 0.0
    %4933 = vmatpush1.msra.mxu0 0.0
    %4934 = vmatprep.subr.mxu0 0.0
    %4935 = vmatpush1.msra.mxu0 0.0
    %4936 = vmatprep.subr.mxu0 0.0
    %4937 = vmatpush1.msra.mxu0 0.0
    %4938 = vmatprep.subr.mxu0 0.0
    %4939 = vmatpush1.msra.mxu0 0.0
    %4940 = vmatprep.subr.mxu0 0.0
    %4941 = vmatpush1.msra.mxu0 0.0
    %4942 = vmatprep.subr.mxu0 0.0
    %4943 = vmatpush1.msra.mxu0 0.0
    %4944 = vmatprep.subr.mxu0 0.0
    %4945 = vmatpush1.msra.mxu0 0.0
    %4946 = vmatprep.subr.mxu0 0.0
    %4947 = vmatpush1.msra.mxu0 0.0
    %4948 = vmatprep.subr.mxu0 0.0
    %4949 = vmatpush1.msra.mxu0 0.0
    %4950 = vmatprep.mubr.f32.mxu0 0.0
    %4951 = vmatmul.mubr.f32.gmra.mrb[0].mxu0 %v4884
    %v4952 = vpop.f32.mrb[0].mxu0
    %v4953 = vadd.f32 0.0, %v4952
    %v4954 = vpop.f32.mrb[0].mxu0
    %4955 = vdwg.mxu0
    %v4957 = vsel %vm1145, %v4804, 0
    %4959 = vmatprep.subr.mxu0 0.0
    %4960 = vmatpush1.msra.mxu0 %v4028
    %4961 = vmatprep.subr.mxu0 0.0
    %4962 = vmatpush1.msra.mxu0 0.0
    %4963 = vmatprep.subr.mxu0 0.0
    %4964 = vmatpush1.msra.mxu0 0.0
    %4965 = vmatprep.subr.mxu0 0.0
    %4966 = vmatpush1.msra.mxu0 0.0
    %4967 = vmatprep.subr.mxu0 0.0
    %4968 = vmatpush1.msra.mxu0 0.0
    %4969 = vmatprep.subr.mxu0 0.0
    %4970 = vmatpush1.msra.mxu0 0.0
    %4971 = vmatprep.subr.mxu0 0.0
    %4972 = vmatpush1.msra.mxu0 0.0
    %4973 = vmatprep.subr.mxu0 0.0
    %4974 = vmatpush1.msra.mxu0 0.0
    %4975 = vmatprep.subr.mxu0 0.0
    %4976 = vmatpush1.msra.mxu0 0.0
    %4977 = vmatprep.subr.mxu0 0.0
    %4978 = vmatpush1.msra.mxu0 0.0
    %4979 = vmatprep.subr.mxu0 0.0
    %4980 = vmatpush1.msra.mxu0 0.0
    %4981 = vmatprep.subr.mxu0 0.0
    %4982 = vmatpush1.msra.mxu0 0.0
    %4983 = vmatprep.subr.mxu0 0.0
    %4984 = vmatpush1.msra.mxu0 0.0
    %4985 = vmatprep.subr.mxu0 0.0
    %4986 = vmatpush1.msra.mxu0 0.0
    %4987 = vmatprep.subr.mxu0 0.0
    %4988 = vmatpush1.msra.mxu0 0.0
    %4989 = vmatprep.subr.mxu0 0.0
    %4990 = vmatpush1.msra.mxu0 0.0
    %4991 = vmatprep.subr.mxu0 0.0
    %4992 = vmatpush1.msra.mxu0 0.0
    %4993 = vmatprep.subr.mxu0 0.0
    %4994 = vmatpush1.msra.mxu0 0.0
    %4995 = vmatprep.subr.mxu0 0.0
    %4996 = vmatpush1.msra.mxu0 0.0
    %4997 = vmatprep.subr.mxu0 0.0
    %4998 = vmatpush1.msra.mxu0 0.0
    %4999 = vmatprep.subr.mxu0 0.0
    %5000 = vmatpush1.msra.mxu0 0.0
    %5001 = vmatprep.subr.mxu0 0.0
    %5002 = vmatpush1.msra.mxu0 0.0
    %5003 = vmatprep.subr.mxu0 0.0
    %5004 = vmatpush1.msra.mxu0 0.0
    %5005 = vmatprep.subr.mxu0 0.0
    %5006 = vmatpush1.msra.mxu0 0.0
    %5007 = vmatprep.subr.mxu0 0.0
    %5008 = vmatpush1.msra.mxu0 0.0
    %5009 = vmatprep.subr.mxu0 0.0
    %5010 = vmatpush1.msra.mxu0 0.0
    %5011 = vmatprep.subr.mxu0 0.0
    %5012 = vmatpush1.msra.mxu0 0.0
    %5013 = vmatprep.subr.mxu0 0.0
    %5014 = vmatpush1.msra.mxu0 0.0
    %5015 = vmatprep.subr.mxu0 0.0
    %5016 = vmatpush1.msra.mxu0 0.0
    %5017 = vmatprep.subr.mxu0 0.0
    %5018 = vmatpush1.msra.mxu0 0.0
    %5019 = vmatprep.subr.mxu0 0.0
    %5020 = vmatpush1.msra.mxu0 0.0
    %5021 = vmatprep.subr.mxu0 0.0
    %5022 = vmatpush1.msra.mxu0 0.0
    %5023 = vmatprep.mubr.f32.mxu0 0.0
    %5024 = vmatmul.mubr.f32.gmra.mrb[0].mxu0 %v4957
    %v5025 = vpop.f32.mrb[0].mxu0
    %v5026 = vadd.f32 0.0, %v5025
    %v5027 = vpop.f32.mrb[0].mxu0
    %5028 = vdwg.mxu0
    %v5030 = vsel %vm1145, %v4805, 0
    %5032 = vmatprep.subr.mxu0 0.0
    %5033 = vmatpush1.msra.mxu0 %v4029
    %5034 = vmatprep.subr.mxu0 0.0
    %5035 = vmatpush1.msra.mxu0 0.0
    %5036 = vmatprep.subr.mxu0 0.0
    %5037 = vmatpush1.msra.mxu0 0.0
    %5038 = vmatprep.subr.mxu0 0.0
    %5039 = vmatpush1.msra.mxu0 0.0
    %5040 = vmatprep.subr.mxu0 0.0
    %5041 = vmatpush1.msra.mxu0 0.0
    %5042 = vmatprep.subr.mxu0 0.0
    %5043 = vmatpush1.msra.mxu0 0.0
    %5044 = vmatprep.subr.mxu0 0.0
    %5045 = vmatpush1.msra.mxu0 0.0
    %5046 = vmatprep.subr.mxu0 0.0
    %5047 = vmatpush1.msra.mxu0 0.0
    %5048 = vmatprep.subr.mxu0 0.0
    %5049 = vmatpush1.msra.mxu0 0.0
    %5050 = vmatprep.subr.mxu0 0.0
    %5051 = vmatpush1.msra.mxu0 0.0
    %5052 = vmatprep.subr.mxu0 0.0
    %5053 = vmatpush1.msra.mxu0 0.0
    %5054 = vmatprep.subr.mxu0 0.0
    %5055 = vmatpush1.msra.mxu0 0.0
    %5056 = vmatprep.subr.mxu0 0.0
    %5057 = vmatpush1.msra.mxu0 0.0
    %5058 = vmatprep.subr.mxu0 0.0
    %5059 = vmatpush1.msra.mxu0 0.0
    %5060 = vmatprep.subr.mxu0 0.0
    %5061 = vmatpush1.msra.mxu0 0.0
    %5062 = vmatprep.subr.mxu0 0.0
    %5063 = vmatpush1.msra.mxu0 0.0
    %5064 = vmatprep.subr.mxu0 0.0
    %5065 = vmatpush1.msra.mxu0 0.0
    %5066 = vmatprep.subr.mxu0 0.0
    %5067 = vmatpush1.msra.mxu0 0.0
    %5068 = vmatprep.subr.mxu0 0.0
    %5069 = vmatpush1.msra.mxu0 0.0
    %5070 = vmatprep.subr.mxu0 0.0
    %5071 = vmatpush1.msra.mxu0 0.0
    %5072 = vmatprep.subr.mxu0 0.0
    %5073 = vmatpush1.msra.mxu0 0.0
    %5074 = vmatprep.subr.mxu0 0.0
    %5075 = vmatpush1.msra.mxu0 0.0
    %5076 = vmatprep.subr.mxu0 0.0
    %5077 = vmatpush1.msra.mxu0 0.0
    %5078 = vmatprep.subr.mxu0 0.0
    %5079 = vmatpush1.msra.mxu0 0.0
    %5080 = vmatprep.subr.mxu0 0.0
    %5081 = vmatpush1.msra.mxu0 0.0
    %5082 = vmatprep.subr.mxu0 0.0
    %5083 = vmatpush1.msra.mxu0 0.0
    %5084 = vmatprep.subr.mxu0 0.0
    %5085 = vmatpush1.msra.mxu0 0.0
    %5086 = vmatprep.subr.mxu0 0.0
    %5087 = vmatpush1.msra.mxu0 0.0
    %5088 = vmatprep.subr.mxu0 0.0
    %5089 = vmatpush1.msra.mxu0 0.0
    %5090 = vmatprep.subr.mxu0 0.0
    %5091 = vmatpush1.msra.mxu0 0.0
    %5092 = vmatprep.subr.mxu0 0.0
    %5093 = vmatpush1.msra.mxu0 0.0
    %5094 = vmatprep.subr.mxu0 0.0
    %5095 = vmatpush1.msra.mxu0 0.0
    %5096 = vmatprep.mubr.f32.mxu0 0.0
    %5097 = vmatmul.mubr.f32.gmra.mrb[0].mxu0 %v5030
    %v5098 = vpop.f32.mrb[0].mxu0
    %v5099 = vadd.f32 0.0, %v5098
    %v5100 = vpop.f32.mrb[0].mxu0
    %5101 = vdwg.mxu0
    %v5103 = vsel %vm1145, %v4806, 0
    %5105 = vmatprep.subr.mxu0 0.0
    %5106 = vmatpush1.msra.mxu0 %v4094
    %5107 = vmatprep.subr.mxu0 0.0
    %5108 = vmatpush1.msra.mxu0 0.0
    %5109 = vmatprep.subr.mxu0 0.0
    %5110 = vmatpush1.msra.mxu0 0.0
    %5111 = vmatprep.subr.mxu0 0.0
    %5112 = vmatpush1.msra.mxu0 0.0
    %5113 = vmatprep.subr.mxu0 0.0
    %5114 = vmatpush1.msra.mxu0 0.0
    %5115 = vmatprep.subr.mxu0 0.0
    %5116 = vmatpush1.msra.mxu0 0.0
    %5117 = vmatprep.subr.mxu0 0.0
    %5118 = vmatpush1.msra.mxu0 0.0
    %5119 = vmatprep.subr.mxu0 0.0
    %5120 = vmatpush1.msra.mxu0 0.0
    %5121 = vmatprep.subr.mxu0 0.0
    %5122 = vmatpush1.msra.mxu0 0.0
    %5123 = vmatprep.subr.mxu0 0.0
    %5124 = vmatpush1.msra.mxu0 0.0
    %5125 = vmatprep.subr.mxu0 0.0
    %5126 = vmatpush1.msra.mxu0 0.0
    %5127 = vmatprep.subr.mxu0 0.0
    %5128 = vmatpush1.msra.mxu0 0.0
    %5129 = vmatprep.subr.mxu0 0.0
    %5130 = vmatpush1.msra.mxu0 0.0
    %5131 = vmatprep.subr.mxu0 0.0
    %5132 = vmatpush1.msra.mxu0 0.0
    %5133 = vmatprep.subr.mxu0 0.0
    %5134 = vmatpush1.msra.mxu0 0.0
    %5135 = vmatprep.subr.mxu0 0.0
    %5136 = vmatpush1.msra.mxu0 0.0
    %5137 = vmatprep.subr.mxu0 0.0
    %5138 = vmatpush1.msra.mxu0 0.0
    %5139 = vmatprep.subr.mxu0 0.0
    %5140 = vmatpush1.msra.mxu0 0.0
    %5141 = vmatprep.subr.mxu0 0.0
    %5142 = vmatpush1.msra.mxu0 0.0
    %5143 = vmatprep.subr.mxu0 0.0
    %5144 = vmatpush1.msra.mxu0 0.0
    %5145 = vmatprep.subr.mxu0 0.0
    %5146 = vmatpush1.msra.mxu0 0.0
    %5147 = vmatprep.subr.mxu0 0.0
    %5148 = vmatpush1.msra.mxu0 0.0
    %5149 = vmatprep.subr.mxu0 0.0
    %5150 = vmatpush1.msra.mxu0 0.0
    %5151 = vmatprep.subr.mxu0 0.0
    %5152 = vmatpush1.msra.mxu0 0.0
    %5153 = vmatprep.subr.mxu0 0.0
    %5154 = vmatpush1.msra.mxu0 0.0
    %5155 = vmatprep.subr.mxu0 0.0
    %5156 = vmatpush1.msra.mxu0 0.0
    %5157 = vmatprep.subr.mxu0 0.0
    %5158 = vmatpush1.msra.mxu0 0.0
    %5159 = vmatprep.subr.mxu0 0.0
    %5160 = vmatpush1.msra.mxu0 0.0
    %5161 = vmatprep.subr.mxu0 0.0
    %5162 = vmatpush1.msra.mxu0 0.0
    %5163 = vmatprep.subr.mxu0 0.0
    %5164 = vmatpush1.msra.mxu0 0.0
    %5165 = vmatprep.subr.mxu0 0.0
    %5166 = vmatpush1.msra.mxu0 0.0
    %5167 = vmatprep.subr.mxu0 0.0
    %5168 = vmatpush1.msra.mxu0 0.0
    %5169 = vmatprep.mubr.f32.mxu0 0.0
    %5170 = vmatmul.mubr.f32.gmra.mrb[0].mxu0 %v5103
    %v5171 = vpop.f32.mrb[0].mxu0
    %v5172 = vadd.f32 0.0, %v5171
    %v5173 = vpop.f32.mrb[0].mxu0
    %5174 = vdwg.mxu0
    %v5176 = vsel %vm1145, %v4807, 0
    %5178 = vmatprep.subr.mxu0 0.0
    %5179 = vmatpush1.msra.mxu0 %v4095
    %5180 = vmatprep.subr.mxu0 0.0
    %5181 = vmatpush1.msra.mxu0 0.0
    %5182 = vmatprep.subr.mxu0 0.0
    %5183 = vmatpush1.msra.mxu0 0.0
    %5184 = vmatprep.subr.mxu0 0.0
    %5185 = vmatpush1.msra.mxu0 0.0
    %5186 = vmatprep.subr.mxu0 0.0
    %5187 = vmatpush1.msra.mxu0 0.0
    %5188 = vmatprep.subr.mxu0 0.0
    %5189 = vmatpush1.msra.mxu0 0.0
    %5190 = vmatprep.subr.mxu0 0.0
    %5191 = vmatpush1.msra.mxu0 0.0
    %5192 = vmatprep.subr.mxu0 0.0
    %5193 = vmatpush1.msra.mxu0 0.0
    %5194 = vmatprep.subr.mxu0 0.0
    %5195 = vmatpush1.msra.mxu0 0.0
    %5196 = vmatprep.subr.mxu0 0.0
    %5197 = vmatpush1.msra.mxu0 0.0
    %5198 = vmatprep.subr.mxu0 0.0
    %5199 = vmatpush1.msra.mxu0 0.0
    %5200 = vmatprep.subr.mxu0 0.0
    %5201 = vmatpush1.msra.mxu0 0.0
    %5202 = vmatprep.subr.mxu0 0.0
    %5203 = vmatpush1.msra.mxu0 0.0
    %5204 = vmatprep.subr.mxu0 0.0
    %5205 = vmatpush1.msra.mxu0 0.0
    %5206 = vmatprep.subr.mxu0 0.0
    %5207 = vmatpush1.msra.mxu0 0.0
    %5208 = vmatprep.subr.mxu0 0.0
    %5209 = vmatpush1.msra.mxu0 0.0
    %5210 = vmatprep.subr.mxu0 0.0
    %5211 = vmatpush1.msra.mxu0 0.0
    %5212 = vmatprep.subr.mxu0 0.0
    %5213 = vmatpush1.msra.mxu0 0.0
    %5214 = vmatprep.subr.mxu0 0.0
    %5215 = vmatpush1.msra.mxu0 0.0
    %5216 = vmatprep.subr.mxu0 0.0
    %5217 = vmatpush1.msra.mxu0 0.0
    %5218 = vmatprep.subr.mxu0 0.0
    %5219 = vmatpush1.msra.mxu0 0.0
    %5220 = vmatprep.subr.mxu0 0.0
    %5221 = vmatpush1.msra.mxu0 0.0
    %5222 = vmatprep.subr.mxu0 0.0
    %5223 = vmatpush1.msra.mxu0 0.0
    %5224 = vmatprep.subr.mxu0 0.0
    %5225 = vmatpush1.msra.mxu0 0.0
    %5226 = vmatprep.subr.mxu0 0.0
    %5227 = vmatpush1.msra.mxu0 0.0
    %5228 = vmatprep.subr.mxu0 0.0
    %5229 = vmatpush1.msra.mxu0 0.0
    %5230 = vmatprep.subr.mxu0 0.0
    %5231 = vmatpush1.msra.mxu0 0.0
    %5232 = vmatprep.subr.mxu0 0.0
    %5233 = vmatpush1.msra.mxu0 0.0
    %5234 = vmatprep.subr.mxu0 0.0
    %5235 = vmatpush1.msra.mxu0 0.0
    %5236 = vmatprep.subr.mxu0 0.0
    %5237 = vmatpush1.msra.mxu0 0.0
    %5238 = vmatprep.subr.mxu0 0.0
    %5239 = vmatpush1.msra.mxu0 0.0
    %5240 = vmatprep.subr.mxu0 0.0
    %5241 = vmatpush1.msra.mxu0 0.0
    %5242 = vmatprep.mubr.f32.mxu0 0.0
    %5243 = vmatmul.mubr.f32.gmra.mrb[0].mxu0 %v5176
    %v5244 = vpop.f32.mrb[0].mxu0
    %v5245 = vadd.f32 0.0, %v5244
    %v5246 = vpop.f32.mrb[0].mxu0
    %5247 = vdwg.mxu0
    %v5249 = vsel %vm1145, %v4808, 0
    %5251 = vmatprep.subr.mxu0 0.0
    %5252 = vmatpush1.msra.mxu0 %v4096
    %5253 = vmatprep.subr.mxu0 0.0
    %5254 = vmatpush1.msra.mxu0 0.0
    %5255 = vmatprep.subr.mxu0 0.0
    %5256 = vmatpush1.msra.mxu0 0.0
    %5257 = vmatprep.subr.mxu0 0.0
    %5258 = vmatpush1.msra.mxu0 0.0
    %5259 = vmatprep.subr.mxu0 0.0
    %5260 = vmatpush1.msra.mxu0 0.0
    %5261 = vmatprep.subr.mxu0 0.0
    %5262 = vmatpush1.msra.mxu0 0.0
    %5263 = vmatprep.subr.mxu0 0.0
    %5264 = vmatpush1.msra.mxu0 0.0
    %5265 = vmatprep.subr.mxu0 0.0
    %5266 = vmatpush1.msra.mxu0 0.0
    %5267 = vmatprep.subr.mxu0 0.0
    %5268 = vmatpush1.msra.mxu0 0.0
    %5269 = vmatprep.subr.mxu0 0.0
    %5270 = vmatpush1.msra.mxu0 0.0
    %5271 = vmatprep.subr.mxu0 0.0
    %5272 = vmatpush1.msra.mxu0 0.0
    %5273 = vmatprep.subr.mxu0 0.0
    %5274 = vmatpush1.msra.mxu0 0.0
    %5275 = vmatprep.subr.mxu0 0.0
    %5276 = vmatpush1.msra.mxu0 0.0
    %5277 = vmatprep.subr.mxu0 0.0
    %5278 = vmatpush1.msra.mxu0 0.0
    %5279 = vmatprep.subr.mxu0 0.0
    %5280 = vmatpush1.msra.mxu0 0.0
    %5281 = vmatprep.subr.mxu0 0.0
    %5282 = vmatpush1.msra.mxu0 0.0
    %5283 = vmatprep.subr.mxu0 0.0
    %5284 = vmatpush1.msra.mxu0 0.0
    %5285 = vmatprep.subr.mxu0 0.0
    %5286 = vmatpush1.msra.mxu0 0.0
    %5287 = vmatprep.subr.mxu0 0.0
    %5288 = vmatpush1.msra.mxu0 0.0
    %5289 = vmatprep.subr.mxu0 0.0
    %5290 = vmatpush1.msra.mxu0 0.0
    %5291 = vmatprep.subr.mxu0 0.0
    %5292 = vmatpush1.msra.mxu0 0.0
    %5293 = vmatprep.subr.mxu0 0.0
    %5294 = vmatpush1.msra.mxu0 0.0
    %5295 = vmatprep.subr.mxu0 0.0
    %5296 = vmatpush1.msra.mxu0 0.0
    %5297 = vmatprep.subr.mxu0 0.0
    %5298 = vmatpush1.msra.mxu0 0.0
    %5299 = vmatprep.subr.mxu0 0.0
    %5300 = vmatpush1.msra.mxu0 0.0
    %5301 = vmatprep.subr.mxu0 0.0
    %5302 = vmatpush1.msra.mxu0 0.0
    %5303 = vmatprep.subr.mxu0 0.0
    %5304 = vmatpush1.msra.mxu0 0.0
    %5305 = vmatprep.subr.mxu0 0.0
    %5306 = vmatpush1.msra.mxu0 0.0
    %5307 = vmatprep.subr.mxu0 0.0
    %5308 = vmatpush1.msra.mxu0 0.0
    %5309 = vmatprep.subr.mxu0 0.0
    %5310 = vmatpush1.msra.mxu0 0.0
    %5311 = vmatprep.subr.mxu0 0.0
    %5312 = vmatpush1.msra.mxu0 0.0
    %5313 = vmatprep.subr.mxu0 0.0
    %5314 = vmatpush1.msra.mxu0 0.0
    %5315 = vmatprep.mubr.f32.mxu0 0.0
    %5316 = vmatmul.mubr.f32.gmra.mrb[0].mxu0 %v5249
    %v5317 = vpop.f32.mrb[0].mxu0
    %v5318 = vadd.f32 0.0, %v5317
    %v5319 = vpop.f32.mrb[0].mxu0
    %5320 = vdwg.mxu0
    %v5322 = vsel %vm1145, %v4809, 0
    %5324 = vmatprep.subr.mxu0 0.0
    %5325 = vmatpush1.msra.mxu0 %v4097
    %5326 = vmatprep.subr.mxu0 0.0
    %5327 = vmatpush1.msra.mxu0 0.0
    %5328 = vmatprep.subr.mxu0 0.0
    %5329 = vmatpush1.msra.mxu0 0.0
    %5330 = vmatprep.subr.mxu0 0.0
    %5331 = vmatpush1.msra.mxu0 0.0
    %5332 = vmatprep.subr.mxu0 0.0
    %5333 = vmatpush1.msra.mxu0 0.0
    %5334 = vmatprep.subr.mxu0 0.0
    %5335 = vmatpush1.msra.mxu0 0.0
    %5336 = vmatprep.subr.mxu0 0.0
    %5337 = vmatpush1.msra.mxu0 0.0
    %5338 = vmatprep.subr.mxu0 0.0
    %5339 = vmatpush1.msra.mxu0 0.0
    %5340 = vmatprep.subr.mxu0 0.0
    %5341 = vmatpush1.msra.mxu0 0.0
    %5342 = vmatprep.subr.mxu0 0.0
    %5343 = vmatpush1.msra.mxu0 0.0
    %5344 = vmatprep.subr.mxu0 0.0
    %5345 = vmatpush1.msra.mxu0 0.0
    %5346 = vmatprep.subr.mxu0 0.0
    %5347 = vmatpush1.msra.mxu0 0.0
    %5348 = vmatprep.subr.mxu0 0.0
    %5349 = vmatpush1.msra.mxu0 0.0
    %5350 = vmatprep.subr.mxu0 0.0
    %5351 = vmatpush1.msra.mxu0 0.0
    %5352 = vmatprep.subr.mxu0 0.0
    %5353 = vmatpush1.msra.mxu0 0.0
    %5354 = vmatprep.subr.mxu0 0.0
    %5355 = vmatpush1.msra.mxu0 0.0
    %5356 = vmatprep.subr.mxu0 0.0
    %5357 = vmatpush1.msra.mxu0 0.0
    %5358 = vmatprep.subr.mxu0 0.0
    %5359 = vmatpush1.msra.mxu0 0.0
    %5360 = vmatprep.subr.mxu0 0.0
    %5361 = vmatpush1.msra.mxu0 0.0
    %5362 = vmatprep.subr.mxu0 0.0
    %5363 = vmatpush1.msra.mxu0 0.0
    %5364 = vmatprep.subr.mxu0 0.0
    %5365 = vmatpush1.msra.mxu0 0.0
    %5366 = vmatprep.subr.mxu0 0.0
    %5367 = vmatpush1.msra.mxu0 0.0
    %5368 = vmatprep.subr.mxu0 0.0
    %5369 = vmatpush1.msra.mxu0 0.0
    %5370 = vmatprep.subr.mxu0 0.0
    %5371 = vmatpush1.msra.mxu0 0.0
    %5372 = vmatprep.subr.mxu0 0.0
    %5373 = vmatpush1.msra.mxu0 0.0
    %5374 = vmatprep.subr.mxu0 0.0
    %5375 = vmatpush1.msra.mxu0 0.0
    %5376 = vmatprep.subr.mxu0 0.0
    %5377 = vmatpush1.msra.mxu0 0.0
    %5378 = vmatprep.subr.mxu0 0.0
    %5379 = vmatpush1.msra.mxu0 0.0
    %5380 = vmatprep.subr.mxu0 0.0
    %5381 = vmatpush1.msra.mxu0 0.0
    %5382 = vmatprep.subr.mxu0 0.0
    %5383 = vmatpush1.msra.mxu0 0.0
    %5384 = vmatprep.subr.mxu0 0.0
    %5385 = vmatpush1.msra.mxu0 0.0
    %5386 = vmatprep.subr.mxu0 0.0
    %5387 = vmatpush1.msra.mxu0 0.0
    %5388 = vmatprep.mubr.f32.mxu0 0.0
    %5389 = vmatmul.mubr.f32.gmra.mrb[0].mxu0 %v5322
    %v5390 = vpop.f32.mrb[0].mxu0
    %v5391 = vadd.f32 0.0, %v5390
    %v5392 = vpop.f32.mrb[0].mxu0
    %5393 = vdwg.mxu0
    %v5394 = vcombine.low %v4880, %v5026
    %v5395 = vcombine.high %v4880, %v5026
    %v5397 = vunpack.c.l.s4 1983009808
    %v5398 = vunpack.c.0.s8 %v5397
    %v5399 = vlaneseq
    %v5400 = vshrl.u32 %v5399, 7
    %v5401 = vsub.s32 %v5398, %v5400
    %v5402 = vrot.slane %v5394, %v5401
    %v5404 = vunpack.c.l.s4 1983009808
    %v5405 = vunpack.c.0.s8 %v5404
    %v5406 = vlaneseq
    %v5407 = vshrl.u32 %v5406, 7
    %v5408 = vsub.s32 %v5405, %v5407
    %v5409 = vrot.slane %v5395, %v5408
    %v5410 = vcombine.low %v4953, %v5099
    %v5411 = vcombine.high %v4953, %v5099
    %v5413 = vunpack.c.l.s4 1983009808
    %v5414 = vunpack.c.0.s8 %v5413
    %v5415 = vlaneseq
    %v5416 = vshrl.u32 %v5415, 7
    %v5417 = vsub.s32 %v5414, %v5416
    %v5418 = vrot.slane %v5410, %v5417
    %v5420 = vunpack.c.l.s4 1983009808
    %v5421 = vunpack.c.0.s8 %v5420
    %v5422 = vlaneseq
    %v5423 = vshrl.u32 %v5422, 7
    %v5424 = vsub.s32 %v5421, %v5423
    %v5425 = vrot.slane %v5411, %v5424
    %v5426 = vcombine.low %v5402, %v5418
    %v5427 = vcombine.high %v5402, %v5418
    %v5429 = vunpack.c.l.s4 1934713408
    %v5430 = vunpack.c.0.s8 %v5429
    %v5431 = vlaneseq
    %v5432 = vshrl.u32 %v5431, 7
    %v5433 = vsub.s32 %v5430, %v5432
    %v5434 = vrot.slane %v5426, %v5433
    %v5436 = vunpack.c.l.s4 1934713408
    %v5437 = vunpack.c.0.s8 %v5436
    %v5438 = vlaneseq
    %v5439 = vshrl.u32 %v5438, 7
    %v5440 = vsub.s32 %v5437, %v5439
    %v5441 = vrot.slane %v5427, %v5440
    %v5442 = vcombine.low %v5409, %v5425
    %v5443 = vcombine.high %v5409, %v5425
    %v5445 = vunpack.c.l.s4 1934713408
    %v5446 = vunpack.c.0.s8 %v5445
    %v5447 = vlaneseq
    %v5448 = vshrl.u32 %v5447, 7
    %v5449 = vsub.s32 %v5446, %v5448
    %v5450 = vrot.slane %v5442, %v5449
    %v5452 = vunpack.c.l.s4 1934713408
    %v5453 = vunpack.c.0.s8 %v5452
    %v5454 = vlaneseq
    %v5455 = vshrl.u32 %v5454, 7
    %v5456 = vsub.s32 %v5453, %v5455
    %v5457 = vrot.slane %v5443, %v5456
    %v5458 = vcombine.high %v5434, 0.0
    %v5459 = vcombine.high %v5441, 0.0
    %v5460 = vcombine.high %v5450, 0.0
    %v5461 = vcombine.high %v5457, 0.0
    %v5462 = vcombine.low %v5172, %v5318
    %v5463 = vcombine.high %v5172, %v5318
    %v5465 = vunpack.c.l.s4 1983009808
    %v5466 = vunpack.c.0.s8 %v5465
    %v5467 = vlaneseq
    %v5468 = vshrl.u32 %v5467, 7
    %v5469 = vsub.s32 %v5466, %v5468
    %v5470 = vrot.slane %v5462, %v5469
    %v5472 = vunpack.c.l.s4 1983009808
    %v5473 = vunpack.c.0.s8 %v5472
    %v5474 = vlaneseq
    %v5475 = vshrl.u32 %v5474, 7
    %v5476 = vsub.s32 %v5473, %v5475
    %v5477 = vrot.slane %v5463, %v5476
    %v5478 = vcombine.low %v5245, %v5391
    %v5479 = vcombine.high %v5245, %v5391
    %v5481 = vunpack.c.l.s4 1983009808
    %v5482 = vunpack.c.0.s8 %v5481
    %v5483 = vlaneseq
    %v5484 = vshrl.u32 %v5483, 7
    %v5485 = vsub.s32 %v5482, %v5484
    %v5486 = vrot.slane %v5478, %v5485
    %v5488 = vunpack.c.l.s4 1983009808
    %v5489 = vunpack.c.0.s8 %v5488
    %v5490 = vlaneseq
    %v5491 = vshrl.u32 %v5490, 7
    %v5492 = vsub.s32 %v5489, %v5491
    %v5493 = vrot.slane %v5479, %v5492
    %v5494 = vcombine.low %v5470, %v5486
    %v5495 = vcombine.high %v5470, %v5486
    %v5497 = vunpack.c.l.s4 1934713408
    %v5498 = vunpack.c.0.s8 %v5497
    %v5499 = vlaneseq
    %v5500 = vshrl.u32 %v5499, 7
    %v5501 = vsub.s32 %v5498, %v5500
    %v5502 = vrot.slane %v5494, %v5501
    %v5504 = vunpack.c.l.s4 1934713408
    %v5505 = vunpack.c.0.s8 %v5504
    %v5506 = vlaneseq
    %v5507 = vshrl.u32 %v5506, 7
    %v5508 = vsub.s32 %v5505, %v5507
    %v5509 = vrot.slane %v5495, %v5508
    %v5510 = vcombine.low %v5477, %v5493
    %v5511 = vcombine.high %v5477, %v5493
    %v5513 = vunpack.c.l.s4 1934713408
    %v5514 = vunpack.c.0.s8 %v5513
    %v5515 = vlaneseq
    %v5516 = vshrl.u32 %v5515, 7
    %v5517 = vsub.s32 %v5514, %v5516
    %v5518 = vrot.slane %v5510, %v5517
    %v5520 = vunpack.c.l.s4 1934713408
    %v5521 = vunpack.c.0.s8 %v5520
    %v5522 = vlaneseq
    %v5523 = vshrl.u32 %v5522, 7
    %v5524 = vsub.s32 %v5521, %v5523
    %v5525 = vrot.slane %v5511, %v5524
    %v5526 = vcombine.high %v5502, 0.0
    %v5527 = vcombine.high %v5509, 0.0
    %v5528 = vcombine.high %v5518, 0.0
    %v5529 = vcombine.high %v5525, 0.0
    %v5530 = vcombine.low %v5434, %v5441
    %v5532 = vunpack.c.l.s4 1983009808
    %v5533 = vunpack.c.0.s8 %v5532
    %v5534 = vlaneseq
    %v5535 = vshrl.u32 %v5534, 7
    %v5536 = vsub.s32 %v5533, %v5535
    %v5537 = vrot.slane %v5530, %v5536
    %v5538 = vcombine.low %v5458, %v5459
    %v5540 = vunpack.c.l.s4 1983009808
    %v5541 = vunpack.c.0.s8 %v5540
    %v5542 = vlaneseq
    %v5543 = vshrl.u32 %v5542, 7
    %v5544 = vsub.s32 %v5541, %v5543
    %v5545 = vrot.slane %v5538, %v5544
    %v5546 = vcombine.low %v5450, %v5457
    %v5548 = vunpack.c.l.s4 1983009808
    %v5549 = vunpack.c.0.s8 %v5548
    %v5550 = vlaneseq
    %v5551 = vshrl.u32 %v5550, 7
    %v5552 = vsub.s32 %v5549, %v5551
    %v5553 = vrot.slane %v5546, %v5552
    %v5554 = vcombine.low %v5460, %v5461
    %v5556 = vunpack.c.l.s4 1983009808
    %v5557 = vunpack.c.0.s8 %v5556
    %v5558 = vlaneseq
    %v5559 = vshrl.u32 %v5558, 7
    %v5560 = vsub.s32 %v5557, %v5559
    %v5561 = vrot.slane %v5554, %v5560
    %v5562 = vcombine.low %v5537, %v5545
    %v5563 = vcombine.high %v5537, %v5545
    %v5565 = vunpack.c.l.s4 1934713408
    %v5566 = vunpack.c.0.s8 %v5565
    %v5567 = vlaneseq
    %v5568 = vshrl.u32 %v5567, 7
    %v5569 = vsub.s32 %v5566, %v5568
    %v5570 = vrot.slane %v5562, %v5569
    %v5572 = vunpack.c.l.s4 1934713408
    %v5573 = vunpack.c.0.s8 %v5572
    %v5574 = vlaneseq
    %v5575 = vshrl.u32 %v5574, 7
    %v5576 = vsub.s32 %v5573, %v5575
    %v5577 = vrot.slane %v5563, %v5576
    %v5578 = vcombine.low %v5553, %v5561
    %v5579 = vcombine.high %v5553, %v5561
    %v5581 = vunpack.c.l.s4 1934713408
    %v5582 = vunpack.c.0.s8 %v5581
    %v5583 = vlaneseq
    %v5584 = vshrl.u32 %v5583, 7
    %v5585 = vsub.s32 %v5582, %v5584
    %v5586 = vrot.slane %v5578, %v5585
    %v5588 = vunpack.c.l.s4 1934713408
    %v5589 = vunpack.c.0.s8 %v5588
    %v5590 = vlaneseq
    %v5591 = vshrl.u32 %v5590, 7
    %v5592 = vsub.s32 %v5589, %v5591
    %v5593 = vrot.slane %v5579, %v5592
    %v5594 = vcombine.low %v5570, %v5586
    %v5595 = vcombine.high %v5570, %v5586
    %v5596 = vcombine.low %v5577, %v5593
    %v5597 = vcombine.high %v5577, %v5593
    %v5598 = vcombine.low %v5502, %v5509
    %v5600 = vunpack.c.l.s4 1983009808
    %v5601 = vunpack.c.0.s8 %v5600
    %v5602 = vlaneseq
    %v5603 = vshrl.u32 %v5602, 7
    %v5604 = vsub.s32 %v5601, %v5603
    %v5605 = vrot.slane %v5598, %v5604
    %v5606 = vcombine.low %v5526, %v5527
    %v5608 = vunpack.c.l.s4 1983009808
    %v5609 = vunpack.c.0.s8 %v5608
    %v5610 = vlaneseq
    %v5611 = vshrl.u32 %v5610, 7
    %v5612 = vsub.s32 %v5609, %v5611
    %v5613 = vrot.slane %v5606, %v5612
    %v5614 = vcombine.low %v5518, %v5525
    %v5616 = vunpack.c.l.s4 1983009808
    %v5617 = vunpack.c.0.s8 %v5616
    %v5618 = vlaneseq
    %v5619 = vshrl.u32 %v5618, 7
    %v5620 = vsub.s32 %v5617, %v5619
    %v5621 = vrot.slane %v5614, %v5620
    %v5622 = vcombine.low %v5528, %v5529
    %v5624 = vunpack.c.l.s4 1983009808
    %v5625 = vunpack.c.0.s8 %v5624
    %v5626 = vlaneseq
    %v5627 = vshrl.u32 %v5626, 7
    %v5628 = vsub.s32 %v5625, %v5627
    %v5629 = vrot.slane %v5622, %v5628
    %v5630 = vcombine.low %v5605, %v5613
    %v5631 = vcombine.high %v5605, %v5613
    %v5633 = vunpack.c.l.s4 1934713408
    %v5634 = vunpack.c.0.s8 %v5633
    %v5635 = vlaneseq
    %v5636 = vshrl.u32 %v5635, 7
    %v5637 = vsub.s32 %v5634, %v5636
    %v5638 = vrot.slane %v5630, %v5637
    %v5640 = vunpack.c.l.s4 1934713408
    %v5641 = vunpack.c.0.s8 %v5640
    %v5642 = vlaneseq
    %v5643 = vshrl.u32 %v5642, 7
    %v5644 = vsub.s32 %v5641, %v5643
    %v5645 = vrot.slane %v5631, %v5644
    %v5646 = vcombine.low %v5621, %v5629
    %v5647 = vcombine.high %v5621, %v5629
    %v5649 = vunpack.c.l.s4 1934713408
    %v5650 = vunpack.c.0.s8 %v5649
    %v5651 = vlaneseq
    %v5652 = vshrl.u32 %v5651, 7
    %v5653 = vsub.s32 %v5650, %v5652
    %v5654 = vrot.slane %v5646, %v5653
    %v5656 = vunpack.c.l.s4 1934713408
    %v5657 = vunpack.c.0.s8 %v5656
    %v5658 = vlaneseq
    %v5659 = vshrl.u32 %v5658, 7
    %v5660 = vsub.s32 %v5657, %v5659
    %v5661 = vrot.slane %v5647, %v5660
    %v5662 = vcombine.low %v5638, %v5654
    %v5663 = vcombine.high %v5638, %v5654
    %v5664 = vcombine.low %v5645, %v5661
    %v5665 = vcombine.high %v5645, %v5661
    %5668 = vrot.lane.b32.xlu0 %v5595, 8
    %v5669 = vpop.permute.xlu0 %5668
    %5670 = vrot.lane.b32.xlu0 %v5663, 8
    %v5671 = vpop.permute.xlu0 %5670
    %5676 = vrot.lane.b32.xlu0 %v5596, 16
    %v5677 = vpop.permute.xlu0 %5676
    %5678 = vrot.lane.b32.xlu0 %v5664, 16
    %v5679 = vpop.permute.xlu0 %5678
    %5684 = vrot.lane.b32.xlu0 %v5597, 24
    %v5685 = vpop.permute.xlu0 %5684
    %5686 = vrot.lane.b32.xlu0 %v5665, 24
    %v5687 = vpop.permute.xlu0 %5686
    %v5690 = vsel %vm1145, %v5594, %v5669
    %v5691 = vsel %vm1145, %v5662, %v5671
    %v5692 = vsel %vm2740, %v5690, %v5677
    %v5693 = vsel %vm2740, %v5691, %v5679
    %v5694 = vsel %vm2743, %v5692, %v5685
    %v5695 = vsel %vm2743, %v5693, %v5687
    %v5696 = vlaneseq
    %v5697 = vshrl.u32 %v5696, 7
    %v5698 = vsub.s32 0, %v5697
    %v5699 = vrot.slane %v3122, %v5698
    %v5701 = vsel %vm179, %v5694, 0
    %v5704 = vsel %vm179, %v5695, 0
    %5706 = vmatprep.subr.mxu0 0.0
    %5707 = vmatpush1.msra.mxu0 %v3105
    %5708 = vmatprep.subr.mxu0 0.0
    %5709 = vmatpush1.msra.mxu0 %v3106
    %5710 = vmatprep.subr.mxu0 0.0
    %5711 = vmatpush1.msra.mxu0 %v3107
    %5712 = vmatprep.subr.mxu0 0.0
    %5713 = vmatpush1.msra.mxu0 %v3108
    %5714 = vmatprep.subr.mxu0 0.0
    %5715 = vmatpush1.msra.mxu0 0.0
    %5716 = vmatprep.subr.mxu0 0.0
    %5717 = vmatpush1.msra.mxu0 0.0
    %5718 = vmatprep.subr.mxu0 0.0
    %5719 = vmatpush1.msra.mxu0 0.0
    %5720 = vmatprep.subr.mxu0 0.0
    %5721 = vmatpush1.msra.mxu0 0.0
    %5722 = vmatprep.subr.mxu0 0.0
    %5723 = vmatpush1.msra.mxu0 0.0
    %5724 = vmatprep.subr.mxu0 0.0
    %5725 = vmatpush1.msra.mxu0 0.0
    %5726 = vmatprep.subr.mxu0 0.0
    %5727 = vmatpush1.msra.mxu0 0.0
    %5728 = vmatprep.subr.mxu0 0.0
    %5729 = vmatpush1.msra.mxu0 0.0
    %5730 = vmatprep.subr.mxu0 0.0
    %5731 = vmatpush1.msra.mxu0 0.0
    %5732 = vmatprep.subr.mxu0 0.0
    %5733 = vmatpush1.msra.mxu0 0.0
    %5734 = vmatprep.subr.mxu0 0.0
    %5735 = vmatpush1.msra.mxu0 0.0
    %5736 = vmatprep.subr.mxu0 0.0
    %5737 = vmatpush1.msra.mxu0 0.0
    %5738 = vmatprep.subr.mxu0 0.0
    %5739 = vmatpush1.msra.mxu0 0.0
    %5740 = vmatprep.subr.mxu0 0.0
    %5741 = vmatpush1.msra.mxu0 0.0
    %5742 = vmatprep.subr.mxu0 0.0
    %5743 = vmatpush1.msra.mxu0 0.0
    %5744 = vmatprep.subr.mxu0 0.0
    %5745 = vmatpush1.msra.mxu0 0.0
    %5746 = vmatprep.subr.mxu0 0.0
    %5747 = vmatpush1.msra.mxu0 0.0
    %5748 = vmatprep.subr.mxu0 0.0
    %5749 = vmatpush1.msra.mxu0 0.0
    %5750 = vmatprep.subr.mxu0 0.0
    %5751 = vmatpush1.msra.mxu0 0.0
    %5752 = vmatprep.subr.mxu0 0.0
    %5753 = vmatpush1.msra.mxu0 0.0
    %5754 = vmatprep.subr.mxu0 0.0
    %5755 = vmatpush1.msra.mxu0 0.0
    %5756 = vmatprep.subr.mxu0 0.0
    %5757 = vmatpush1.msra.mxu0 0.0
    %5758 = vmatprep.subr.mxu0 0.0
    %5759 = vmatpush1.msra.mxu0 0.0
    %5760 = vmatprep.subr.mxu0 0.0
    %5761 = vmatpush1.msra.mxu0 0.0
    %5762 = vmatprep.subr.mxu0 0.0
    %5763 = vmatpush1.msra.mxu0 0.0
    %5764 = vmatprep.subr.mxu0 0.0
    %5765 = vmatpush1.msra.mxu0 0.0
    %5766 = vmatprep.subr.mxu0 0.0
    %5767 = vmatpush1.msra.mxu0 0.0
    %5768 = vmatprep.subr.mxu0 0.0
    %5769 = vmatpush1.msra.mxu0 0.0
    %5770 = vmatprep.mubr.f32.mxu0 0.0
    %5771 = vmatmul.mubr.f32.gmra.mrb[0].mxu0 %v5701
    %v5772 = vpop.f32.mrb[0].mxu0
    %v5773 = vadd.f32 %v5699, %v5772
    %v5774 = vpop.f32.mrb[0].mxu0
    %5775 = vmatprep.mubr.f32.mxu0 0.0
    %5776 = vmatmul.mubr.f32.gmra.mrb[0].mxu0 %v5704
    %v5777 = vpop.f32.mrb[0].mxu0
    %v5778 = vadd.f32 %v5699, %v5777
    %v5779 = vpop.f32.mrb[0].mxu0
    %5780 = vdwg.mxu0
    %v5781 = vadd.f32 %v3099, %v5773
    %v5782 = vadd.f32 %v3100, %v5778
    %v5783 = vsel %vm179, %v5781, 0.0
    %5784 = vadd.xlane.f32.xlu0 %v5783
    %v5785 = vpop.xlane.xlu0 %5784
    %v5786 = vsel %vm179, %v5782, 0.0
    %5787 = vadd.xlane.f32.xlu0 %v5786
    %v5788 = vpop.xlane.xlu0 %5787
    %v5789 = vmul.f32 %v5785, %v2839
    %v5790 = vmul.f32 %v5788, %v2839
    %v5791 = vsub.f32 %v5781, %v5789
    %v5792 = vsub.f32 %v5782, %v5790
    %v5793 = vmul.f32 %v5791, %v5791
    %v5794 = vmul.f32 %v5792, %v5792
    %v5795 = vsel %vm179, %v5793, 0.0
    %5796 = vadd.xlane.f32.xlu0 %v5795
    %v5797 = vpop.xlane.xlu0 %5796
    %v5798 = vsel %vm179, %v5794, 0.0
    %5799 = vadd.xlane.f32.xlu0 %v5798
    %v5800 = vpop.xlane.xlu0 %5799
    %v5801 = vmul.f32 %v5797, %v2839
    %v5802 = vmul.f32 %v5800, %v2839
    %v5803 = vadd.f32 %v5801, 1e-05
    %v5804 = vadd.f32 %v5802, 1e-05
    %v5805 = vrsqrt.pop %v5803
    %v5806 = vrsqrt.pop %v5804
    %v5807 = vmul.f32 %v5791, %v5805
    %v5808 = vmul.f32 %v5792, %v5806
    %v5809 = vlaneseq
    %v5810 = vshrl.u32 %v5809, 7
    %v5811 = vsub.s32 0, %v5810
    %v5812 = vrot.slane %v3123, %v5811
    %v5813 = vmul.f32 %v5807, %v5812
    %v5814 = vmul.f32 %v5808, %v5812
    %v5815 = vlaneseq
    %v5816 = vshrl.u32 %v5815, 7
    %v5817 = vsub.s32 0, %v5816
    %v5818 = vrot.slane %v3124, %v5817
    %v5819 = vadd.f32 %v5813, %v5818
    %v5820 = vadd.f32 %v5814, %v5818
    %v5821 = vlaneseq
    %v5822 = vshrl.u32 %v5821, 7
    %v5823 = vsub.s32 0, %v5822
    %v5824 = vrot.slane %v3125, %v5823
    %v5826 = vsel %vm179, %v5819, 0
    %v5829 = vsel %vm179, %v5820, 0
    %5831 = vmatprep.subr.mxu0 0.0
    %5832 = vmatpush1.msra.mxu0 %v3109
    %5833 = vmatprep.subr.mxu0 0.0
    %5834 = vmatpush1.msra.mxu0 %v3110
    %5835 = vmatprep.subr.mxu0 0.0
    %5836 = vmatpush1.msra.mxu0 %v3111
    %5837 = vmatprep.subr.mxu0 0.0
    %5838 = vmatpush1.msra.mxu0 %v3112
    %5839 = vmatprep.subr.mxu0 0.0
    %5840 = vmatpush1.msra.mxu0 0.0
    %5841 = vmatprep.subr.mxu0 0.0
    %5842 = vmatpush1.msra.mxu0 0.0
    %5843 = vmatprep.subr.mxu0 0.0
    %5844 = vmatpush1.msra.mxu0 0.0
    %5845 = vmatprep.subr.mxu0 0.0
    %5846 = vmatpush1.msra.mxu0 0.0
    %5847 = vmatprep.subr.mxu0 0.0
    %5848 = vmatpush1.msra.mxu0 0.0
    %5849 = vmatprep.subr.mxu0 0.0
    %5850 = vmatpush1.msra.mxu0 0.0
    %5851 = vmatprep.subr.mxu0 0.0
    %5852 = vmatpush1.msra.mxu0 0.0
    %5853 = vmatprep.subr.mxu0 0.0
    %5854 = vmatpush1.msra.mxu0 0.0
    %5855 = vmatprep.subr.mxu0 0.0
    %5856 = vmatpush1.msra.mxu0 0.0
    %5857 = vmatprep.subr.mxu0 0.0
    %5858 = vmatpush1.msra.mxu0 0.0
    %5859 = vmatprep.subr.mxu0 0.0
    %5860 = vmatpush1.msra.mxu0 0.0
    %5861 = vmatprep.subr.mxu0 0.0
    %5862 = vmatpush1.msra.mxu0 0.0
    %5863 = vmatprep.subr.mxu0 0.0
    %5864 = vmatpush1.msra.mxu0 0.0
    %5865 = vmatprep.subr.mxu0 0.0
    %5866 = vmatpush1.msra.mxu0 0.0
    %5867 = vmatprep.subr.mxu0 0.0
    %5868 = vmatpush1.msra.mxu0 0.0
    %5869 = vmatprep.subr.mxu0 0.0
    %5870 = vmatpush1.msra.mxu0 0.0
    %5871 = vmatprep.subr.mxu0 0.0
    %5872 = vmatpush1.msra.mxu0 0.0
    %5873 = vmatprep.subr.mxu0 0.0
    %5874 = vmatpush1.msra.mxu0 0.0
    %5875 = vmatprep.subr.mxu0 0.0
    %5876 = vmatpush1.msra.mxu0 0.0
    %5877 = vmatprep.subr.mxu0 0.0
    %5878 = vmatpush1.msra.mxu0 0.0
    %5879 = vmatprep.subr.mxu0 0.0
    %5880 = vmatpush1.msra.mxu0 0.0
    %5881 = vmatprep.subr.mxu0 0.0
    %5882 = vmatpush1.msra.mxu0 0.0
    %5883 = vmatprep.subr.mxu0 0.0
    %5884 = vmatpush1.msra.mxu0 0.0
    %5885 = vmatprep.subr.mxu0 0.0
    %5886 = vmatpush1.msra.mxu0 0.0
    %5887 = vmatprep.subr.mxu0 0.0
    %5888 = vmatpush1.msra.mxu0 0.0
    %5889 = vmatprep.subr.mxu0 0.0
    %5890 = vmatpush1.msra.mxu0 0.0
    %5891 = vmatprep.subr.mxu0 0.0
    %5892 = vmatpush1.msra.mxu0 0.0
    %5893 = vmatprep.subr.mxu0 0.0
    %5894 = vmatpush1.msra.mxu0 0.0
    %5895 = vmatprep.mubr.f32.mxu0 0.0
    %5896 = vmatmul.mubr.f32.gmra.mrb[0].mxu0 %v5826
    %v5897 = vpop.f32.mrb[0].mxu0
    %v5898 = vadd.f32 %v5824, %v5897
    %v5899 = vpop.f32.mrb[0].mxu0
    %5900 = vmatprep.mubr.f32.mxu0 0.0
    %5901 = vmatmul.mubr.f32.gmra.mrb[0].mxu0 %v5829
    %v5902 = vpop.f32.mrb[0].mxu0
    %v5903 = vadd.f32 %v5824, %v5902
    %v5904 = vpop.f32.mrb[0].mxu0
    %5905 = vdwg.mxu0
    %v5906 = vmul.f32 %v5898, 0.5
    %v5907 = vmul.f32 %v5903, 0.5
    %v5908 = vmul.f32 %v5898, %v5898
    %v5909 = vmul.f32 %v5903, %v5903
    %v5910 = vmul.f32 %v5908, %v5898
    %v5911 = vmul.f32 %v5909, %v5903
    %v5912 = vmul.f32 %v5910, 0.044715
    %v5913 = vmul.f32 %v5911, 0.044715
    %v5914 = vadd.f32 %v5898, %v5912
    %v5915 = vadd.f32 %v5903, %v5913
    %v5916 = vmul.f32 %v5914, 0.7978846
    %v5917 = vmul.f32 %v5915, 0.7978846
    %v5918 = vtanh.pop %v5916
    %v5919 = vtanh.pop %v5917
    %v5920 = vadd.f32 %v5918, 1.0
    %v5921 = vadd.f32 %v5919, 1.0
    %v5922 = vmul.f32 %v5906, %v5920
    %v5923 = vmul.f32 %v5907, %v5921
    %v5924 = vlaneseq
    %v5925 = vshrl.u32 %v5924, 7
    %v5926 = vsub.s32 0, %v5925
    %v5927 = vrot.slane %v3126, %v5926
    %v5929 = vsel %vm2979, %v5922, 0
    %v5932 = vsel %vm2979, %v5923, 0
    %5934 = vmatprep.subr.mxu0 0.0
    %5935 = vmatpush1.msra.mxu0 %v3113
    %5936 = vmatprep.subr.mxu0 0.0
    %5937 = vmatpush1.msra.mxu0 %v3114
    %5938 = vmatprep.subr.mxu0 0.0
    %5939 = vmatpush1.msra.mxu0 %v3115
    %5940 = vmatprep.subr.mxu0 0.0
    %5941 = vmatpush1.msra.mxu0 %v3116
    %5942 = vmatprep.subr.mxu0 0.0
    %5943 = vmatpush1.msra.mxu0 %v3117
    %5944 = vmatprep.subr.mxu0 0.0
    %5945 = vmatpush1.msra.mxu0 %v3118
    %5946 = vmatprep.subr.mxu0 0.0
    %5947 = vmatpush1.msra.mxu0 %v3119
    %5948 = vmatprep.subr.mxu0 0.0
    %5949 = vmatpush1.msra.mxu0 %v3120
    %5950 = vmatprep.subr.mxu0 0.0
    %5951 = vmatpush1.msra.mxu0 0.0
    %5952 = vmatprep.subr.mxu0 0.0
    %5953 = vmatpush1.msra.mxu0 0.0
    %5954 = vmatprep.subr.mxu0 0.0
    %5955 = vmatpush1.msra.mxu0 0.0
    %5956 = vmatprep.subr.mxu0 0.0
    %5957 = vmatpush1.msra.mxu0 0.0
    %5958 = vmatprep.subr.mxu0 0.0
    %5959 = vmatpush1.msra.mxu0 0.0
    %5960 = vmatprep.subr.mxu0 0.0
    %5961 = vmatpush1.msra.mxu0 0.0
    %5962 = vmatprep.subr.mxu0 0.0
    %5963 = vmatpush1.msra.mxu0 0.0
    %5964 = vmatprep.subr.mxu0 0.0
    %5965 = vmatpush1.msra.mxu0 0.0
    %5966 = vmatprep.subr.mxu0 0.0
    %5967 = vmatpush1.msra.mxu0 0.0
    %5968 = vmatprep.subr.mxu0 0.0
    %5969 = vmatpush1.msra.mxu0 0.0
    %5970 = vmatprep.subr.mxu0 0.0
    %5971 = vmatpush1.msra.mxu0 0.0
    %5972 = vmatprep.subr.mxu0 0.0
    %5973 = vmatpush1.msra.mxu0 0.0
    %5974 = vmatprep.subr.mxu0 0.0
    %5975 = vmatpush1.msra.mxu0 0.0
    %5976 = vmatprep.subr.mxu0 0.0
    %5977 = vmatpush1.msra.mxu0 0.0
    %5978 = vmatprep.subr.mxu0 0.0
    %5979 = vmatpush1.msra.mxu0 0.0
    %5980 = vmatprep.subr.mxu0 0.0
    %5981 = vmatpush1.msra.mxu0 0.0
    %5982 = vmatprep.subr.mxu0 0.0
    %5983 = vmatpush1.msra.mxu0 0.0
    %5984 = vmatprep.subr.mxu0 0.0
    %5985 = vmatpush1.msra.mxu0 0.0
    %5986 = vmatprep.subr.mxu0 0.0
    %5987 = vmatpush1.msra.mxu0 0.0
    %5988 = vmatprep.subr.mxu0 0.0
    %5989 = vmatpush1.msra.mxu0 0.0
    %5990 = vmatprep.subr.mxu0 0.0
    %5991 = vmatpush1.msra.mxu0 0.0
    %5992 = vmatprep.subr.mxu0 0.0
    %5993 = vmatpush1.msra.mxu0 0.0
    %5994 = vmatprep.subr.mxu0 0.0
    %5995 = vmatpush1.msra.mxu0 0.0
    %5996 = vmatprep.subr.mxu0 0.0
    %5997 = vmatpush1.msra.mxu0 0.0
    %5998 = vmatprep.mubr.f32.mxu0 0.0
    %5999 = vmatmul.mubr.f32.gmra.mrb[0].mxu0 %v5929
    %v6000 = vpop.f32.mrb[0].mxu0
    %v6001 = vadd.f32 %v5927, %v6000
    %v6002 = vpop.f32.mrb[0].mxu0
    %6003 = vmatprep.mubr.f32.mxu0 0.0
    %6004 = vmatmul.mubr.f32.gmra.mrb[0].mxu0 %v5932
    %v6005 = vpop.f32.mrb[0].mxu0
    %v6006 = vadd.f32 %v5927, %v6005
    %v6007 = vpop.f32.mrb[0].mxu0
    %6008 = vdwg.mxu0
    %v6009 = vadd.f32 %v5819, %v6001
    %v6010 = vadd.f32 %v5820, %v6006
    %v6011 = vsel %vm179, %v6009, 0.0
    %6012 = vadd.xlane.f32.xlu0 %v6011
    %v6013 = vpop.xlane.xlu0 %6012
    %v6014 = vsel %vm179, %v6010, 0.0
    %6015 = vadd.xlane.f32.xlu0 %v6014
    %v6016 = vpop.xlane.xlu0 %6015
    %v6017 = vmul.f32 %v6013, %v2839
    %v6018 = vmul.f32 %v6016, %v2839
    %v6019 = vsub.f32 %v6009, %v6017
    %v6020 = vsub.f32 %v6010, %v6018
    %v6021 = vmul.f32 %v6019, %v6019
    %v6022 = vmul.f32 %v6020, %v6020
    %v6023 = vsel %vm179, %v6021, 0.0
    %6024 = vadd.xlane.f32.xlu0 %v6023
    %v6025 = vpop.xlane.xlu0 %6024
    %v6026 = vsel %vm179, %v6022, 0.0
    %6027 = vadd.xlane.f32.xlu0 %v6026
    %v6028 = vpop.xlane.xlu0 %6027
    %v6029 = vmul.f32 %v6025, %v2839
    %v6030 = vmul.f32 %v6028, %v2839
    %v6031 = vadd.f32 %v6029, 1e-05
    %v6032 = vadd.f32 %v6030, 1e-05
    %v6033 = vrsqrt.pop %v6031
    %v6034 = vrsqrt.pop %v6032
    %v6035 = vmul.f32 %v6019, %v6033
    %v6036 = vmul.f32 %v6020, %v6034
    %v6037 = vlaneseq
    %v6038 = vshrl.u32 %v6037, 7
    %v6039 = vsub.s32 0, %v6038
    %v6040 = vrot.slane %v3127, %v6039
    %v6041 = vmul.f32 %v6035, %v6040
    %v6042 = vmul.f32 %v6036, %v6040
    %v6043 = vlaneseq
    %v6044 = vshrl.u32 %v6043, 7
    %v6045 = vsub.s32 0, %v6044
    %v6046 = vrot.slane %v3128, %v6045
    %v6047 = vadd.f32 %v6041, %v6046
    %v6048 = vadd.f32 %v6042, %v6046
    %v6049 = vld [vmem:[#allocation2 + $0x140] sm:$0xff]
    %v6050 = vld [vmem:[#allocation2 + $0x148] sm:$0xff]
    %v6051 = vld [vmem:[#allocation2 + $0x150] sm:$0xff]
    %v6052 = vld [vmem:[#allocation2 + $0x158] sm:$0xff]
    %v6053 = vld [vmem:[%s5 + $0x10] sm:$0x1]
    %v6054 = vlaneseq
    %v6055 = vshrl.u32 %v6054, 7
    %v6056 = vsub.s32 0, %v6055
    %v6057 = vrot.slane %v6053, %v6056
    %v6059 = vsel %vm179, %v6047, 0
    %v6062 = vsel %vm179, %v6048, 0
    %6064 = vmatprep.subr.mxu0 0.0
    %6065 = vmatpush1.msra.mxu0 %v6049
    %6066 = vmatprep.subr.mxu0 0.0
    %6067 = vmatpush1.msra.mxu0 %v6050
    %6068 = vmatprep.subr.mxu0 0.0
    %6069 = vmatpush1.msra.mxu0 %v6051
    %6070 = vmatprep.subr.mxu0 0.0
    %6071 = vmatpush1.msra.mxu0 %v6052
    %6072 = vmatprep.subr.mxu0 0.0
    %6073 = vmatpush1.msra.mxu0 0.0
    %6074 = vmatprep.subr.mxu0 0.0
    %6075 = vmatpush1.msra.mxu0 0.0
    %6076 = vmatprep.subr.mxu0 0.0
    %6077 = vmatpush1.msra.mxu0 0.0
    %6078 = vmatprep.subr.mxu0 0.0
    %6079 = vmatpush1.msra.mxu0 0.0
    %6080 = vmatprep.subr.mxu0 0.0
    %6081 = vmatpush1.msra.mxu0 0.0
    %6082 = vmatprep.subr.mxu0 0.0
    %6083 = vmatpush1.msra.mxu0 0.0
    %6084 = vmatprep.subr.mxu0 0.0
    %6085 = vmatpush1.msra.mxu0 0.0
    %6086 = vmatprep.subr.mxu0 0.0
    %6087 = vmatpush1.msra.mxu0 0.0
    %6088 = vmatprep.subr.mxu0 0.0
    %6089 = vmatpush1.msra.mxu0 0.0
    %6090 = vmatprep.subr.mxu0 0.0
    %6091 = vmatpush1.msra.mxu0 0.0
    %6092 = vmatprep.subr.mxu0 0.0
    %6093 = vmatpush1.msra.mxu0 0.0
    %6094 = vmatprep.subr.mxu0 0.0
    %6095 = vmatpush1.msra.mxu0 0.0
    %6096 = vmatprep.subr.mxu0 0.0
    %6097 = vmatpush1.msra.mxu0 0.0
    %6098 = vmatprep.subr.mxu0 0.0
    %6099 = vmatpush1.msra.mxu0 0.0
    %6100 = vmatprep.subr.mxu0 0.0
    %6101 = vmatpush1.msra.mxu0 0.0
    %6102 = vmatprep.subr.mxu0 0.0
    %6103 = vmatpush1.msra.mxu0 0.0
    %6104 = vmatprep.subr.mxu0 0.0
    %6105 = vmatpush1.msra.mxu0 0.0
    %6106 = vmatprep.subr.mxu0 0.0
    %6107 = vmatpush1.msra.mxu0 0.0
    %6108 = vmatprep.subr.mxu0 0.0
    %6109 = vmatpush1.msra.mxu0 0.0
    %6110 = vmatprep.subr.mxu0 0.0
    %6111 = vmatpush1.msra.mxu0 0.0
    %6112 = vmatprep.subr.mxu0 0.0
    %6113 = vmatpush1.msra.mxu0 0.0
    %6114 = vmatprep.subr.mxu0 0.0
    %6115 = vmatpush1.msra.mxu0 0.0
    %6116 = vmatprep.subr.mxu0 0.0
    %6117 = vmatpush1.msra.mxu0 0.0
    %6118 = vmatprep.subr.mxu0 0.0
    %6119 = vmatpush1.msra.mxu0 0.0
    %6120 = vmatprep.subr.mxu0 0.0
    %6121 = vmatpush1.msra.mxu0 0.0
    %6122 = vmatprep.subr.mxu0 0.0
    %6123 = vmatpush1.msra.mxu0 0.0
    %6124 = vmatprep.subr.mxu0 0.0
    %6125 = vmatpush1.msra.mxu0 0.0
    %6126 = vmatprep.subr.mxu0 0.0
    %6127 = vmatpush1.msra.mxu0 0.0
    %6128 = vmatprep.mubr.f32.mxu0 0.0
    %6129 = vmatmul.mubr.f32.gmra.mrb[0].mxu0 %v6059
    %v6130 = vpop.f32.mrb[0].mxu0
    %v6131 = vadd.f32 %v6057, %v6130
    %v6132 = vpop.f32.mrb[0].mxu0
    %6133 = vmatprep.mubr.f32.mxu0 0.0
    %6134 = vmatmul.mubr.f32.gmra.mrb[0].mxu0 %v6062
    %v6135 = vpop.f32.mrb[0].mxu0
    %v6136 = vadd.f32 %v6057, %v6135
    %v6137 = vpop.f32.mrb[0].mxu0
    %6138 = vdwg.mxu0
    %6139 = vst [vmem:[#allocation5] sm:$0xff] %v6131
    %6140 = vst [vmem:[#allocation5 + $0x8] sm:$0xff] %v6136
    // Predicated region
    $region30: #{decoder_lm_forward.1} parent=1 // pred_check
      _
    $region31: #{decoder_lm_forward.1} parent=1 // pred_check_branch
      %6142 = sbr.rel (0) target = $region33
    $region32: #{decoder_lm_forward.1} parent=1 // pred_region
      %s6144 = ssub.s32 256, 256
      %6145 = vsyncadd [#allocation4], %s6144
      %s6146 = sshll.u32 [#allocation5], 4
      %s6147 = int_to_ptr.vmem [resolvable:$true] %s6146
      %6152 = dma.vmem_to_hbm [thread:$0]  %s6147, 256, %s6, [#allocation4], 128, 128, 8
    $region33: #{decoder_lm_forward.1} parent=1 // pred_fallthru
      _
    // Predicated region
    $region34: #{decoder_lm_forward.1} parent=1 // pred_check
      _
    $region35: #{decoder_lm_forward.1} parent=1 // pred_check_branch
      %6154 = sbr.rel (0) target = $region37
    $region36: #{decoder_lm_forward.1} parent=1 // pred_region
      %6155 = dma.done [#allocation4], 256
    $region37: #{decoder_lm_forward.1} parent=1 // pred_fallthru
      _
    %6156 = vsyncpa [#allocation3], 1
    %6157 = vsyncpa [#allocation4], 1

</llo_original>
